<compile_context>
chip_gen: v5e
topology: v5e:2x2
jax: 0.10.0
libtpu: 0.0.40
codegen_flags: <defaults>
</compile_context>

<pallas_src>
import jax
import jax.numpy as jnp
from jax.experimental import pallas as pl
from jax.experimental.pallas import tpu as pltpu

D_IN, D_HID, D_OUT = 700, 500, 128
D_HID_P = 512                      # hidden padded to a lane-aligned multiple of 128
D_HID2 = 2 * D_HID_P               # fused layer-1 output width (1024)
D_OUT2 = 2 * D_OUT                 # fused layer-2 output width (256)


def _round_up(x, m):
    return ((x + m - 1) // m) * m


def feature_extractor_kernel(x_ref, w1_ref, b1_ref, w2_ref, b2_ref,
                             out_max_ref, out_min_ref):
    """Fused two-branch 2-layer MLP over one batch tile.

    x_ref:    (bt, 700)   f32
    w1_ref:   (700, 1024) bf16   b1_ref: (1, 1024) f32
    w2_ref:   (1024, 256) bf16   b2_ref: (1, 256)  f32   (block-diagonal)
    out*_ref: (bt, 128)   f32
    """
    x = x_ref[...].astype(jnp.bfloat16)

    # Fused layer 1 for both branches: one MXU pass over x.
    h = jnp.dot(x, w1_ref[...], preferred_element_type=jnp.float32) + b1_ref[...]
    h = jnp.maximum(h, 0.0).astype(jnp.bfloat16)          # (bt, 1024)

    # Fused layer 2 for both branches: block-diagonal weight, one MXU pass.
    y = jnp.dot(h, w2_ref[...], preferred_element_type=jnp.float32) + b2_ref[...]

    # Lane-aligned 128-wide slices -> unmasked stores.
    out_max_ref[...] = y[:, :D_OUT].astype(out_max_ref.dtype)   # ENC_max_mi
    out_min_ref[...] = y[:, D_OUT:].astype(out_min_ref.dtype)   # ENC_min_mi


def pack_params(params):
    """Fuse/pad the f32 PyTorch-style params into the kernel's bf16 layout."""
    bf16 = jnp.bfloat16

    # Layer 1: concat both branches along the output axis (each padded to 512).
    w1 = jnp.zeros((D_IN, D_HID2), bf16)
    w1 = w1.at[:, :D_HID].set(params["w1a"].astype(bf16))
    w1 = w1.at[:, D_HID_P:D_HID_P + D_HID].set(params["w1b"].astype(bf16))

    b1 = jnp.zeros((1, D_HID2), jnp.float32)
    b1 = b1.at[:, :D_HID].set(params["b1a"])
    b1 = b1.at[:, D_HID_P:D_HID_P + D_HID].set(params["b1b"])

    # Layer 2: block-diagonal so one matmul serves both branches.
    w2 = jnp.zeros((D_HID2, D_OUT2), bf16)
    w2 = w2.at[:D_HID, :D_OUT].set(params["w2a"].astype(bf16))
    w2 = w2.at[D_HID_P:D_HID_P + D_HID, D_OUT:].set(params["w2b"].astype(bf16))

    b2 = jnp.concatenate([params["b2a"], params["b2b"]], axis=1)   # (1, 256)
    return w1, b1, w2, b2


def feature_extractor(x, params, *, bt=None):
    """params = dict with keys w1a,b1a,w2a,b2a,w1b,b1b,w2b,b2b (f32, (in,out))."""
    B = x.shape[0]
    if bt is None:
        bt = 256                       # fills MXU rows on v5e/v6e/v7x
    bt = min(bt, _round_up(B, 8))
    bt = max(8, _round_up(bt, 8))      # sublane constraint when grid > 1

    Bp = _round_up(B, bt)
    if Bp != B:
        x = jnp.pad(x, ((0, Bp - B), (0, 0)))

    w1, b1, w2, b2 = pack_params(params)

    full = lambda shape: pl.BlockSpec(shape, lambda i: (0, 0))

    grid_spec = pltpu.PrefetchScalarGridSpec(
        num_scalar_prefetch=0,
        grid=(Bp // bt,),
        in_specs=[
            pl.BlockSpec((bt, D_IN), lambda i: (i, 0)),    # x tile
            full((D_IN, D_HID2)),  full((1, D_HID2)),      # fused layer-1 W, b
            full((D_HID2, D_OUT2)), full((1, D_OUT2)),     # fused layer-2 W, b
        ],
        out_specs=[
            pl.BlockSpec((bt, D_OUT), lambda i: (i, 0)),
            pl.BlockSpec((bt, D_OUT), lambda i: (i, 0)),
        ],
    )

    fea_max, fea_min = pl.pallas_call(
        feature_extractor_kernel,
        out_shape=(
            jax.ShapeDtypeStruct((Bp, D_OUT), jnp.float32),
            jax.ShapeDtypeStruct((Bp, D_OUT), jnp.float32),
        ),
        grid_spec=grid_spec,
        compiler_params=pltpu.CompilerParams(
            dimension_semantics=("parallel",),
        ),
    )(x, w1, b1, w2, b2)

    if Bp != B:
        fea_max, fea_min = fea_max[:B], fea_min[:B]
    return fea_max, fea_min


def init_linear(key, fan_in, fan_out):
    """PyTorch-style nn.Linear init: U(-1/sqrt(fan_in), +1/sqrt(fan_in)).

    Returned weight is (fan_in, fan_out) (transposed w.r.t. PyTorch storage).
    """
    kw, kb = jax.random.split(key)
    bound = 1.0 / (fan_in ** 0.5)
    w = jax.random.uniform(kw, (fan_in, fan_out), jnp.float32, -bound, bound)
    b = jax.random.uniform(kb, (1, fan_out), jnp.float32, -bound, bound)
    return w, b


def init_params(key):
    k = jax.random.split(key, 4)
    w1a, b1a = init_linear(k[0], D_IN, D_HID)
    w2a, b2a = init_linear(k[1], D_HID, D_OUT)
    w1b, b1b = init_linear(k[2], D_IN, D_HID)
    w2b, b2b = init_linear(k[3], D_HID, D_OUT)
    return dict(w1a=w1a, b1a=b1a, w2a=w2a, b2a=b2a,
                w1b=w1b, b1b=b1b, w2b=w2b, b2b=b2b)


def reference(x, p):
    """f32 reference matching the PyTorch forward."""
    ha = jnp.maximum(x @ p["w1a"] + p["b1a"], 0.0)
    fa = ha @ p["w2a"] + p["b2a"]
    hb = jnp.maximum(x @ p["w1b"] + p["b1b"], 0.0)
    fb = hb @ p["w2b"] + p["b2b"]
    return fa, fb


if __name__ == "__main__":
    key = jax.random.PRNGKey(0)
    k_x, k_p = jax.random.split(key)

    B = 8
    x = jax.random.normal(k_x, (B, D_IN), jnp.float32)
    params = init_params(k_p)

    fea_max_mi, fea_min_mi = feature_extractor(x, params)
    jax.block_until_ready((fea_max_mi, fea_min_mi))

    ref_max, ref_min = reference(x, params)
    assert fea_max_mi.shape == (B, D_OUT) and fea_min_mi.shape == (B, D_OUT)
    # bf16 MXU operands (f32 accumulation) -> compare to f32 reference loosely.
    assert jnp.allclose(fea_max_mi, ref_max, atol=5e-2, rtol=5e-2)
    assert jnp.allclose(fea_min_mi, ref_min, atol=5e-2, rtol=5e-2)

    print("KERNEL_OK")
</pallas_src>

<mosaic_0001>
module attributes {stable_mosaic.version = 11 : i64} {
  func.func @feature_extractor_kernel(%arg0: i32, %arg1: memref<8x700xf32, #tpu.memory_space<vmem>>, %arg2: memref<700x1024xbf16, #tpu.memory_space<vmem>>, %arg3: memref<1x1024xf32, #tpu.memory_space<vmem>>, %arg4: memref<1024x256xbf16, #tpu.memory_space<vmem>>, %arg5: memref<1x256xf32, #tpu.memory_space<vmem>>, %arg6: memref<8x128xf32, #tpu.memory_space<vmem>>, %arg7: memref<8x128xf32, #tpu.memory_space<vmem>>) attributes {dimension_semantics = [#tpu.dimension_semantics<parallel>], iteration_bounds = array<i64: 1>, scalar_prefetch = 0 : i64, scratch_operands = 0 : i64, tpu.core_type = #tpu.core_type<tc>, window_params = [{transform_indices = @transform_0, window_bounds = array<i64: 8, 700>}, {pipeline_mode = #tpu.pipeline_mode<synchronous>, transform_indices = @transform_1, window_bounds = array<i64: 700, 1024>}, {pipeline_mode = #tpu.pipeline_mode<synchronous>, transform_indices = @transform_2, window_bounds = array<i64: 1, 1024>}, {pipeline_mode = #tpu.pipeline_mode<synchronous>, transform_indices = @transform_3, window_bounds = array<i64: 1024, 256>}, {pipeline_mode = #tpu.pipeline_mode<synchronous>, transform_indices = @transform_4, window_bounds = array<i64: 1, 256>}, {transform_indices = @transform_5, window_bounds = array<i64: 8, 128>}, {transform_indices = @transform_6, window_bounds = array<i64: 8, 128>}]} {
    %c0 = arith.constant 0 : index
    %c0_0 = arith.constant 0 : index
    %0 = vector.load %arg1[%c0, %c0_0] : memref<8x700xf32, #tpu.memory_space<vmem>>, vector<8x700xf32>
    %1 = arith.truncf %0 : vector<8x700xf32> to vector<8x700xbf16>
    %c0_1 = arith.constant 0 : index
    %c0_2 = arith.constant 0 : index
    %2 = vector.load %arg2[%c0_1, %c0_2] : memref<700x1024xbf16, #tpu.memory_space<vmem>>, vector<700x1024xbf16>
    %cst = arith.constant dense<0.000000e+00> : vector<8x1024xf32>
    %3 = tpu.matmul %1, %2, %cst {dimension_numbers = #tpu.dot_dimension_numbers<[1], [0], [0], [1], [0, 0, 1, 1], [], []>} : vector<8x700xbf16>, vector<700x1024xbf16>, vector<8x1024xf32> -> vector<8x1024xf32>
    %c0_3 = arith.constant 0 : index
    %c0_4 = arith.constant 0 : index
    %4 = vector.load %arg3[%c0_3, %c0_4] : memref<1x1024xf32, #tpu.memory_space<vmem>>, vector<1x1024xf32>
    %5 = vector.broadcast %4 : vector<1x1024xf32> to vector<8x1024xf32>
    %6 = arith.addf %3, %5 : vector<8x1024xf32>
    %cst_5 = arith.constant 0.000000e+00 : f32
    %7 = vector.broadcast %cst_5 : f32 to vector<8x1024xf32>
    %8 = arith.maximumf %6, %7 : vector<8x1024xf32>
    %9 = arith.truncf %8 : vector<8x1024xf32> to vector<8x1024xbf16>
    %c0_6 = arith.constant 0 : index
    %c0_7 = arith.constant 0 : index
    %10 = vector.load %arg4[%c0_6, %c0_7] : memref<1024x256xbf16, #tpu.memory_space<vmem>>, vector<1024x256xbf16>
    %cst_8 = arith.constant dense<0.000000e+00> : vector<8x256xf32>
    %11 = tpu.matmul %9, %10, %cst_8 {dimension_numbers = #tpu.dot_dimension_numbers<[1], [0], [0], [1], [0, 0, 1, 1], [], []>} : vector<8x1024xbf16>, vector<1024x256xbf16>, vector<8x256xf32> -> vector<8x256xf32>
    %c0_9 = arith.constant 0 : index
    %c0_10 = arith.constant 0 : index
    %12 = vector.load %arg5[%c0_9, %c0_10] : memref<1x256xf32, #tpu.memory_space<vmem>>, vector<1x256xf32>
    %13 = vector.broadcast %12 : vector<1x256xf32> to vector<8x256xf32>
    %14 = arith.addf %11, %13 : vector<8x256xf32>
    %15 = vector.extract_strided_slice %14 {offsets = [0, 0], sizes = [8, 128], strides = [1, 1]} : vector<8x256xf32> to vector<8x128xf32>
    %c0_11 = arith.constant 0 : index
    %c0_12 = arith.constant 0 : index
    %16 = vector.load %arg6[%c0_11, %c0_12] : memref<8x128xf32, #tpu.memory_space<vmem>>, vector<8x128xf32>
    tpu.vector_store %arg6[%c0_11, %c0_12], %15 {strides = array<i32>} : memref<8x128xf32, #tpu.memory_space<vmem>>, vector<8x128xf32>,
    %17 = vector.extract_strided_slice %14 {offsets = [0, 128], sizes = [8, 128], strides = [1, 1]} : vector<8x256xf32> to vector<8x128xf32>
    %c0_13 = arith.constant 0 : index
    %c0_14 = arith.constant 0 : index
    %18 = vector.load %arg7[%c0_13, %c0_14] : memref<8x128xf32, #tpu.memory_space<vmem>>, vector<8x128xf32>
    tpu.vector_store %arg7[%c0_13, %c0_14], %17 {strides = array<i32>} : memref<8x128xf32, #tpu.memory_space<vmem>>, vector<8x128xf32>,
    return
  }
  func.func @transform_0(%arg0: i32) -> (i32, i32) {
    %c0_i32 = arith.constant 0 : i32
    %c0_i32_0 = arith.constant 0 : i32
    return %arg0, %c0_i32 : i32, i32
  }
  func.func @transform_1(%arg0: i32) -> (i32, i32) {
    %c0_i32 = arith.constant 0 : i32
    %c0_i32_0 = arith.constant 0 : i32
    %c0_i32_1 = arith.constant 0 : i32
    return %c0_i32, %c0_i32_0 : i32, i32
  }
  func.func @transform_2(%arg0: i32) -> (i32, i32) {
    %c0_i32 = arith.constant 0 : i32
    %c0_i32_0 = arith.constant 0 : i32
    %c0_i32_1 = arith.constant 0 : i32
    return %c0_i32, %c0_i32_0 : i32, i32
  }
  func.func @transform_3(%arg0: i32) -> (i32, i32) {
    %c0_i32 = arith.constant 0 : i32
    %c0_i32_0 = arith.constant 0 : i32
    %c0_i32_1 = arith.constant 0 : i32
    return %c0_i32, %c0_i32_0 : i32, i32
  }
  func.func @transform_4(%arg0: i32) -> (i32, i32) {
    %c0_i32 = arith.constant 0 : i32
    %c0_i32_0 = arith.constant 0 : i32
    %c0_i32_1 = arith.constant 0 : i32
    return %c0_i32, %c0_i32_0 : i32, i32
  }
  func.func @transform_5(%arg0: i32) -> (i32, i32) {
    %c0_i32 = arith.constant 0 : i32
    %c0_i32_0 = arith.constant 0 : i32
    return %arg0, %c0_i32 : i32, i32
  }
  func.func @transform_6(%arg0: i32) -> (i32, i32) {
    %c0_i32 = arith.constant 0 : i32
    %c0_i32_0 = arith.constant 0 : i32
    return %arg0, %c0_i32 : i32, i32
  }
}

</mosaic_0001>

<llo_original>
// kernel: tpu_custom_call.1
$region0: #{tpu_custom_call.1}
  #allocation0 [shape = 'u32[]', space=smem, size = 0x4, offset = 0x4, fixed_abs, tag = 'smem constant byte address 0x4 - core index']
  #allocation1 [shape = 'u32[72,128]{1,0:T(1,128)}', space=vmem, size = 0x9000, scoped, tag = 'internal scratch']
  %s0 = inlined_call_operand.hbm [shape: f32[8,700], index: 0, kind: input, shape index: {}]
  %s1 = inlined_call_operand.hbm [shape: bf16[700,1024], index: 1, kind: input, shape index: {}]
  %s2 = inlined_call_operand.hbm [shape: f32[1,1024], index: 2, kind: input, shape index: {}]
  %s3 = inlined_call_operand.hbm [shape: bf16[1024,256], index: 3, kind: input, shape index: {}]
  %s4 = inlined_call_operand.hbm [shape: f32[1,256], index: 4, kind: input, shape index: {}]
  %s5 = inlined_call_operand.hbm [shape: f32[8,128], index: 5, kind: output, shape index: {0}]
  %s6 = inlined_call_operand.hbm [shape: f32[8,128], index: 6, kind: output, shape index: {1}]
  %7 = xla_tuple %s5, %s6
  %s8 = sld [smem:[#allocation0]]
  $region58: #{tpu_custom_call.1} parent=0
    _
  %s10 = ssub.s32 1, %s8
  %s11 = scalar_select 0, %s10, %s8
  $region1: #{tpu_custom_call.1} parent=0
    #allocation2 [shape = 'u8[24576]{0}', space=vmem, size = 0x6000, scoped, tag = 'input window, operand 0, single buffered']
    #allocation3 [shape = 's32[1]{0}', space=sflag, size = 0x4, scoped, tag = 'scoped memory for tpu_custom_call.1']
    #allocation4 [shape = 's32[1]{0}', space=sflag, size = 0x4, scoped, tag = 'scoped memory for tpu_custom_call.1']
    #allocation5 [shape = 'u8[1441792]{0}', space=vmem, size = 0x160000, scoped, tag = 'input window, operand 1, single buffered']
    #allocation6 [shape = 's32[1]{0}', space=sflag, size = 0x4, scoped, tag = 'scoped memory for tpu_custom_call.1']
    #allocation7 [shape = 'u8[4096]{0}', space=vmem, size = 0x1000, scoped, tag = 'input window, operand 2, single buffered']
    #allocation8 [shape = 'u8[524288]{0}', space=vmem, size = 0x80000, scoped, tag = 'input window, operand 3, single buffered']
    #allocation9 [shape = 's32[1]{0}', space=sflag, size = 0x4, scoped, tag = 'scoped memory for tpu_custom_call.1']
    #allocation10 [shape = 'u8[1024]{0}', space=vmem, size = 0x400, scoped, tag = 'input window, operand 4, single buffered']
    #allocation11 [shape = 'u8[4096]{0}', space=vmem, size = 0x1000, scoped, tag = 'output window, operand 0, single buffered']
    #allocation12 [shape = 'u8[4096]{0}', space=vmem, size = 0x1000, scoped, tag = 'output window, operand 1, single buffered']
    #allocation13 [shape = 's32[1]{0}', space=sflag, size = 0x4, scoped, tag = 'scoped memory for tpu_custom_call.1']
    %12 = vsyncpa [#allocation3], 0
    %13 = vsyncpa [#allocation6], 0
    %14 = vsyncpa [#allocation9], 0
    %15 = vsyncpa [#allocation4], 0
    %16 = vsyncpa [#allocation13], 0
    // Predicated region
    $region2: #{tpu_custom_call.1} parent=1 // pred_check
      _
    $region3: #{tpu_custom_call.1} parent=1 // pred_check_branch
      %18 = sbr.rel (0) target = $region5
    $region4: #{tpu_custom_call.1} parent=1 // pred_region
      %20 = vsyncadd [#allocation3], 0
      %s22 = sshll.u32 %s0, 4
      %s23 = int_to_ptr.hbm [resolvable:$true] %s22
      %s24 = sshll.u32 [#allocation2], 4
      %s25 = int_to_ptr.vmem [resolvable:$true] %s24
      %27 = dma.hbm_to_vmem [thread:$0]  %s23, 768, %s25, [#allocation3]
    $region5: #{tpu_custom_call.1} parent=1 // pred_fallthru
      _
    // Predicated region
    $region6: #{tpu_custom_call.1} parent=1 // pred_check
      _
    $region7: #{tpu_custom_call.1} parent=1 // pred_check_branch
      %29 = sbr.rel (0) target = $region9
    $region8: #{tpu_custom_call.1} parent=1 // pred_region
      %31 = vsyncadd [#allocation6], 0
      %s32 = sshll.u32 %s1, 4
      %s33 = int_to_ptr.hbm [resolvable:$true] %s32
      %s34 = sshll.u32 [#allocation5], 4
      %s35 = int_to_ptr.vmem [resolvable:$true] %s34
      %40 = dma.hbm_to_vmem [thread:$0]  %s33, 45056, %s35, [#allocation6], 512, 512, 32
    $region9: #{tpu_custom_call.1} parent=1 // pred_fallthru
      _
    // Predicated region
    $region10: #{tpu_custom_call.1} parent=1 // pred_check
      _
    $region11: #{tpu_custom_call.1} parent=1 // pred_check_branch
      %42 = sbr.rel (0) target = $region13
    $region12: #{tpu_custom_call.1} parent=1 // pred_region
      %44 = vsyncadd [#allocation6], 0
      %s46 = sshll.u32 %s2, 4
      %s47 = int_to_ptr.hbm [resolvable:$true] %s46
      %s48 = sshll.u32 [#allocation7], 4
      %s49 = int_to_ptr.vmem [resolvable:$true] %s48
      %51 = dma.hbm_to_vmem [thread:$0]  %s47, 128, %s49, [#allocation6]
    $region13: #{tpu_custom_call.1} parent=1 // pred_fallthru
      _
    // Predicated region
    $region14: #{tpu_custom_call.1} parent=1 // pred_check
      _
    $region15: #{tpu_custom_call.1} parent=1 // pred_check_branch
      %53 = sbr.rel (0) target = $region17
    $region16: #{tpu_custom_call.1} parent=1 // pred_region
      %55 = vsyncadd [#allocation9], 0
      %s56 = sshll.u32 %s3, 4
      %s57 = int_to_ptr.hbm [resolvable:$true] %s56
      %s58 = sshll.u32 [#allocation8], 4
      %s59 = int_to_ptr.vmem [resolvable:$true] %s58
      %64 = dma.hbm_to_vmem [thread:$0]  %s57, 16384, %s59, [#allocation9], 128, 128, 8
    $region17: #{tpu_custom_call.1} parent=1 // pred_fallthru
      _
    // Predicated region
    $region18: #{tpu_custom_call.1} parent=1 // pred_check
      _
    $region19: #{tpu_custom_call.1} parent=1 // pred_check_branch
      %66 = sbr.rel (0) target = $region21
    $region20: #{tpu_custom_call.1} parent=1 // pred_region
      %68 = vsyncadd [#allocation9], 0
      %s70 = sshll.u32 %s4, 4
      %s71 = int_to_ptr.hbm [resolvable:$true] %s70
      %s72 = sshll.u32 [#allocation10], 4
      %s73 = int_to_ptr.vmem [resolvable:$true] %s72
      %75 = dma.hbm_to_vmem [thread:$0]  %s71, 32, %s73, [#allocation9]
    $region21: #{tpu_custom_call.1} parent=1 // pred_fallthru
      _
    // Predicated region
    $region22: #{tpu_custom_call.1} parent=1 // pred_check
      _
    $region23: #{tpu_custom_call.1} parent=1 // pred_check_branch
      %77 = sbr.rel (0) target = $region25
    $region24: #{tpu_custom_call.1} parent=1 // pred_region
      %79 = dma.done [#allocation3], 768
    $region25: #{tpu_custom_call.1} parent=1 // pred_fallthru
      _
    // Predicated region
    $region26: #{tpu_custom_call.1} parent=1 // pred_check
      _
    $region27: #{tpu_custom_call.1} parent=1 // pred_check_branch
      %81 = sbr.rel (0) target = $region29
    $region28: #{tpu_custom_call.1} parent=1 // pred_region
      %83 = dma.done [#allocation6], 45056
    $region29: #{tpu_custom_call.1} parent=1 // pred_fallthru
      _
    // Predicated region
    $region30: #{tpu_custom_call.1} parent=1 // pred_check
      _
    $region31: #{tpu_custom_call.1} parent=1 // pred_check_branch
      %85 = sbr.rel (0) target = $region33
    $region32: #{tpu_custom_call.1} parent=1 // pred_region
      %87 = dma.done [#allocation6], 128
    $region33: #{tpu_custom_call.1} parent=1 // pred_fallthru
      _
    // Predicated region
    $region34: #{tpu_custom_call.1} parent=1 // pred_check
      _
    $region35: #{tpu_custom_call.1} parent=1 // pred_check_branch
      %89 = sbr.rel (0) target = $region37
    $region36: #{tpu_custom_call.1} parent=1 // pred_region
      %91 = dma.done [#allocation9], 16384
    $region37: #{tpu_custom_call.1} parent=1 // pred_fallthru
      _
    // Predicated region
    $region38: #{tpu_custom_call.1} parent=1 // pred_check
      _
    $region39: #{tpu_custom_call.1} parent=1 // pred_check_branch
      %93 = sbr.rel (0) target = $region41
    $region40: #{tpu_custom_call.1} parent=1 // pred_region
      %95 = dma.done [#allocation9], 32
    $region41: #{tpu_custom_call.1} parent=1 // pred_fallthru
      _
    %v97 = vld [vmem:[#allocation2] sm:$0xff]
    %v98 = vld [vmem:[#allocation2 + $0x8] sm:$0xff]
    %v99 = vld [vmem:[#allocation2 + $0x10] sm:$0xff]
    %v100 = vld [vmem:[#allocation2 + $0x18] sm:$0xff]
    %v101 = vld [vmem:[#allocation2 + $0x20] sm:$0xff]
    %v102 = vld [vmem:[#allocation2 + $0x28] sm:$0xff]
    %v103 = vpack.c.bf16 %v97, %v97
    %v104 = vpack.c.bf16 %v98, %v98
    %v105 = vpack.c.bf16 %v99, %v99
    %v106 = vpack.c.bf16 %v100, %v100
    %v107 = vpack.c.bf16 %v101, %v101
    %v108 = vpack.c.bf16 %v102, %v102
    %v109 = vld [vmem:[#allocation5] sm:$0xff]
    %v110 = vld [vmem:[#allocation5 + $0x8] sm:$0xff]
    %v111 = vld [vmem:[#allocation5 + $0x10] sm:$0xff]
    %v112 = vld [vmem:[#allocation5 + $0x18] sm:$0xff]
    %v113 = vld [vmem:[#allocation5 + $0x20] sm:$0xff]
    %v114 = vld [vmem:[#allocation5 + $0x28] sm:$0xff]
    %v115 = vld [vmem:[#allocation5 + $0x30] sm:$0xff]
    %v116 = vld [vmem:[#allocation5 + $0x38] sm:$0xff]
    %v117 = vld [vmem:[#allocation5 + $0x40] sm:$0xff]
    %v118 = vld [vmem:[#allocation5 + $0x48] sm:$0xff]
    %v119 = vld [vmem:[#allocation5 + $0x50] sm:$0xff]
    %v120 = vld [vmem:[#allocation5 + $0x58] sm:$0xff]
    %v121 = vld [vmem:[#allocation5 + $0x60] sm:$0xff]
    %v122 = vld [vmem:[#allocation5 + $0x68] sm:$0xff]
    %v123 = vld [vmem:[#allocation5 + $0x70] sm:$0xff]
    %v124 = vld [vmem:[#allocation5 + $0x78] sm:$0xff]
    %v125 = vld [vmem:[#allocation5 + $0x80] sm:$0xff]
    %v126 = vld [vmem:[#allocation5 + $0x88] sm:$0xff]
    %v127 = vld [vmem:[#allocation5 + $0x90] sm:$0xff]
    %v128 = vld [vmem:[#allocation5 + $0x98] sm:$0xff]
    %v129 = vld [vmem:[#allocation5 + $0xa0] sm:$0xff]
    %v130 = vld [vmem:[#allocation5 + $0xa8] sm:$0xff]
    %v131 = vld [vmem:[#allocation5 + $0xb0] sm:$0xff]
    %v132 = vld [vmem:[#allocation5 + $0xb8] sm:$0xff]
    %v133 = vld [vmem:[#allocation5 + $0xc0] sm:$0xff]
    %v134 = vld [vmem:[#allocation5 + $0xc8] sm:$0xff]
    %v135 = vld [vmem:[#allocation5 + $0xd0] sm:$0xff]
    %v136 = vld [vmem:[#allocation5 + $0xd8] sm:$0xff]
    %v137 = vld [vmem:[#allocation5 + $0xe0] sm:$0xff]
    %v138 = vld [vmem:[#allocation5 + $0xe8] sm:$0xff]
    %v139 = vld [vmem:[#allocation5 + $0xf0] sm:$0xff]
    %v140 = vld [vmem:[#allocation5 + $0xf8] sm:$0xff]
    %v141 = vld [vmem:[#allocation5 + $0x100] sm:$0xff]
    %v142 = vld [vmem:[#allocation5 + $0x108] sm:$0xff]
    %v143 = vld [vmem:[#allocation5 + $0x110] sm:$0xff]
    %v144 = vld [vmem:[#allocation5 + $0x118] sm:$0xff]
    %v145 = vld [vmem:[#allocation5 + $0x120] sm:$0xff]
    %v146 = vld [vmem:[#allocation5 + $0x128] sm:$0xff]
    %v147 = vld [vmem:[#allocation5 + $0x130] sm:$0xff]
    %v148 = vld [vmem:[#allocation5 + $0x138] sm:$0xff]
    %v149 = vld [vmem:[#allocation5 + $0x140] sm:$0xff]
    %v150 = vld [vmem:[#allocation5 + $0x148] sm:$0xff]
    %v151 = vld [vmem:[#allocation5 + $0x150] sm:$0xff]
    %v152 = vld [vmem:[#allocation5 + $0x158] sm:$0xff]
    %v153 = vld [vmem:[#allocation5 + $0x160] sm:$0xff]
    %v154 = vld [vmem:[#allocation5 + $0x168] sm:$0xff]
    %v155 = vld [vmem:[#allocation5 + $0x170] sm:$0xff]
    %v156 = vld [vmem:[#allocation5 + $0x178] sm:$0xff]
    %v157 = vld [vmem:[#allocation5 + $0x180] sm:$0xff]
    %v158 = vld [vmem:[#allocation5 + $0x188] sm:$0xff]
    %v159 = vld [vmem:[#allocation5 + $0x190] sm:$0xff]
    %v160 = vld [vmem:[#allocation5 + $0x198] sm:$0xff]
    %v161 = vld [vmem:[#allocation5 + $0x1a0] sm:$0xff]
    %v162 = vld [vmem:[#allocation5 + $0x1a8] sm:$0xff]
    %v163 = vld [vmem:[#allocation5 + $0x1b0] sm:$0xff]
    %v164 = vld [vmem:[#allocation5 + $0x1b8] sm:$0xff]
    %v165 = vld [vmem:[#allocation5 + $0x1c0] sm:$0xff]
    %v166 = vld [vmem:[#allocation5 + $0x1c8] sm:$0xff]
    %v167 = vld [vmem:[#allocation5 + $0x1d0] sm:$0xff]
    %v168 = vld [vmem:[#allocation5 + $0x1d8] sm:$0xff]
    %v169 = vld [vmem:[#allocation5 + $0x1e0] sm:$0xff]
    %v170 = vld [vmem:[#allocation5 + $0x1e8] sm:$0xff]
    %v171 = vld [vmem:[#allocation5 + $0x1f0] sm:$0xff]
    %v172 = vld [vmem:[#allocation5 + $0x1f8] sm:$0xff]
    %v173 = vld [vmem:[#allocation5 + $0x200] sm:$0xff]
    %v174 = vld [vmem:[#allocation5 + $0x208] sm:$0xff]
    %v175 = vld [vmem:[#allocation5 + $0x210] sm:$0xff]
    %v176 = vld [vmem:[#allocation5 + $0x218] sm:$0xff]
    %v177 = vld [vmem:[#allocation5 + $0x220] sm:$0xff]
    %v178 = vld [vmem:[#allocation5 + $0x228] sm:$0xff]
    %v179 = vld [vmem:[#allocation5 + $0x230] sm:$0xff]
    %v180 = vld [vmem:[#allocation5 + $0x238] sm:$0xff]
    %v181 = vld [vmem:[#allocation5 + $0x240] sm:$0xff]
    %v182 = vld [vmem:[#allocation5 + $0x248] sm:$0xff]
    %v183 = vld [vmem:[#allocation5 + $0x250] sm:$0xff]
    %v184 = vld [vmem:[#allocation5 + $0x258] sm:$0xff]
    %v185 = vld [vmem:[#allocation5 + $0x260] sm:$0xff]
    %v186 = vld [vmem:[#allocation5 + $0x268] sm:$0xff]
    %v187 = vld [vmem:[#allocation5 + $0x270] sm:$0xff]
    %v188 = vld [vmem:[#allocation5 + $0x278] sm:$0xff]
    %v189 = vld [vmem:[#allocation5 + $0x280] sm:$0xff]
    %v190 = vld [vmem:[#allocation5 + $0x288] sm:$0xff]
    %v191 = vld [vmem:[#allocation5 + $0x290] sm:$0xff]
    %v192 = vld [vmem:[#allocation5 + $0x298] sm:$0xff]
    %v193 = vld [vmem:[#allocation5 + $0x2a0] sm:$0xff]
    %v194 = vld [vmem:[#allocation5 + $0x2a8] sm:$0xff]
    %v195 = vld [vmem:[#allocation5 + $0x2b0] sm:$0xff]
    %v196 = vld [vmem:[#allocation5 + $0x2b8] sm:$0xff]
    %v197 = vld [vmem:[#allocation5 + $0x2c0] sm:$0xff]
    %v198 = vld [vmem:[#allocation5 + $0x2c8] sm:$0xff]
    %v199 = vld [vmem:[#allocation5 + $0x2d0] sm:$0xff]
    %v200 = vld [vmem:[#allocation5 + $0x2d8] sm:$0xff]
    %v201 = vld [vmem:[#allocation5 + $0x2e0] sm:$0xff]
    %v202 = vld [vmem:[#allocation5 + $0x2e8] sm:$0xff]
    %v203 = vld [vmem:[#allocation5 + $0x2f0] sm:$0xff]
    %v204 = vld [vmem:[#allocation5 + $0x2f8] sm:$0xff]
    %v205 = vld [vmem:[#allocation5 + $0x300] sm:$0xff]
    %v206 = vld [vmem:[#allocation5 + $0x308] sm:$0xff]
    %v207 = vld [vmem:[#allocation5 + $0x310] sm:$0xff]
    %v208 = vld [vmem:[#allocation5 + $0x318] sm:$0xff]
    %v209 = vld [vmem:[#allocation5 + $0x320] sm:$0xff]
    %v210 = vld [vmem:[#allocation5 + $0x328] sm:$0xff]
    %v211 = vld [vmem:[#allocation5 + $0x330] sm:$0xff]
    %v212 = vld [vmem:[#allocation5 + $0x338] sm:$0xff]
    %v213 = vld [vmem:[#allocation5 + $0x340] sm:$0xff]
    %v214 = vld [vmem:[#allocation5 + $0x348] sm:$0xff]
    %v215 = vld [vmem:[#allocation5 + $0x350] sm:$0xff]
    %v216 = vld [vmem:[#allocation5 + $0x358] sm:$0xff]
    %v217 = vld [vmem:[#allocation5 + $0x360] sm:$0xff]
    %v218 = vld [vmem:[#allocation5 + $0x368] sm:$0xff]
    %v219 = vld [vmem:[#allocation5 + $0x370] sm:$0xff]
    %v220 = vld [vmem:[#allocation5 + $0x378] sm:$0xff]
    %v221 = vld [vmem:[#allocation5 + $0x380] sm:$0xff]
    %v222 = vld [vmem:[#allocation5 + $0x388] sm:$0xff]
    %v223 = vld [vmem:[#allocation5 + $0x390] sm:$0xff]
    %v224 = vld [vmem:[#allocation5 + $0x398] sm:$0xff]
    %v225 = vld [vmem:[#allocation5 + $0x3a0] sm:$0xff]
    %v226 = vld [vmem:[#allocation5 + $0x3a8] sm:$0xff]
    %v227 = vld [vmem:[#allocation5 + $0x3b0] sm:$0xff]
    %v228 = vld [vmem:[#allocation5 + $0x3b8] sm:$0xff]
    %v229 = vld [vmem:[#allocation5 + $0x3c0] sm:$0xff]
    %v230 = vld [vmem:[#allocation5 + $0x3c8] sm:$0xff]
    %v231 = vld [vmem:[#allocation5 + $0x3d0] sm:$0xff]
    %v232 = vld [vmem:[#allocation5 + $0x3d8] sm:$0xff]
    %v233 = vld [vmem:[#allocation5 + $0x3e0] sm:$0xff]
    %v234 = vld [vmem:[#allocation5 + $0x3e8] sm:$0xff]
    %v235 = vld [vmem:[#allocation5 + $0x3f0] sm:$0xff]
    %v236 = vld [vmem:[#allocation5 + $0x3f8] sm:$0xff]
    %v237 = vld [vmem:[#allocation5 + $0x400] sm:$0xff]
    %v238 = vld [vmem:[#allocation5 + $0x408] sm:$0xff]
    %v239 = vld [vmem:[#allocation5 + $0x410] sm:$0xff]
    %v240 = vld [vmem:[#allocation5 + $0x418] sm:$0xff]
    %v241 = vld [vmem:[#allocation5 + $0x420] sm:$0xff]
    %v242 = vld [vmem:[#allocation5 + $0x428] sm:$0xff]
    %v243 = vld [vmem:[#allocation5 + $0x430] sm:$0xff]
    %v244 = vld [vmem:[#allocation5 + $0x438] sm:$0xff]
    %v245 = vld [vmem:[#allocation5 + $0x440] sm:$0xff]
    %v246 = vld [vmem:[#allocation5 + $0x448] sm:$0xff]
    %v247 = vld [vmem:[#allocation5 + $0x450] sm:$0xff]
    %v248 = vld [vmem:[#allocation5 + $0x458] sm:$0xff]
    %v249 = vld [vmem:[#allocation5 + $0x460] sm:$0xff]
    %v250 = vld [vmem:[#allocation5 + $0x468] sm:$0xff]
    %v251 = vld [vmem:[#allocation5 + $0x470] sm:$0xff]
    %v252 = vld [vmem:[#allocation5 + $0x478] sm:$0xff]
    %v253 = vld [vmem:[#allocation5 + $0x480] sm:$0xff]
    %v254 = vld [vmem:[#allocation5 + $0x488] sm:$0xff]
    %v255 = vld [vmem:[#allocation5 + $0x490] sm:$0xff]
    %v256 = vld [vmem:[#allocation5 + $0x498] sm:$0xff]
    %v257 = vld [vmem:[#allocation5 + $0x4a0] sm:$0xff]
    %v258 = vld [vmem:[#allocation5 + $0x4a8] sm:$0xff]
    %v259 = vld [vmem:[#allocation5 + $0x4b0] sm:$0xff]
    %v260 = vld [vmem:[#allocation5 + $0x4b8] sm:$0xff]
    %v261 = vld [vmem:[#allocation5 + $0x4c0] sm:$0xff]
    %v262 = vld [vmem:[#allocation5 + $0x4c8] sm:$0xff]
    %v263 = vld [vmem:[#allocation5 + $0x4d0] sm:$0xff]
    %v264 = vld [vmem:[#allocation5 + $0x4d8] sm:$0xff]
    %v265 = vld [vmem:[#allocation5 + $0x4e0] sm:$0xff]
    %v266 = vld [vmem:[#allocation5 + $0x4e8] sm:$0xff]
    %v267 = vld [vmem:[#allocation5 + $0x4f0] sm:$0xff]
    %v268 = vld [vmem:[#allocation5 + $0x4f8] sm:$0xff]
    %v269 = vld [vmem:[#allocation5 + $0x500] sm:$0xff]
    %v270 = vld [vmem:[#allocation5 + $0x508] sm:$0xff]
    %v271 = vld [vmem:[#allocation5 + $0x510] sm:$0xff]
    %v272 = vld [vmem:[#allocation5 + $0x518] sm:$0xff]
    %v273 = vld [vmem:[#allocation5 + $0x520] sm:$0xff]
    %v274 = vld [vmem:[#allocation5 + $0x528] sm:$0xff]
    %v275 = vld [vmem:[#allocation5 + $0x530] sm:$0xff]
    %v276 = vld [vmem:[#allocation5 + $0x538] sm:$0xff]
    %v277 = vld [vmem:[#allocation5 + $0x540] sm:$0xff]
    %v278 = vld [vmem:[#allocation5 + $0x548] sm:$0xff]
    %v279 = vld [vmem:[#allocation5 + $0x550] sm:$0xff]
    %v280 = vld [vmem:[#allocation5 + $0x558] sm:$0xff]
    %v281 = vld [vmem:[#allocation5 + $0x560] sm:$0xff]
    %v282 = vld [vmem:[#allocation5 + $0x568] sm:$0xff]
    %v283 = vld [vmem:[#allocation5 + $0x570] sm:$0xff]
    %v284 = vld [vmem:[#allocation5 + $0x578] sm:$0xff]
    %v285 = vld [vmem:[#allocation5 + $0x580] sm:$0xff]
    %v286 = vld [vmem:[#allocation5 + $0x588] sm:$0xff]
    %v287 = vld [vmem:[#allocation5 + $0x590] sm:$0xff]
    %v288 = vld [vmem:[#allocation5 + $0x598] sm:$0xff]
    %v289 = vld [vmem:[#allocation5 + $0x5a0] sm:$0xff]
    %v290 = vld [vmem:[#allocation5 + $0x5a8] sm:$0xff]
    %v291 = vld [vmem:[#allocation5 + $0x5b0] sm:$0xff]
    %v292 = vld [vmem:[#allocation5 + $0x5b8] sm:$0xff]
    %v293 = vld [vmem:[#allocation5 + $0x5c0] sm:$0xff]
    %v294 = vld [vmem:[#allocation5 + $0x5c8] sm:$0xff]
    %v295 = vld [vmem:[#allocation5 + $0x5d0] sm:$0xff]
    %v296 = vld [vmem:[#allocation5 + $0x5d8] sm:$0xff]
    %v297 = vld [vmem:[#allocation5 + $0x5e0] sm:$0xff]
    %v298 = vld [vmem:[#allocation5 + $0x5e8] sm:$0xff]
    %v299 = vld [vmem:[#allocation5 + $0x5f0] sm:$0xff]
    %v300 = vld [vmem:[#allocation5 + $0x5f8] sm:$0xff]
    %v301 = vld [vmem:[#allocation5 + $0x600] sm:$0xff]
    %v302 = vld [vmem:[#allocation5 + $0x608] sm:$0xff]
    %v303 = vld [vmem:[#allocation5 + $0x610] sm:$0xff]
    %v304 = vld [vmem:[#allocation5 + $0x618] sm:$0xff]
    %v305 = vld [vmem:[#allocation5 + $0x620] sm:$0xff]
    %v306 = vld [vmem:[#allocation5 + $0x628] sm:$0xff]
    %v307 = vld [vmem:[#allocation5 + $0x630] sm:$0xff]
    %v308 = vld [vmem:[#allocation5 + $0x638] sm:$0xff]
    %v309 = vld [vmem:[#allocation5 + $0x640] sm:$0xff]
    %v310 = vld [vmem:[#allocation5 + $0x648] sm:$0xff]
    %v311 = vld [vmem:[#allocation5 + $0x650] sm:$0xff]
    %v312 = vld [vmem:[#allocation5 + $0x658] sm:$0xff]
    %v313 = vld [vmem:[#allocation5 + $0x660] sm:$0xff]
    %v314 = vld [vmem:[#allocation5 + $0x668] sm:$0xff]
    %v315 = vld [vmem:[#allocation5 + $0x670] sm:$0xff]
    %v316 = vld [vmem:[#allocation5 + $0x678] sm:$0xff]
    %v317 = vld [vmem:[#allocation5 + $0x680] sm:$0xff]
    %v318 = vld [vmem:[#allocation5 + $0x688] sm:$0xff]
    %v319 = vld [vmem:[#allocation5 + $0x690] sm:$0xff]
    %v320 = vld [vmem:[#allocation5 + $0x698] sm:$0xff]
    %v321 = vld [vmem:[#allocation5 + $0x6a0] sm:$0xff]
    %v322 = vld [vmem:[#allocation5 + $0x6a8] sm:$0xff]
    %v323 = vld [vmem:[#allocation5 + $0x6b0] sm:$0xff]
    %v324 = vld [vmem:[#allocation5 + $0x6b8] sm:$0xff]
    %v325 = vld [vmem:[#allocation5 + $0x6c0] sm:$0xff]
    %v326 = vld [vmem:[#allocation5 + $0x6c8] sm:$0xff]
    %v327 = vld [vmem:[#allocation5 + $0x6d0] sm:$0xff]
    %v328 = vld [vmem:[#allocation5 + $0x6d8] sm:$0xff]
    %v329 = vld [vmem:[#allocation5 + $0x6e0] sm:$0xff]
    %v330 = vld [vmem:[#allocation5 + $0x6e8] sm:$0xff]
    %v331 = vld [vmem:[#allocation5 + $0x6f0] sm:$0xff]
    %v332 = vld [vmem:[#allocation5 + $0x6f8] sm:$0xff]
    %v333 = vld [vmem:[#allocation5 + $0x700] sm:$0xff]
    %v334 = vld [vmem:[#allocation5 + $0x708] sm:$0xff]
    %v335 = vld [vmem:[#allocation5 + $0x710] sm:$0xff]
    %v336 = vld [vmem:[#allocation5 + $0x718] sm:$0xff]
    %v337 = vld [vmem:[#allocation5 + $0x720] sm:$0xff]
    %v338 = vld [vmem:[#allocation5 + $0x728] sm:$0xff]
    %v339 = vld [vmem:[#allocation5 + $0x730] sm:$0xff]
    %v340 = vld [vmem:[#allocation5 + $0x738] sm:$0xff]
    %v341 = vld [vmem:[#allocation5 + $0x740] sm:$0xff]
    %v342 = vld [vmem:[#allocation5 + $0x748] sm:$0xff]
    %v343 = vld [vmem:[#allocation5 + $0x750] sm:$0xff]
    %v344 = vld [vmem:[#allocation5 + $0x758] sm:$0xff]
    %v345 = vld [vmem:[#allocation5 + $0x760] sm:$0xff]
    %v346 = vld [vmem:[#allocation5 + $0x768] sm:$0xff]
    %v347 = vld [vmem:[#allocation5 + $0x770] sm:$0xff]
    %v348 = vld [vmem:[#allocation5 + $0x778] sm:$0xff]
    %v349 = vld [vmem:[#allocation5 + $0x780] sm:$0xff]
    %v350 = vld [vmem:[#allocation5 + $0x788] sm:$0xff]
    %v351 = vld [vmem:[#allocation5 + $0x790] sm:$0xff]
    %v352 = vld [vmem:[#allocation5 + $0x798] sm:$0xff]
    %v353 = vld [vmem:[#allocation5 + $0x7a0] sm:$0xff]
    %v354 = vld [vmem:[#allocation5 + $0x7a8] sm:$0xff]
    %v355 = vld [vmem:[#allocation5 + $0x7b0] sm:$0xff]
    %v356 = vld [vmem:[#allocation5 + $0x7b8] sm:$0xff]
    %v357 = vld [vmem:[#allocation5 + $0x7c0] sm:$0xff]
    %v358 = vld [vmem:[#allocation5 + $0x7c8] sm:$0xff]
    %v359 = vld [vmem:[#allocation5 + $0x7d0] sm:$0xff]
    %v360 = vld [vmem:[#allocation5 + $0x7d8] sm:$0xff]
    %v361 = vld [vmem:[#allocation5 + $0x7e0] sm:$0xff]
    %v362 = vld [vmem:[#allocation5 + $0x7e8] sm:$0xff]
    %v363 = vld [vmem:[#allocation5 + $0x7f0] sm:$0xff]
    %v364 = vld [vmem:[#allocation5 + $0x7f8] sm:$0xff]
    %v365 = vld [vmem:[#allocation5 + $0x800] sm:$0xff]
    %v366 = vld [vmem:[#allocation5 + $0x808] sm:$0xff]
    %v367 = vld [vmem:[#allocation5 + $0x810] sm:$0xff]
    %v368 = vld [vmem:[#allocation5 + $0x818] sm:$0xff]
    %v369 = vld [vmem:[#allocation5 + $0x820] sm:$0xff]
    %v370 = vld [vmem:[#allocation5 + $0x828] sm:$0xff]
    %v371 = vld [vmem:[#allocation5 + $0x830] sm:$0xff]
    %v372 = vld [vmem:[#allocation5 + $0x838] sm:$0xff]
    %v373 = vld [vmem:[#allocation5 + $0x840] sm:$0xff]
    %v374 = vld [vmem:[#allocation5 + $0x848] sm:$0xff]
    %v375 = vld [vmem:[#allocation5 + $0x850] sm:$0xff]
    %v376 = vld [vmem:[#allocation5 + $0x858] sm:$0xff]
    %v377 = vld [vmem:[#allocation5 + $0x860] sm:$0xff]
    %v378 = vld [vmem:[#allocation5 + $0x868] sm:$0xff]
    %v379 = vld [vmem:[#allocation5 + $0x870] sm:$0xff]
    %v380 = vld [vmem:[#allocation5 + $0x878] sm:$0xff]
    %v381 = vld [vmem:[#allocation5 + $0x880] sm:$0xff]
    %v382 = vld [vmem:[#allocation5 + $0x888] sm:$0xff]
    %v383 = vld [vmem:[#allocation5 + $0x890] sm:$0xff]
    %v384 = vld [vmem:[#allocation5 + $0x898] sm:$0xff]
    %v385 = vld [vmem:[#allocation5 + $0x8a0] sm:$0xff]
    %v386 = vld [vmem:[#allocation5 + $0x8a8] sm:$0xff]
    %v387 = vld [vmem:[#allocation5 + $0x8b0] sm:$0xff]
    %v388 = vld [vmem:[#allocation5 + $0x8b8] sm:$0xff]
    %v389 = vld [vmem:[#allocation5 + $0x8c0] sm:$0xff]
    %v390 = vld [vmem:[#allocation5 + $0x8c8] sm:$0xff]
    %v391 = vld [vmem:[#allocation5 + $0x8d0] sm:$0xff]
    %v392 = vld [vmem:[#allocation5 + $0x8d8] sm:$0xff]
    %v393 = vld [vmem:[#allocation5 + $0x8e0] sm:$0xff]
    %v394 = vld [vmem:[#allocation5 + $0x8e8] sm:$0xff]
    %v395 = vld [vmem:[#allocation5 + $0x8f0] sm:$0xff]
    %v396 = vld [vmem:[#allocation5 + $0x8f8] sm:$0xff]
    %v397 = vld [vmem:[#allocation5 + $0x900] sm:$0xff]
    %v398 = vld [vmem:[#allocation5 + $0x908] sm:$0xff]
    %v399 = vld [vmem:[#allocation5 + $0x910] sm:$0xff]
    %v400 = vld [vmem:[#allocation5 + $0x918] sm:$0xff]
    %v401 = vld [vmem:[#allocation5 + $0x920] sm:$0xff]
    %v402 = vld [vmem:[#allocation5 + $0x928] sm:$0xff]
    %v403 = vld [vmem:[#allocation5 + $0x930] sm:$0xff]
    %v404 = vld [vmem:[#allocation5 + $0x938] sm:$0xff]
    %v405 = vld [vmem:[#allocation5 + $0x940] sm:$0xff]
    %v406 = vld [vmem:[#allocation5 + $0x948] sm:$0xff]
    %v407 = vld [vmem:[#allocation5 + $0x950] sm:$0xff]
    %v408 = vld [vmem:[#allocation5 + $0x958] sm:$0xff]
    %v409 = vld [vmem:[#allocation5 + $0x960] sm:$0xff]
    %v410 = vld [vmem:[#allocation5 + $0x968] sm:$0xff]
    %v411 = vld [vmem:[#allocation5 + $0x970] sm:$0xff]
    %v412 = vld [vmem:[#allocation5 + $0x978] sm:$0xff]
    %v413 = vld [vmem:[#allocation5 + $0x980] sm:$0xff]
    %v414 = vld [vmem:[#allocation5 + $0x988] sm:$0xff]
    %v415 = vld [vmem:[#allocation5 + $0x990] sm:$0xff]
    %v416 = vld [vmem:[#allocation5 + $0x998] sm:$0xff]
    %v417 = vld [vmem:[#allocation5 + $0x9a0] sm:$0xff]
    %v418 = vld [vmem:[#allocation5 + $0x9a8] sm:$0xff]
    %v419 = vld [vmem:[#allocation5 + $0x9b0] sm:$0xff]
    %v420 = vld [vmem:[#allocation5 + $0x9b8] sm:$0xff]
    %v421 = vld [vmem:[#allocation5 + $0x9c0] sm:$0xff]
    %v422 = vld [vmem:[#allocation5 + $0x9c8] sm:$0xff]
    %v423 = vld [vmem:[#allocation5 + $0x9d0] sm:$0xff]
    %v424 = vld [vmem:[#allocation5 + $0x9d8] sm:$0xff]
    %v425 = vld [vmem:[#allocation5 + $0x9e0] sm:$0xff]
    %v426 = vld [vmem:[#allocation5 + $0x9e8] sm:$0xff]
    %v427 = vld [vmem:[#allocation5 + $0x9f0] sm:$0xff]
    %v428 = vld [vmem:[#allocation5 + $0x9f8] sm:$0xff]
    %v429 = vld [vmem:[#allocation5 + $0xa00] sm:$0xff]
    %v430 = vld [vmem:[#allocation5 + $0xa08] sm:$0xff]
    %v431 = vld [vmem:[#allocation5 + $0xa10] sm:$0xff]
    %v432 = vld [vmem:[#allocation5 + $0xa18] sm:$0xff]
    %v433 = vld [vmem:[#allocation5 + $0xa20] sm:$0xff]
    %v434 = vld [vmem:[#allocation5 + $0xa28] sm:$0xff]
    %v435 = vld [vmem:[#allocation5 + $0xa30] sm:$0xff]
    %v436 = vld [vmem:[#allocation5 + $0xa38] sm:$0xff]
    %v437 = vld [vmem:[#allocation5 + $0xa40] sm:$0xff]
    %v438 = vld [vmem:[#allocation5 + $0xa48] sm:$0xff]
    %v439 = vld [vmem:[#allocation5 + $0xa50] sm:$0xff]
    %v440 = vld [vmem:[#allocation5 + $0xa58] sm:$0xff]
    %v441 = vld [vmem:[#allocation5 + $0xa60] sm:$0xff]
    %v442 = vld [vmem:[#allocation5 + $0xa68] sm:$0xff]
    %v443 = vld [vmem:[#allocation5 + $0xa70] sm:$0xff]
    %v444 = vld [vmem:[#allocation5 + $0xa78] sm:$0xff]
    %v445 = vld [vmem:[#allocation5 + $0xa80] sm:$0xff]
    %v446 = vld [vmem:[#allocation5 + $0xa88] sm:$0xff]
    %v447 = vld [vmem:[#allocation5 + $0xa90] sm:$0xff]
    %v448 = vld [vmem:[#allocation5 + $0xa98] sm:$0xff]
    %v449 = vld [vmem:[#allocation5 + $0xaa0] sm:$0xff]
    %v450 = vld [vmem:[#allocation5 + $0xaa8] sm:$0xff]
    %v451 = vld [vmem:[#allocation5 + $0xab0] sm:$0xff]
    %v452 = vld [vmem:[#allocation5 + $0xab8] sm:$0xff]
    %v453 = vld [vmem:[#allocation5 + $0xac0] sm:$0xff]
    %v454 = vld [vmem:[#allocation5 + $0xac8] sm:$0xff]
    %v455 = vld [vmem:[#allocation5 + $0xad0] sm:$0xff]
    %v456 = vld [vmem:[#allocation5 + $0xad8] sm:$0xff]
    %v457 = vld [vmem:[#allocation5 + $0xae0] sm:$0x33]
    %v458 = vld [vmem:[#allocation5 + $0xae8] sm:$0x33]
    %v459 = vld [vmem:[#allocation5 + $0xaf0] sm:$0x33]
    %v460 = vld [vmem:[#allocation5 + $0xaf8] sm:$0x33]
    %v461 = vld [vmem:[#allocation7] sm:$0xff]
    %v463 = vperm.slane %v461, 0
    %v464 = vperm.slane %v461, 1
    %v465 = vperm.slane %v461, 2
    %v466 = vperm.slane %v461, 3
    %v467 = vperm.slane %v461, 4
    %v468 = vperm.slane %v461, 5
    %v469 = vperm.slane %v461, 6
    %v470 = vperm.slane %v461, 7
    %v831 = vunpack.c.l.b16 %v109
    %v832 = vunpack.c.h.b16 %v109
    %v833 = vunpack.c.l.b16 %v110
    %v834 = vunpack.c.h.b16 %v110
    %v835 = vunpack.c.l.b16 %v111
    %v836 = vunpack.c.h.b16 %v111
    %v837 = vunpack.c.l.b16 %v112
    %v838 = vunpack.c.h.b16 %v112
    %v839 = vunpack.c.l.b16 %v113
    %v840 = vunpack.c.h.b16 %v113
    %v841 = vunpack.c.l.b16 %v114
    %v842 = vunpack.c.h.b16 %v114
    %v843 = vunpack.c.l.b16 %v115
    %v844 = vunpack.c.h.b16 %v115
    %v845 = vunpack.c.l.b16 %v116
    %v846 = vunpack.c.h.b16 %v116
    %v847 = vunpack.c.l.b16 %v117
    %v848 = vunpack.c.h.b16 %v117
    %v849 = vunpack.c.l.b16 %v118
    %v850 = vunpack.c.h.b16 %v118
    %v851 = vunpack.c.l.b16 %v119
    %v852 = vunpack.c.h.b16 %v119
    %v853 = vunpack.c.l.b16 %v120
    %v854 = vunpack.c.h.b16 %v120
    %v855 = vunpack.c.l.b16 %v121
    %v856 = vunpack.c.h.b16 %v121
    %v857 = vunpack.c.l.b16 %v122
    %v858 = vunpack.c.h.b16 %v122
    %v859 = vunpack.c.l.b16 %v123
    %v860 = vunpack.c.h.b16 %v123
    %v861 = vunpack.c.l.b16 %v124
    %v862 = vunpack.c.h.b16 %v124
    %v863 = vunpack.c.l.b16 %v125
    %v864 = vunpack.c.h.b16 %v125
    %v865 = vunpack.c.l.b16 %v126
    %v866 = vunpack.c.h.b16 %v126
    %v867 = vunpack.c.l.b16 %v127
    %v868 = vunpack.c.h.b16 %v127
    %v869 = vunpack.c.l.b16 %v128
    %v870 = vunpack.c.h.b16 %v128
    %v871 = vunpack.c.l.b16 %v129
    %v872 = vunpack.c.h.b16 %v129
    %v873 = vunpack.c.l.b16 %v130
    %v874 = vunpack.c.h.b16 %v130
    %v875 = vunpack.c.l.b16 %v131
    %v876 = vunpack.c.h.b16 %v131
    %v877 = vunpack.c.l.b16 %v132
    %v878 = vunpack.c.h.b16 %v132
    %v879 = vunpack.c.l.b16 %v133
    %v880 = vunpack.c.h.b16 %v133
    %v881 = vunpack.c.l.b16 %v134
    %v882 = vunpack.c.h.b16 %v134
    %v883 = vunpack.c.l.b16 %v135
    %v884 = vunpack.c.h.b16 %v135
    %v885 = vunpack.c.l.b16 %v136
    %v886 = vunpack.c.h.b16 %v136
    %v887 = vunpack.c.l.b16 %v137
    %v888 = vunpack.c.h.b16 %v137
    %v889 = vunpack.c.l.b16 %v138
    %v890 = vunpack.c.h.b16 %v138
    %v891 = vunpack.c.l.b16 %v139
    %v892 = vunpack.c.h.b16 %v139
    %v893 = vunpack.c.l.b16 %v140
    %v894 = vunpack.c.h.b16 %v140
    %v895 = vunpack.c.l.b16 %v141
    %v896 = vunpack.c.h.b16 %v141
    %v897 = vunpack.c.l.b16 %v142
    %v898 = vunpack.c.h.b16 %v142
    %v899 = vunpack.c.l.b16 %v143
    %v900 = vunpack.c.h.b16 %v143
    %v901 = vunpack.c.l.b16 %v144
    %v902 = vunpack.c.h.b16 %v144
    %v903 = vunpack.c.l.b16 %v145
    %v904 = vunpack.c.h.b16 %v145
    %v905 = vunpack.c.l.b16 %v146
    %v906 = vunpack.c.h.b16 %v146
    %v907 = vunpack.c.l.b16 %v147
    %v908 = vunpack.c.h.b16 %v147
    %v909 = vunpack.c.l.b16 %v148
    %v910 = vunpack.c.h.b16 %v148
    %v911 = vunpack.c.l.b16 %v149
    %v912 = vunpack.c.h.b16 %v149
    %v913 = vunpack.c.l.b16 %v150
    %v914 = vunpack.c.h.b16 %v150
    %v915 = vunpack.c.l.b16 %v151
    %v916 = vunpack.c.h.b16 %v151
    %v917 = vunpack.c.l.b16 %v152
    %v918 = vunpack.c.h.b16 %v152
    %v919 = vunpack.c.l.b16 %v153
    %v920 = vunpack.c.h.b16 %v153
    %v921 = vunpack.c.l.b16 %v154
    %v922 = vunpack.c.h.b16 %v154
    %v923 = vunpack.c.l.b16 %v155
    %v924 = vunpack.c.h.b16 %v155
    %v925 = vunpack.c.l.b16 %v156
    %v926 = vunpack.c.h.b16 %v156
    %v927 = vunpack.c.l.b16 %v157
    %v928 = vunpack.c.h.b16 %v157
    %v929 = vunpack.c.l.b16 %v158
    %v930 = vunpack.c.h.b16 %v158
    %v931 = vunpack.c.l.b16 %v159
    %v932 = vunpack.c.h.b16 %v159
    %v933 = vunpack.c.l.b16 %v160
    %v934 = vunpack.c.h.b16 %v160
    %v935 = vunpack.c.l.b16 %v161
    %v936 = vunpack.c.h.b16 %v161
    %v937 = vunpack.c.l.b16 %v162
    %v938 = vunpack.c.h.b16 %v162
    %v939 = vunpack.c.l.b16 %v163
    %v940 = vunpack.c.h.b16 %v163
    %v941 = vunpack.c.l.b16 %v164
    %v942 = vunpack.c.h.b16 %v164
    %v943 = vunpack.c.l.b16 %v165
    %v944 = vunpack.c.h.b16 %v165
    %v945 = vunpack.c.l.b16 %v166
    %v946 = vunpack.c.h.b16 %v166
    %v947 = vunpack.c.l.b16 %v167
    %v948 = vunpack.c.h.b16 %v167
    %v949 = vunpack.c.l.b16 %v168
    %v950 = vunpack.c.h.b16 %v168
    %v951 = vunpack.c.l.b16 %v169
    %v952 = vunpack.c.h.b16 %v169
    %v953 = vunpack.c.l.b16 %v170
    %v954 = vunpack.c.h.b16 %v170
    %v955 = vunpack.c.l.b16 %v171
    %v956 = vunpack.c.h.b16 %v171
    %v957 = vunpack.c.l.b16 %v172
    %v958 = vunpack.c.h.b16 %v172
    %v959 = vunpack.c.l.b16 %v173
    %v960 = vunpack.c.h.b16 %v173
    %v961 = vunpack.c.l.b16 %v174
    %v962 = vunpack.c.h.b16 %v174
    %v963 = vunpack.c.l.b16 %v175
    %v964 = vunpack.c.h.b16 %v175
    %v965 = vunpack.c.l.b16 %v176
    %v966 = vunpack.c.h.b16 %v176
    %v967 = vunpack.c.l.b16 %v177
    %v968 = vunpack.c.h.b16 %v177
    %v969 = vunpack.c.l.b16 %v178
    %v970 = vunpack.c.h.b16 %v178
    %v971 = vunpack.c.l.b16 %v179
    %v972 = vunpack.c.h.b16 %v179
    %v973 = vunpack.c.l.b16 %v180
    %v974 = vunpack.c.h.b16 %v180
    %v975 = vunpack.c.l.b16 %v181
    %v976 = vunpack.c.h.b16 %v181
    %v977 = vunpack.c.l.b16 %v182
    %v978 = vunpack.c.h.b16 %v182
    %v979 = vunpack.c.l.b16 %v183
    %v980 = vunpack.c.h.b16 %v183
    %v981 = vunpack.c.l.b16 %v184
    %v982 = vunpack.c.h.b16 %v184
    %v983 = vunpack.c.l.b16 %v185
    %v984 = vunpack.c.h.b16 %v185
    %v985 = vunpack.c.l.b16 %v186
    %v986 = vunpack.c.h.b16 %v186
    %v987 = vunpack.c.l.b16 %v187
    %v988 = vunpack.c.h.b16 %v187
    %v989 = vunpack.c.l.b16 %v188
    %v990 = vunpack.c.h.b16 %v188
    %v991 = vunpack.c.l.b16 %v189
    %v992 = vunpack.c.h.b16 %v189
    %v993 = vunpack.c.l.b16 %v190
    %v994 = vunpack.c.h.b16 %v190
    %v995 = vunpack.c.l.b16 %v191
    %v996 = vunpack.c.h.b16 %v191
    %v997 = vunpack.c.l.b16 %v192
    %v998 = vunpack.c.h.b16 %v192
    %v999 = vunpack.c.l.b16 %v193
    %v1000 = vunpack.c.h.b16 %v193
    %v1001 = vunpack.c.l.b16 %v194
    %v1002 = vunpack.c.h.b16 %v194
    %v1003 = vunpack.c.l.b16 %v195
    %v1004 = vunpack.c.h.b16 %v195
    %v1005 = vunpack.c.l.b16 %v196
    %v1006 = vunpack.c.h.b16 %v196
    %v1007 = vunpack.c.l.b16 %v197
    %v1008 = vunpack.c.h.b16 %v197
    %v1009 = vunpack.c.l.b16 %v198
    %v1010 = vunpack.c.h.b16 %v198
    %v1011 = vunpack.c.l.b16 %v199
    %v1012 = vunpack.c.h.b16 %v199
    %v1013 = vunpack.c.l.b16 %v200
    %v1014 = vunpack.c.h.b16 %v200
    %v1015 = vunpack.c.l.b16 %v201
    %v1016 = vunpack.c.h.b16 %v201
    %v1017 = vunpack.c.l.b16 %v202
    %v1018 = vunpack.c.h.b16 %v202
    %v1019 = vunpack.c.l.b16 %v203
    %v1020 = vunpack.c.h.b16 %v203
    %v1021 = vunpack.c.l.b16 %v204
    %v1022 = vunpack.c.h.b16 %v204
    %v1023 = vunpack.c.l.b16 %v205
    %v1024 = vunpack.c.h.b16 %v205
    %v1025 = vunpack.c.l.b16 %v206
    %v1026 = vunpack.c.h.b16 %v206
    %v1027 = vunpack.c.l.b16 %v207
    %v1028 = vunpack.c.h.b16 %v207
    %v1029 = vunpack.c.l.b16 %v208
    %v1030 = vunpack.c.h.b16 %v208
    %v1031 = vunpack.c.l.b16 %v209
    %v1032 = vunpack.c.h.b16 %v209
    %v1033 = vunpack.c.l.b16 %v210
    %v1034 = vunpack.c.h.b16 %v210
    %v1035 = vunpack.c.l.b16 %v211
    %v1036 = vunpack.c.h.b16 %v211
    %v1037 = vunpack.c.l.b16 %v212
    %v1038 = vunpack.c.h.b16 %v212
    %v1039 = vunpack.c.l.b16 %v213
    %v1040 = vunpack.c.h.b16 %v213
    %v1041 = vunpack.c.l.b16 %v214
    %v1042 = vunpack.c.h.b16 %v214
    %v1043 = vunpack.c.l.b16 %v215
    %v1044 = vunpack.c.h.b16 %v215
    %v1045 = vunpack.c.l.b16 %v216
    %v1046 = vunpack.c.h.b16 %v216
    %v1047 = vunpack.c.l.b16 %v217
    %v1048 = vunpack.c.h.b16 %v217
    %v1049 = vunpack.c.l.b16 %v218
    %v1050 = vunpack.c.h.b16 %v218
    %v1051 = vunpack.c.l.b16 %v219
    %v1052 = vunpack.c.h.b16 %v219
    %v1053 = vunpack.c.l.b16 %v220
    %v1054 = vunpack.c.h.b16 %v220
    %v1055 = vunpack.c.l.b16 %v221
    %v1056 = vunpack.c.h.b16 %v221
    %v1057 = vunpack.c.l.b16 %v222
    %v1058 = vunpack.c.h.b16 %v222
    %v1059 = vunpack.c.l.b16 %v223
    %v1060 = vunpack.c.h.b16 %v223
    %v1061 = vunpack.c.l.b16 %v224
    %v1062 = vunpack.c.h.b16 %v224
    %v1063 = vunpack.c.l.b16 %v225
    %v1064 = vunpack.c.h.b16 %v225
    %v1065 = vunpack.c.l.b16 %v226
    %v1066 = vunpack.c.h.b16 %v226
    %v1067 = vunpack.c.l.b16 %v227
    %v1068 = vunpack.c.h.b16 %v227
    %v1069 = vunpack.c.l.b16 %v228
    %v1070 = vunpack.c.h.b16 %v228
    %v1071 = vunpack.c.l.b16 %v229
    %v1072 = vunpack.c.h.b16 %v229
    %v1073 = vunpack.c.l.b16 %v230
    %v1074 = vunpack.c.h.b16 %v230
    %v1075 = vunpack.c.l.b16 %v231
    %v1076 = vunpack.c.h.b16 %v231
    %v1077 = vunpack.c.l.b16 %v232
    %v1078 = vunpack.c.h.b16 %v232
    %v1079 = vunpack.c.l.b16 %v233
    %v1080 = vunpack.c.h.b16 %v233
    %v1081 = vunpack.c.l.b16 %v234
    %v1082 = vunpack.c.h.b16 %v234
    %v1083 = vunpack.c.l.b16 %v235
    %v1084 = vunpack.c.h.b16 %v235
    %v1085 = vunpack.c.l.b16 %v236
    %v1086 = vunpack.c.h.b16 %v236
    %v1087 = vunpack.c.l.b16 %v237
    %v1088 = vunpack.c.h.b16 %v237
    %v1089 = vunpack.c.l.b16 %v238
    %v1090 = vunpack.c.h.b16 %v238
    %v1091 = vunpack.c.l.b16 %v239
    %v1092 = vunpack.c.h.b16 %v239
    %v1093 = vunpack.c.l.b16 %v240
    %v1094 = vunpack.c.h.b16 %v240
    %v1095 = vunpack.c.l.b16 %v241
    %v1096 = vunpack.c.h.b16 %v241
    %v1097 = vunpack.c.l.b16 %v242
    %v1098 = vunpack.c.h.b16 %v242
    %v1099 = vunpack.c.l.b16 %v243
    %v1100 = vunpack.c.h.b16 %v243
    %v1101 = vunpack.c.l.b16 %v244
    %v1102 = vunpack.c.h.b16 %v244
    %v1103 = vunpack.c.l.b16 %v245
    %v1104 = vunpack.c.h.b16 %v245
    %v1105 = vunpack.c.l.b16 %v246
    %v1106 = vunpack.c.h.b16 %v246
    %v1107 = vunpack.c.l.b16 %v247
    %v1108 = vunpack.c.h.b16 %v247
    %v1109 = vunpack.c.l.b16 %v248
    %v1110 = vunpack.c.h.b16 %v248
    %v1111 = vunpack.c.l.b16 %v249
    %v1112 = vunpack.c.h.b16 %v249
    %v1113 = vunpack.c.l.b16 %v250
    %v1114 = vunpack.c.h.b16 %v250
    %v1115 = vunpack.c.l.b16 %v251
    %v1116 = vunpack.c.h.b16 %v251
    %v1117 = vunpack.c.l.b16 %v252
    %v1118 = vunpack.c.h.b16 %v252
    %v1119 = vunpack.c.l.b16 %v253
    %v1120 = vunpack.c.h.b16 %v253
    %v1121 = vunpack.c.l.b16 %v254
    %v1122 = vunpack.c.h.b16 %v254
    %v1123 = vunpack.c.l.b16 %v255
    %v1124 = vunpack.c.h.b16 %v255
    %v1125 = vunpack.c.l.b16 %v256
    %v1126 = vunpack.c.h.b16 %v256
    %v1127 = vunpack.c.l.b16 %v257
    %v1128 = vunpack.c.h.b16 %v257
    %v1129 = vunpack.c.l.b16 %v258
    %v1130 = vunpack.c.h.b16 %v258
    %v1131 = vunpack.c.l.b16 %v259
    %v1132 = vunpack.c.h.b16 %v259
    %v1133 = vunpack.c.l.b16 %v260
    %v1134 = vunpack.c.h.b16 %v260
    %v1135 = vunpack.c.l.b16 %v261
    %v1136 = vunpack.c.h.b16 %v261
    %v1137 = vunpack.c.l.b16 %v262
    %v1138 = vunpack.c.h.b16 %v262
    %v1139 = vunpack.c.l.b16 %v263
    %v1140 = vunpack.c.h.b16 %v263
    %v1141 = vunpack.c.l.b16 %v264
    %v1142 = vunpack.c.h.b16 %v264
    %v1143 = vunpack.c.l.b16 %v265
    %v1144 = vunpack.c.h.b16 %v265
    %v1145 = vunpack.c.l.b16 %v266
    %v1146 = vunpack.c.h.b16 %v266
    %v1147 = vunpack.c.l.b16 %v267
    %v1148 = vunpack.c.h.b16 %v267
    %v1149 = vunpack.c.l.b16 %v268
    %v1150 = vunpack.c.h.b16 %v268
    %v1151 = vunpack.c.l.b16 %v269
    %v1152 = vunpack.c.h.b16 %v269
    %v1153 = vunpack.c.l.b16 %v270
    %v1154 = vunpack.c.h.b16 %v270
    %v1155 = vunpack.c.l.b16 %v271
    %v1156 = vunpack.c.h.b16 %v271
    %v1157 = vunpack.c.l.b16 %v272
    %v1158 = vunpack.c.h.b16 %v272
    %v1159 = vunpack.c.l.b16 %v273
    %v1160 = vunpack.c.h.b16 %v273
    %v1161 = vunpack.c.l.b16 %v274
    %v1162 = vunpack.c.h.b16 %v274
    %v1163 = vunpack.c.l.b16 %v275
    %v1164 = vunpack.c.h.b16 %v275
    %v1165 = vunpack.c.l.b16 %v276
    %v1166 = vunpack.c.h.b16 %v276
    %v1167 = vunpack.c.l.b16 %v277
    %v1168 = vunpack.c.h.b16 %v277
    %v1169 = vunpack.c.l.b16 %v278
    %v1170 = vunpack.c.h.b16 %v278
    %v1171 = vunpack.c.l.b16 %v279
    %v1172 = vunpack.c.h.b16 %v279
    %v1173 = vunpack.c.l.b16 %v280
    %v1174 = vunpack.c.h.b16 %v280
    %v1175 = vunpack.c.l.b16 %v281
    %v1176 = vunpack.c.h.b16 %v281
    %v1177 = vunpack.c.l.b16 %v282
    %v1178 = vunpack.c.h.b16 %v282
    %v1179 = vunpack.c.l.b16 %v283
    %v1180 = vunpack.c.h.b16 %v283
    %v1181 = vunpack.c.l.b16 %v284
    %v1182 = vunpack.c.h.b16 %v284
    %v1183 = vunpack.c.l.b16 %v285
    %v1184 = vunpack.c.h.b16 %v285
    %v1185 = vunpack.c.l.b16 %v286
    %v1186 = vunpack.c.h.b16 %v286
    %v1187 = vunpack.c.l.b16 %v287
    %v1188 = vunpack.c.h.b16 %v287
    %v1189 = vunpack.c.l.b16 %v288
    %v1190 = vunpack.c.h.b16 %v288
    %v1191 = vunpack.c.l.b16 %v289
    %v1192 = vunpack.c.h.b16 %v289
    %v1193 = vunpack.c.l.b16 %v290
    %v1194 = vunpack.c.h.b16 %v290
    %v1195 = vunpack.c.l.b16 %v291
    %v1196 = vunpack.c.h.b16 %v291
    %v1197 = vunpack.c.l.b16 %v292
    %v1198 = vunpack.c.h.b16 %v292
    %v1199 = vunpack.c.l.b16 %v293
    %v1200 = vunpack.c.h.b16 %v293
    %v1201 = vunpack.c.l.b16 %v294
    %v1202 = vunpack.c.h.b16 %v294
    %v1203 = vunpack.c.l.b16 %v295
    %v1204 = vunpack.c.h.b16 %v295
    %v1205 = vunpack.c.l.b16 %v296
    %v1206 = vunpack.c.h.b16 %v296
    %v1207 = vunpack.c.l.b16 %v297
    %v1208 = vunpack.c.h.b16 %v297
    %v1209 = vunpack.c.l.b16 %v298
    %v1210 = vunpack.c.h.b16 %v298
    %v1211 = vunpack.c.l.b16 %v299
    %v1212 = vunpack.c.h.b16 %v299
    %v1213 = vunpack.c.l.b16 %v300
    %v1214 = vunpack.c.h.b16 %v300
    %v1215 = vunpack.c.l.b16 %v301
    %v1216 = vunpack.c.h.b16 %v301
    %v1217 = vunpack.c.l.b16 %v302
    %v1218 = vunpack.c.h.b16 %v302
    %v1219 = vunpack.c.l.b16 %v303
    %v1220 = vunpack.c.h.b16 %v303
    %v1221 = vunpack.c.l.b16 %v304
    %v1222 = vunpack.c.h.b16 %v304
    %v1223 = vunpack.c.l.b16 %v305
    %v1224 = vunpack.c.h.b16 %v305
    %v1225 = vunpack.c.l.b16 %v306
    %v1226 = vunpack.c.h.b16 %v306
    %v1227 = vunpack.c.l.b16 %v307
    %v1228 = vunpack.c.h.b16 %v307
    %v1229 = vunpack.c.l.b16 %v308
    %v1230 = vunpack.c.h.b16 %v308
    %v1231 = vunpack.c.l.b16 %v309
    %v1232 = vunpack.c.h.b16 %v309
    %v1233 = vunpack.c.l.b16 %v310
    %v1234 = vunpack.c.h.b16 %v310
    %v1235 = vunpack.c.l.b16 %v311
    %v1236 = vunpack.c.h.b16 %v311
    %v1237 = vunpack.c.l.b16 %v312
    %v1238 = vunpack.c.h.b16 %v312
    %v1239 = vunpack.c.l.b16 %v313
    %v1240 = vunpack.c.h.b16 %v313
    %v1241 = vunpack.c.l.b16 %v314
    %v1242 = vunpack.c.h.b16 %v314
    %v1243 = vunpack.c.l.b16 %v315
    %v1244 = vunpack.c.h.b16 %v315
    %v1245 = vunpack.c.l.b16 %v316
    %v1246 = vunpack.c.h.b16 %v316
    %v1247 = vunpack.c.l.b16 %v317
    %v1248 = vunpack.c.h.b16 %v317
    %v1249 = vunpack.c.l.b16 %v318
    %v1250 = vunpack.c.h.b16 %v318
    %v1251 = vunpack.c.l.b16 %v319
    %v1252 = vunpack.c.h.b16 %v319
    %v1253 = vunpack.c.l.b16 %v320
    %v1254 = vunpack.c.h.b16 %v320
    %v1255 = vunpack.c.l.b16 %v321
    %v1256 = vunpack.c.h.b16 %v321
    %v1257 = vunpack.c.l.b16 %v322
    %v1258 = vunpack.c.h.b16 %v322
    %v1259 = vunpack.c.l.b16 %v323
    %v1260 = vunpack.c.h.b16 %v323
    %v1261 = vunpack.c.l.b16 %v324
    %v1262 = vunpack.c.h.b16 %v324
    %v1263 = vunpack.c.l.b16 %v325
    %v1264 = vunpack.c.h.b16 %v325
    %v1265 = vunpack.c.l.b16 %v326
    %v1266 = vunpack.c.h.b16 %v326
    %v1267 = vunpack.c.l.b16 %v327
    %v1268 = vunpack.c.h.b16 %v327
    %v1269 = vunpack.c.l.b16 %v328
    %v1270 = vunpack.c.h.b16 %v328
    %v1271 = vunpack.c.l.b16 %v329
    %v1272 = vunpack.c.h.b16 %v329
    %v1273 = vunpack.c.l.b16 %v330
    %v1274 = vunpack.c.h.b16 %v330
    %v1275 = vunpack.c.l.b16 %v331
    %v1276 = vunpack.c.h.b16 %v331
    %v1277 = vunpack.c.l.b16 %v332
    %v1278 = vunpack.c.h.b16 %v332
    %v1279 = vunpack.c.l.b16 %v333
    %v1280 = vunpack.c.h.b16 %v333
    %v1281 = vunpack.c.l.b16 %v334
    %v1282 = vunpack.c.h.b16 %v334
    %v1283 = vunpack.c.l.b16 %v335
    %v1284 = vunpack.c.h.b16 %v335
    %v1285 = vunpack.c.l.b16 %v336
    %v1286 = vunpack.c.h.b16 %v336
    %v1287 = vunpack.c.l.b16 %v337
    %v1288 = vunpack.c.h.b16 %v337
    %v1289 = vunpack.c.l.b16 %v338
    %v1290 = vunpack.c.h.b16 %v338
    %v1291 = vunpack.c.l.b16 %v339
    %v1292 = vunpack.c.h.b16 %v339
    %v1293 = vunpack.c.l.b16 %v340
    %v1294 = vunpack.c.h.b16 %v340
    %v1295 = vunpack.c.l.b16 %v341
    %v1296 = vunpack.c.h.b16 %v341
    %v1297 = vunpack.c.l.b16 %v342
    %v1298 = vunpack.c.h.b16 %v342
    %v1299 = vunpack.c.l.b16 %v343
    %v1300 = vunpack.c.h.b16 %v343
    %v1301 = vunpack.c.l.b16 %v344
    %v1302 = vunpack.c.h.b16 %v344
    %v1303 = vunpack.c.l.b16 %v345
    %v1304 = vunpack.c.h.b16 %v345
    %v1305 = vunpack.c.l.b16 %v346
    %v1306 = vunpack.c.h.b16 %v346
    %v1307 = vunpack.c.l.b16 %v347
    %v1308 = vunpack.c.h.b16 %v347
    %v1309 = vunpack.c.l.b16 %v348
    %v1310 = vunpack.c.h.b16 %v348
    %v1311 = vunpack.c.l.b16 %v349
    %v1312 = vunpack.c.h.b16 %v349
    %v1313 = vunpack.c.l.b16 %v350
    %v1314 = vunpack.c.h.b16 %v350
    %v1315 = vunpack.c.l.b16 %v351
    %v1316 = vunpack.c.h.b16 %v351
    %v1317 = vunpack.c.l.b16 %v352
    %v1318 = vunpack.c.h.b16 %v352
    %v1319 = vunpack.c.l.b16 %v353
    %v1320 = vunpack.c.h.b16 %v353
    %v1321 = vunpack.c.l.b16 %v354
    %v1322 = vunpack.c.h.b16 %v354
    %v1323 = vunpack.c.l.b16 %v355
    %v1324 = vunpack.c.h.b16 %v355
    %v1325 = vunpack.c.l.b16 %v356
    %v1326 = vunpack.c.h.b16 %v356
    %v1327 = vunpack.c.l.b16 %v357
    %v1328 = vunpack.c.h.b16 %v357
    %v1329 = vunpack.c.l.b16 %v358
    %v1330 = vunpack.c.h.b16 %v358
    %v1331 = vunpack.c.l.b16 %v359
    %v1332 = vunpack.c.h.b16 %v359
    %v1333 = vunpack.c.l.b16 %v360
    %v1334 = vunpack.c.h.b16 %v360
    %v1335 = vunpack.c.l.b16 %v361
    %v1336 = vunpack.c.h.b16 %v361
    %v1337 = vunpack.c.l.b16 %v362
    %v1338 = vunpack.c.h.b16 %v362
    %v1339 = vunpack.c.l.b16 %v363
    %v1340 = vunpack.c.h.b16 %v363
    %v1341 = vunpack.c.l.b16 %v364
    %v1342 = vunpack.c.h.b16 %v364
    %v1343 = vunpack.c.l.b16 %v365
    %v1344 = vunpack.c.h.b16 %v365
    %v1345 = vunpack.c.l.b16 %v366
    %v1346 = vunpack.c.h.b16 %v366
    %v1347 = vunpack.c.l.b16 %v367
    %v1348 = vunpack.c.h.b16 %v367
    %v1349 = vunpack.c.l.b16 %v368
    %v1350 = vunpack.c.h.b16 %v368
    %v1351 = vunpack.c.l.b16 %v369
    %v1352 = vunpack.c.h.b16 %v369
    %v1353 = vunpack.c.l.b16 %v370
    %v1354 = vunpack.c.h.b16 %v370
    %v1355 = vunpack.c.l.b16 %v371
    %v1356 = vunpack.c.h.b16 %v371
    %v1357 = vunpack.c.l.b16 %v372
    %v1358 = vunpack.c.h.b16 %v372
    %v1359 = vunpack.c.l.b16 %v373
    %v1360 = vunpack.c.h.b16 %v373
    %v1361 = vunpack.c.l.b16 %v374
    %v1362 = vunpack.c.h.b16 %v374
    %v1363 = vunpack.c.l.b16 %v375
    %v1364 = vunpack.c.h.b16 %v375
    %v1365 = vunpack.c.l.b16 %v376
    %v1366 = vunpack.c.h.b16 %v376
    %v1367 = vunpack.c.l.b16 %v377
    %v1368 = vunpack.c.h.b16 %v377
    %v1369 = vunpack.c.l.b16 %v378
    %v1370 = vunpack.c.h.b16 %v378
    %v1371 = vunpack.c.l.b16 %v379
    %v1372 = vunpack.c.h.b16 %v379
    %v1373 = vunpack.c.l.b16 %v380
    %v1374 = vunpack.c.h.b16 %v380
    %v1375 = vunpack.c.l.b16 %v381
    %v1376 = vunpack.c.h.b16 %v381
    %v1377 = vunpack.c.l.b16 %v382
    %v1378 = vunpack.c.h.b16 %v382
    %v1379 = vunpack.c.l.b16 %v383
    %v1380 = vunpack.c.h.b16 %v383
    %v1381 = vunpack.c.l.b16 %v384
    %v1382 = vunpack.c.h.b16 %v384
    %v1383 = vunpack.c.l.b16 %v385
    %v1384 = vunpack.c.h.b16 %v385
    %v1385 = vunpack.c.l.b16 %v386
    %v1386 = vunpack.c.h.b16 %v386
    %v1387 = vunpack.c.l.b16 %v387
    %v1388 = vunpack.c.h.b16 %v387
    %v1389 = vunpack.c.l.b16 %v388
    %v1390 = vunpack.c.h.b16 %v388
    %v1391 = vunpack.c.l.b16 %v389
    %v1392 = vunpack.c.h.b16 %v389
    %v1393 = vunpack.c.l.b16 %v390
    %v1394 = vunpack.c.h.b16 %v390
    %v1395 = vunpack.c.l.b16 %v391
    %v1396 = vunpack.c.h.b16 %v391
    %v1397 = vunpack.c.l.b16 %v392
    %v1398 = vunpack.c.h.b16 %v392
    %v1399 = vunpack.c.l.b16 %v393
    %v1400 = vunpack.c.h.b16 %v393
    %v1401 = vunpack.c.l.b16 %v394
    %v1402 = vunpack.c.h.b16 %v394
    %v1403 = vunpack.c.l.b16 %v395
    %v1404 = vunpack.c.h.b16 %v395
    %v1405 = vunpack.c.l.b16 %v396
    %v1406 = vunpack.c.h.b16 %v396
    %v1407 = vunpack.c.l.b16 %v397
    %v1408 = vunpack.c.h.b16 %v397
    %v1409 = vunpack.c.l.b16 %v398
    %v1410 = vunpack.c.h.b16 %v398
    %v1411 = vunpack.c.l.b16 %v399
    %v1412 = vunpack.c.h.b16 %v399
    %v1413 = vunpack.c.l.b16 %v400
    %v1414 = vunpack.c.h.b16 %v400
    %v1415 = vunpack.c.l.b16 %v401
    %v1416 = vunpack.c.h.b16 %v401
    %v1417 = vunpack.c.l.b16 %v402
    %v1418 = vunpack.c.h.b16 %v402
    %v1419 = vunpack.c.l.b16 %v403
    %v1420 = vunpack.c.h.b16 %v403
    %v1421 = vunpack.c.l.b16 %v404
    %v1422 = vunpack.c.h.b16 %v404
    %v1423 = vunpack.c.l.b16 %v405
    %v1424 = vunpack.c.h.b16 %v405
    %v1425 = vunpack.c.l.b16 %v406
    %v1426 = vunpack.c.h.b16 %v406
    %v1427 = vunpack.c.l.b16 %v407
    %v1428 = vunpack.c.h.b16 %v407
    %v1429 = vunpack.c.l.b16 %v408
    %v1430 = vunpack.c.h.b16 %v408
    %v1431 = vunpack.c.l.b16 %v409
    %v1432 = vunpack.c.h.b16 %v409
    %v1433 = vunpack.c.l.b16 %v410
    %v1434 = vunpack.c.h.b16 %v410
    %v1435 = vunpack.c.l.b16 %v411
    %v1436 = vunpack.c.h.b16 %v411
    %v1437 = vunpack.c.l.b16 %v412
    %v1438 = vunpack.c.h.b16 %v412
    %v1439 = vunpack.c.l.b16 %v413
    %v1440 = vunpack.c.h.b16 %v413
    %v1441 = vunpack.c.l.b16 %v414
    %v1442 = vunpack.c.h.b16 %v414
    %v1443 = vunpack.c.l.b16 %v415
    %v1444 = vunpack.c.h.b16 %v415
    %v1445 = vunpack.c.l.b16 %v416
    %v1446 = vunpack.c.h.b16 %v416
    %v1447 = vunpack.c.l.b16 %v417
    %v1448 = vunpack.c.h.b16 %v417
    %v1449 = vunpack.c.l.b16 %v418
    %v1450 = vunpack.c.h.b16 %v418
    %v1451 = vunpack.c.l.b16 %v419
    %v1452 = vunpack.c.h.b16 %v419
    %v1453 = vunpack.c.l.b16 %v420
    %v1454 = vunpack.c.h.b16 %v420
    %v1455 = vunpack.c.l.b16 %v421
    %v1456 = vunpack.c.h.b16 %v421
    %v1457 = vunpack.c.l.b16 %v422
    %v1458 = vunpack.c.h.b16 %v422
    %v1459 = vunpack.c.l.b16 %v423
    %v1460 = vunpack.c.h.b16 %v423
    %v1461 = vunpack.c.l.b16 %v424
    %v1462 = vunpack.c.h.b16 %v424
    %v1463 = vunpack.c.l.b16 %v425
    %v1464 = vunpack.c.h.b16 %v425
    %v1465 = vunpack.c.l.b16 %v426
    %v1466 = vunpack.c.h.b16 %v426
    %v1467 = vunpack.c.l.b16 %v427
    %v1468 = vunpack.c.h.b16 %v427
    %v1469 = vunpack.c.l.b16 %v428
    %v1470 = vunpack.c.h.b16 %v428
    %v1471 = vunpack.c.l.b16 %v429
    %v1472 = vunpack.c.h.b16 %v429
    %v1473 = vunpack.c.l.b16 %v430
    %v1474 = vunpack.c.h.b16 %v430
    %v1475 = vunpack.c.l.b16 %v431
    %v1476 = vunpack.c.h.b16 %v431
    %v1477 = vunpack.c.l.b16 %v432
    %v1478 = vunpack.c.h.b16 %v432
    %v1479 = vunpack.c.l.b16 %v433
    %v1480 = vunpack.c.h.b16 %v433
    %v1481 = vunpack.c.l.b16 %v434
    %v1482 = vunpack.c.h.b16 %v434
    %v1483 = vunpack.c.l.b16 %v435
    %v1484 = vunpack.c.h.b16 %v435
    %v1485 = vunpack.c.l.b16 %v436
    %v1486 = vunpack.c.h.b16 %v436
    %v1487 = vunpack.c.l.b16 %v437
    %v1488 = vunpack.c.h.b16 %v437
    %v1489 = vunpack.c.l.b16 %v438
    %v1490 = vunpack.c.h.b16 %v438
    %v1491 = vunpack.c.l.b16 %v439
    %v1492 = vunpack.c.h.b16 %v439
    %v1493 = vunpack.c.l.b16 %v440
    %v1494 = vunpack.c.h.b16 %v440
    %v1495 = vunpack.c.l.b16 %v441
    %v1496 = vunpack.c.h.b16 %v441
    %v1497 = vunpack.c.l.b16 %v442
    %v1498 = vunpack.c.h.b16 %v442
    %v1499 = vunpack.c.l.b16 %v443
    %v1500 = vunpack.c.h.b16 %v443
    %v1501 = vunpack.c.l.b16 %v444
    %v1502 = vunpack.c.h.b16 %v444
    %v1503 = vunpack.c.l.b16 %v445
    %v1504 = vunpack.c.h.b16 %v445
    %v1505 = vunpack.c.l.b16 %v446
    %v1506 = vunpack.c.h.b16 %v446
    %v1507 = vunpack.c.l.b16 %v447
    %v1508 = vunpack.c.h.b16 %v447
    %v1509 = vunpack.c.l.b16 %v448
    %v1510 = vunpack.c.h.b16 %v448
    %v1511 = vunpack.c.l.b16 %v449
    %v1512 = vunpack.c.h.b16 %v449
    %v1513 = vunpack.c.l.b16 %v450
    %v1514 = vunpack.c.h.b16 %v450
    %v1515 = vunpack.c.l.b16 %v451
    %v1516 = vunpack.c.h.b16 %v451
    %v1517 = vunpack.c.l.b16 %v452
    %v1518 = vunpack.c.h.b16 %v452
    %v1519 = vunpack.c.l.b16 %v453
    %v1520 = vunpack.c.h.b16 %v453
    %v1521 = vunpack.c.l.b16 %v454
    %v1522 = vunpack.c.h.b16 %v454
    %v1523 = vunpack.c.l.b16 %v455
    %v1524 = vunpack.c.h.b16 %v455
    %v1525 = vunpack.c.l.b16 %v456
    %v1526 = vunpack.c.h.b16 %v456
    %v1527 = vunpack.c.l.b16 %v457
    %v1528 = vunpack.c.h.b16 %v457
    %v1529 = vunpack.c.l.b16 %v458
    %v1530 = vunpack.c.h.b16 %v458
    %v1531 = vunpack.c.l.b16 %v459
    %v1532 = vunpack.c.h.b16 %v459
    %v1533 = vunpack.c.l.b16 %v460
    %v1534 = vunpack.c.h.b16 %v460
    %v1535 = vpack.c.b16 %v839, %v831
    %v1536 = vpack.c.b16 %v840, %v832
    %v1537 = vpack.c.b16 %v841, %v833
    %v1538 = vpack.c.b16 %v842, %v834
    %v1539 = vpack.c.b16 %v843, %v835
    %v1540 = vpack.c.b16 %v844, %v836
    %v1541 = vpack.c.b16 %v845, %v837
    %v1542 = vpack.c.b16 %v846, %v838
    %v1543 = vpack.c.b16 %v855, %v847
    %v1544 = vpack.c.b16 %v856, %v848
    %v1545 = vpack.c.b16 %v857, %v849
    %v1546 = vpack.c.b16 %v858, %v850
    %v1547 = vpack.c.b16 %v859, %v851
    %v1548 = vpack.c.b16 %v860, %v852
    %v1549 = vpack.c.b16 %v861, %v853
    %v1550 = vpack.c.b16 %v862, %v854
    %v1551 = vpack.c.b16 %v871, %v863
    %v1552 = vpack.c.b16 %v872, %v864
    %v1553 = vpack.c.b16 %v873, %v865
    %v1554 = vpack.c.b16 %v874, %v866
    %v1555 = vpack.c.b16 %v875, %v867
    %v1556 = vpack.c.b16 %v876, %v868
    %v1557 = vpack.c.b16 %v877, %v869
    %v1558 = vpack.c.b16 %v878, %v870
    %v1559 = vpack.c.b16 %v887, %v879
    %v1560 = vpack.c.b16 %v888, %v880
    %v1561 = vpack.c.b16 %v889, %v881
    %v1562 = vpack.c.b16 %v890, %v882
    %v1563 = vpack.c.b16 %v891, %v883
    %v1564 = vpack.c.b16 %v892, %v884
    %v1565 = vpack.c.b16 %v893, %v885
    %v1566 = vpack.c.b16 %v894, %v886
    %v1567 = vpack.c.b16 %v903, %v895
    %v1568 = vpack.c.b16 %v904, %v896
    %v1569 = vpack.c.b16 %v905, %v897
    %v1570 = vpack.c.b16 %v906, %v898
    %v1571 = vpack.c.b16 %v907, %v899
    %v1572 = vpack.c.b16 %v908, %v900
    %v1573 = vpack.c.b16 %v909, %v901
    %v1574 = vpack.c.b16 %v910, %v902
    %v1575 = vpack.c.b16 %v919, %v911
    %v1576 = vpack.c.b16 %v920, %v912
    %v1577 = vpack.c.b16 %v921, %v913
    %v1578 = vpack.c.b16 %v922, %v914
    %v1579 = vpack.c.b16 %v923, %v915
    %v1580 = vpack.c.b16 %v924, %v916
    %v1581 = vpack.c.b16 %v925, %v917
    %v1582 = vpack.c.b16 %v926, %v918
    %v1583 = vpack.c.b16 %v935, %v927
    %v1584 = vpack.c.b16 %v936, %v928
    %v1585 = vpack.c.b16 %v937, %v929
    %v1586 = vpack.c.b16 %v938, %v930
    %v1587 = vpack.c.b16 %v939, %v931
    %v1588 = vpack.c.b16 %v940, %v932
    %v1589 = vpack.c.b16 %v941, %v933
    %v1590 = vpack.c.b16 %v942, %v934
    %v1591 = vpack.c.b16 %v951, %v943
    %v1592 = vpack.c.b16 %v952, %v944
    %v1593 = vpack.c.b16 %v953, %v945
    %v1594 = vpack.c.b16 %v954, %v946
    %v1595 = vpack.c.b16 %v955, %v947
    %v1596 = vpack.c.b16 %v956, %v948
    %v1597 = vpack.c.b16 %v957, %v949
    %v1598 = vpack.c.b16 %v958, %v950
    %v1599 = vpack.c.b16 %v967, %v959
    %v1600 = vpack.c.b16 %v968, %v960
    %v1601 = vpack.c.b16 %v969, %v961
    %v1602 = vpack.c.b16 %v970, %v962
    %v1603 = vpack.c.b16 %v971, %v963
    %v1604 = vpack.c.b16 %v972, %v964
    %v1605 = vpack.c.b16 %v973, %v965
    %v1606 = vpack.c.b16 %v974, %v966
    %v1607 = vpack.c.b16 %v983, %v975
    %v1608 = vpack.c.b16 %v984, %v976
    %v1609 = vpack.c.b16 %v985, %v977
    %v1610 = vpack.c.b16 %v986, %v978
    %v1611 = vpack.c.b16 %v987, %v979
    %v1612 = vpack.c.b16 %v988, %v980
    %v1613 = vpack.c.b16 %v989, %v981
    %v1614 = vpack.c.b16 %v990, %v982
    %v1615 = vpack.c.b16 %v999, %v991
    %v1616 = vpack.c.b16 %v1000, %v992
    %v1617 = vpack.c.b16 %v1001, %v993
    %v1618 = vpack.c.b16 %v1002, %v994
    %v1619 = vpack.c.b16 %v1003, %v995
    %v1620 = vpack.c.b16 %v1004, %v996
    %v1621 = vpack.c.b16 %v1005, %v997
    %v1622 = vpack.c.b16 %v1006, %v998
    %v1623 = vpack.c.b16 %v1015, %v1007
    %v1624 = vpack.c.b16 %v1016, %v1008
    %v1625 = vpack.c.b16 %v1017, %v1009
    %v1626 = vpack.c.b16 %v1018, %v1010
    %v1627 = vpack.c.b16 %v1019, %v1011
    %v1628 = vpack.c.b16 %v1020, %v1012
    %v1629 = vpack.c.b16 %v1021, %v1013
    %v1630 = vpack.c.b16 %v1022, %v1014
    %v1631 = vpack.c.b16 %v1031, %v1023
    %v1632 = vpack.c.b16 %v1032, %v1024
    %v1633 = vpack.c.b16 %v1033, %v1025
    %v1634 = vpack.c.b16 %v1034, %v1026
    %v1635 = vpack.c.b16 %v1035, %v1027
    %v1636 = vpack.c.b16 %v1036, %v1028
    %v1637 = vpack.c.b16 %v1037, %v1029
    %v1638 = vpack.c.b16 %v1038, %v1030
    %v1639 = vpack.c.b16 %v1047, %v1039
    %v1640 = vpack.c.b16 %v1048, %v1040
    %v1641 = vpack.c.b16 %v1049, %v1041
    %v1642 = vpack.c.b16 %v1050, %v1042
    %v1643 = vpack.c.b16 %v1051, %v1043
    %v1644 = vpack.c.b16 %v1052, %v1044
    %v1645 = vpack.c.b16 %v1053, %v1045
    %v1646 = vpack.c.b16 %v1054, %v1046
    %v1647 = vpack.c.b16 %v1063, %v1055
    %v1648 = vpack.c.b16 %v1064, %v1056
    %v1649 = vpack.c.b16 %v1065, %v1057
    %v1650 = vpack.c.b16 %v1066, %v1058
    %v1651 = vpack.c.b16 %v1067, %v1059
    %v1652 = vpack.c.b16 %v1068, %v1060
    %v1653 = vpack.c.b16 %v1069, %v1061
    %v1654 = vpack.c.b16 %v1070, %v1062
    %v1655 = vpack.c.b16 %v1079, %v1071
    %v1656 = vpack.c.b16 %v1080, %v1072
    %v1657 = vpack.c.b16 %v1081, %v1073
    %v1658 = vpack.c.b16 %v1082, %v1074
    %v1659 = vpack.c.b16 %v1083, %v1075
    %v1660 = vpack.c.b16 %v1084, %v1076
    %v1661 = vpack.c.b16 %v1085, %v1077
    %v1662 = vpack.c.b16 %v1086, %v1078
    %v1663 = vpack.c.b16 %v1095, %v1087
    %v1664 = vpack.c.b16 %v1096, %v1088
    %v1665 = vpack.c.b16 %v1097, %v1089
    %v1666 = vpack.c.b16 %v1098, %v1090
    %v1667 = vpack.c.b16 %v1099, %v1091
    %v1668 = vpack.c.b16 %v1100, %v1092
    %v1669 = vpack.c.b16 %v1101, %v1093
    %v1670 = vpack.c.b16 %v1102, %v1094
    %v1671 = vpack.c.b16 %v1111, %v1103
    %v1672 = vpack.c.b16 %v1112, %v1104
    %v1673 = vpack.c.b16 %v1113, %v1105
    %v1674 = vpack.c.b16 %v1114, %v1106
    %v1675 = vpack.c.b16 %v1115, %v1107
    %v1676 = vpack.c.b16 %v1116, %v1108
    %v1677 = vpack.c.b16 %v1117, %v1109
    %v1678 = vpack.c.b16 %v1118, %v1110
    %v1679 = vpack.c.b16 %v1127, %v1119
    %v1680 = vpack.c.b16 %v1128, %v1120
    %v1681 = vpack.c.b16 %v1129, %v1121
    %v1682 = vpack.c.b16 %v1130, %v1122
    %v1683 = vpack.c.b16 %v1131, %v1123
    %v1684 = vpack.c.b16 %v1132, %v1124
    %v1685 = vpack.c.b16 %v1133, %v1125
    %v1686 = vpack.c.b16 %v1134, %v1126
    %v1687 = vpack.c.b16 %v1143, %v1135
    %v1688 = vpack.c.b16 %v1144, %v1136
    %v1689 = vpack.c.b16 %v1145, %v1137
    %v1690 = vpack.c.b16 %v1146, %v1138
    %v1691 = vpack.c.b16 %v1147, %v1139
    %v1692 = vpack.c.b16 %v1148, %v1140
    %v1693 = vpack.c.b16 %v1149, %v1141
    %v1694 = vpack.c.b16 %v1150, %v1142
    %v1695 = vpack.c.b16 %v1159, %v1151
    %v1696 = vpack.c.b16 %v1160, %v1152
    %v1697 = vpack.c.b16 %v1161, %v1153
    %v1698 = vpack.c.b16 %v1162, %v1154
    %v1699 = vpack.c.b16 %v1163, %v1155
    %v1700 = vpack.c.b16 %v1164, %v1156
    %v1701 = vpack.c.b16 %v1165, %v1157
    %v1702 = vpack.c.b16 %v1166, %v1158
    %v1703 = vpack.c.b16 %v1175, %v1167
    %v1704 = vpack.c.b16 %v1176, %v1168
    %v1705 = vpack.c.b16 %v1177, %v1169
    %v1706 = vpack.c.b16 %v1178, %v1170
    %v1707 = vpack.c.b16 %v1179, %v1171
    %v1708 = vpack.c.b16 %v1180, %v1172
    %v1709 = vpack.c.b16 %v1181, %v1173
    %v1710 = vpack.c.b16 %v1182, %v1174
    %v1711 = vpack.c.b16 %v1191, %v1183
    %v1712 = vpack.c.b16 %v1192, %v1184
    %v1713 = vpack.c.b16 %v1193, %v1185
    %v1714 = vpack.c.b16 %v1194, %v1186
    %v1715 = vpack.c.b16 %v1195, %v1187
    %v1716 = vpack.c.b16 %v1196, %v1188
    %v1717 = vpack.c.b16 %v1197, %v1189
    %v1718 = vpack.c.b16 %v1198, %v1190
    %v1719 = vpack.c.b16 %v1207, %v1199
    %v1720 = vpack.c.b16 %v1208, %v1200
    %v1721 = vpack.c.b16 %v1209, %v1201
    %v1722 = vpack.c.b16 %v1210, %v1202
    %v1723 = vpack.c.b16 %v1211, %v1203
    %v1724 = vpack.c.b16 %v1212, %v1204
    %v1725 = vpack.c.b16 %v1213, %v1205
    %v1726 = vpack.c.b16 %v1214, %v1206
    %v1727 = vpack.c.b16 %v1223, %v1215
    %v1728 = vpack.c.b16 %v1224, %v1216
    %v1729 = vpack.c.b16 %v1225, %v1217
    %v1730 = vpack.c.b16 %v1226, %v1218
    %v1731 = vpack.c.b16 %v1227, %v1219
    %v1732 = vpack.c.b16 %v1228, %v1220
    %v1733 = vpack.c.b16 %v1229, %v1221
    %v1734 = vpack.c.b16 %v1230, %v1222
    %v1735 = vpack.c.b16 %v1239, %v1231
    %v1736 = vpack.c.b16 %v1240, %v1232
    %v1737 = vpack.c.b16 %v1241, %v1233
    %v1738 = vpack.c.b16 %v1242, %v1234
    %v1739 = vpack.c.b16 %v1243, %v1235
    %v1740 = vpack.c.b16 %v1244, %v1236
    %v1741 = vpack.c.b16 %v1245, %v1237
    %v1742 = vpack.c.b16 %v1246, %v1238
    %v1743 = vpack.c.b16 %v1255, %v1247
    %v1744 = vpack.c.b16 %v1256, %v1248
    %v1745 = vpack.c.b16 %v1257, %v1249
    %v1746 = vpack.c.b16 %v1258, %v1250
    %v1747 = vpack.c.b16 %v1259, %v1251
    %v1748 = vpack.c.b16 %v1260, %v1252
    %v1749 = vpack.c.b16 %v1261, %v1253
    %v1750 = vpack.c.b16 %v1262, %v1254
    %v1751 = vpack.c.b16 %v1271, %v1263
    %v1752 = vpack.c.b16 %v1272, %v1264
    %v1753 = vpack.c.b16 %v1273, %v1265
    %v1754 = vpack.c.b16 %v1274, %v1266
    %v1755 = vpack.c.b16 %v1275, %v1267
    %v1756 = vpack.c.b16 %v1276, %v1268
    %v1757 = vpack.c.b16 %v1277, %v1269
    %v1758 = vpack.c.b16 %v1278, %v1270
    %v1759 = vpack.c.b16 %v1287, %v1279
    %v1760 = vpack.c.b16 %v1288, %v1280
    %v1761 = vpack.c.b16 %v1289, %v1281
    %v1762 = vpack.c.b16 %v1290, %v1282
    %v1763 = vpack.c.b16 %v1291, %v1283
    %v1764 = vpack.c.b16 %v1292, %v1284
    %v1765 = vpack.c.b16 %v1293, %v1285
    %v1766 = vpack.c.b16 %v1294, %v1286
    %v1767 = vpack.c.b16 %v1303, %v1295
    %v1768 = vpack.c.b16 %v1304, %v1296
    %v1769 = vpack.c.b16 %v1305, %v1297
    %v1770 = vpack.c.b16 %v1306, %v1298
    %v1771 = vpack.c.b16 %v1307, %v1299
    %v1772 = vpack.c.b16 %v1308, %v1300
    %v1773 = vpack.c.b16 %v1309, %v1301
    %v1774 = vpack.c.b16 %v1310, %v1302
    %v1775 = vpack.c.b16 %v1319, %v1311
    %v1776 = vpack.c.b16 %v1320, %v1312
    %v1777 = vpack.c.b16 %v1321, %v1313
    %v1778 = vpack.c.b16 %v1322, %v1314
    %v1779 = vpack.c.b16 %v1323, %v1315
    %v1780 = vpack.c.b16 %v1324, %v1316
    %v1781 = vpack.c.b16 %v1325, %v1317
    %v1782 = vpack.c.b16 %v1326, %v1318
    %v1783 = vpack.c.b16 %v1335, %v1327
    %v1784 = vpack.c.b16 %v1336, %v1328
    %v1785 = vpack.c.b16 %v1337, %v1329
    %v1786 = vpack.c.b16 %v1338, %v1330
    %v1787 = vpack.c.b16 %v1339, %v1331
    %v1788 = vpack.c.b16 %v1340, %v1332
    %v1789 = vpack.c.b16 %v1341, %v1333
    %v1790 = vpack.c.b16 %v1342, %v1334
    %v1791 = vpack.c.b16 %v1351, %v1343
    %v1792 = vpack.c.b16 %v1352, %v1344
    %v1793 = vpack.c.b16 %v1353, %v1345
    %v1794 = vpack.c.b16 %v1354, %v1346
    %v1795 = vpack.c.b16 %v1355, %v1347
    %v1796 = vpack.c.b16 %v1356, %v1348
    %v1797 = vpack.c.b16 %v1357, %v1349
    %v1798 = vpack.c.b16 %v1358, %v1350
    %v1799 = vpack.c.b16 %v1367, %v1359
    %v1800 = vpack.c.b16 %v1368, %v1360
    %v1801 = vpack.c.b16 %v1369, %v1361
    %v1802 = vpack.c.b16 %v1370, %v1362
    %v1803 = vpack.c.b16 %v1371, %v1363
    %v1804 = vpack.c.b16 %v1372, %v1364
    %v1805 = vpack.c.b16 %v1373, %v1365
    %v1806 = vpack.c.b16 %v1374, %v1366
    %v1807 = vpack.c.b16 %v1383, %v1375
    %v1808 = vpack.c.b16 %v1384, %v1376
    %v1809 = vpack.c.b16 %v1385, %v1377
    %v1810 = vpack.c.b16 %v1386, %v1378
    %v1811 = vpack.c.b16 %v1387, %v1379
    %v1812 = vpack.c.b16 %v1388, %v1380
    %v1813 = vpack.c.b16 %v1389, %v1381
    %v1814 = vpack.c.b16 %v1390, %v1382
    %v1815 = vpack.c.b16 %v1399, %v1391
    %v1816 = vpack.c.b16 %v1400, %v1392
    %v1817 = vpack.c.b16 %v1401, %v1393
    %v1818 = vpack.c.b16 %v1402, %v1394
    %v1819 = vpack.c.b16 %v1403, %v1395
    %v1820 = vpack.c.b16 %v1404, %v1396
    %v1821 = vpack.c.b16 %v1405, %v1397
    %v1822 = vpack.c.b16 %v1406, %v1398
    %v1823 = vpack.c.b16 %v1415, %v1407
    %v1824 = vpack.c.b16 %v1416, %v1408
    %v1825 = vpack.c.b16 %v1417, %v1409
    %v1826 = vpack.c.b16 %v1418, %v1410
    %v1827 = vpack.c.b16 %v1419, %v1411
    %v1828 = vpack.c.b16 %v1420, %v1412
    %v1829 = vpack.c.b16 %v1421, %v1413
    %v1830 = vpack.c.b16 %v1422, %v1414
    %v1831 = vpack.c.b16 %v1431, %v1423
    %v1832 = vpack.c.b16 %v1432, %v1424
    %v1833 = vpack.c.b16 %v1433, %v1425
    %v1834 = vpack.c.b16 %v1434, %v1426
    %v1835 = vpack.c.b16 %v1435, %v1427
    %v1836 = vpack.c.b16 %v1436, %v1428
    %v1837 = vpack.c.b16 %v1437, %v1429
    %v1838 = vpack.c.b16 %v1438, %v1430
    %v1839 = vpack.c.b16 %v1447, %v1439
    %v1840 = vpack.c.b16 %v1448, %v1440
    %v1841 = vpack.c.b16 %v1449, %v1441
    %v1842 = vpack.c.b16 %v1450, %v1442
    %v1843 = vpack.c.b16 %v1451, %v1443
    %v1844 = vpack.c.b16 %v1452, %v1444
    %v1845 = vpack.c.b16 %v1453, %v1445
    %v1846 = vpack.c.b16 %v1454, %v1446
    %v1847 = vpack.c.b16 %v1463, %v1455
    %v1848 = vpack.c.b16 %v1464, %v1456
    %v1849 = vpack.c.b16 %v1465, %v1457
    %v1850 = vpack.c.b16 %v1466, %v1458
    %v1851 = vpack.c.b16 %v1467, %v1459
    %v1852 = vpack.c.b16 %v1468, %v1460
    %v1853 = vpack.c.b16 %v1469, %v1461
    %v1854 = vpack.c.b16 %v1470, %v1462
    %v1855 = vpack.c.b16 %v1479, %v1471
    %v1856 = vpack.c.b16 %v1480, %v1472
    %v1857 = vpack.c.b16 %v1481, %v1473
    %v1858 = vpack.c.b16 %v1482, %v1474
    %v1859 = vpack.c.b16 %v1483, %v1475
    %v1860 = vpack.c.b16 %v1484, %v1476
    %v1861 = vpack.c.b16 %v1485, %v1477
    %v1862 = vpack.c.b16 %v1486, %v1478
    %v1863 = vpack.c.b16 %v1495, %v1487
    %v1864 = vpack.c.b16 %v1496, %v1488
    %v1865 = vpack.c.b16 %v1497, %v1489
    %v1866 = vpack.c.b16 %v1498, %v1490
    %v1867 = vpack.c.b16 %v1499, %v1491
    %v1868 = vpack.c.b16 %v1500, %v1492
    %v1869 = vpack.c.b16 %v1501, %v1493
    %v1870 = vpack.c.b16 %v1502, %v1494
    %v1871 = vpack.c.b16 %v1511, %v1503
    %v1872 = vpack.c.b16 %v1512, %v1504
    %v1873 = vpack.c.b16 %v1513, %v1505
    %v1874 = vpack.c.b16 %v1514, %v1506
    %v1875 = vpack.c.b16 %v1515, %v1507
    %v1876 = vpack.c.b16 %v1516, %v1508
    %v1877 = vpack.c.b16 %v1517, %v1509
    %v1878 = vpack.c.b16 %v1518, %v1510
    %v1879 = vpack.c.b16 %v1527, %v1519
    %v1880 = vpack.c.b16 %v1528, %v1520
    %v1881 = vpack.c.b16 %v1529, %v1521
    %v1882 = vpack.c.b16 %v1530, %v1522
    %v1883 = vpack.c.b16 %v1531, %v1523
    %v1884 = vpack.c.b16 %v1532, %v1524
    %v1885 = vpack.c.b16 %v1533, %v1525
    %v1886 = vpack.c.b16 %v1534, %v1526
    %vm2231 = vcmask 490496
    %v2233 = vsel %vm2231, %v108, 0
    %vm2235 = vcmask 1045504
    %v2237 = vsel %vm2235, %v1879, 0
    %v2240 = vsel %vm2235, %v1880, 0
    %v2243 = vsel %vm2235, %v1881, 0
    %v2246 = vsel %vm2235, %v1882, 0
    %v2249 = vsel %vm2235, %v1883, 0
    %v2252 = vsel %vm2235, %v1884, 0
    %v2255 = vsel %vm2235, %v1885, 0
    %v2258 = vsel %vm2235, %v1886, 0
    %2260 = vmatpush.bf16.msra.mxu0 %v1591
    %2261 = vmatpush.bf16.msra.mxu0 %v1583
    %2262 = vmatpush.bf16.msra.mxu0 %v1575
    %2263 = vmatpush.bf16.msra.mxu0 %v1567
    %2264 = vmatpush.bf16.msra.mxu0 %v1559
    %2265 = vmatpush.bf16.msra.mxu0 %v1551
    %2266 = vmatpush.bf16.msra.mxu0 %v1543
    %2267 = vmatpush.bf16.msra.mxu0 %v1535
    %2268 = vmatmul.bf16.gmra.mxu0 %v103
    %v2269 = vpop.f32.mrf.mxu0
    %v2270 = vadd.f32 %v463, %v2269
    %v2271 = vpop.f32.mrf.mxu0
    %2272 = vdwg.mxu0
    %2273 = vmatpush.bf16.msra.mxu0 %v1655
    %2274 = vmatpush.bf16.msra.mxu0 %v1647
    %2275 = vmatpush.bf16.msra.mxu0 %v1639
    %2276 = vmatpush.bf16.msra.mxu0 %v1631
    %2277 = vmatpush.bf16.msra.mxu0 %v1623
    %2278 = vmatpush.bf16.msra.mxu0 %v1615
    %2279 = vmatpush.bf16.msra.mxu0 %v1607
    %2280 = vmatpush.bf16.msra.mxu0 %v1599
    %2281 = vmatmul.bf16.gmra.mxu0 %v104
    %v2282 = vpop.f32.mrf.mxu0
    %v2283 = vadd.f32 %v2270, %v2282
    %v2284 = vpop.f32.mrf.mxu0
    %2285 = vdwg.mxu0
    %2286 = vmatpush.bf16.msra.mxu0 %v1719
    %2287 = vmatpush.bf16.msra.mxu0 %v1711
    %2288 = vmatpush.bf16.msra.mxu0 %v1703
    %2289 = vmatpush.bf16.msra.mxu0 %v1695
    %2290 = vmatpush.bf16.msra.mxu0 %v1687
    %2291 = vmatpush.bf16.msra.mxu0 %v1679
    %2292 = vmatpush.bf16.msra.mxu0 %v1671
    %2293 = vmatpush.bf16.msra.mxu0 %v1663
    %2294 = vmatmul.bf16.gmra.mxu0 %v105
    %v2295 = vpop.f32.mrf.mxu0
    %v2296 = vadd.f32 %v2283, %v2295
    %v2297 = vpop.f32.mrf.mxu0
    %2298 = vdwg.mxu0
    %2299 = vmatpush.bf16.msra.mxu0 %v1783
    %2300 = vmatpush.bf16.msra.mxu0 %v1775
    %2301 = vmatpush.bf16.msra.mxu0 %v1767
    %2302 = vmatpush.bf16.msra.mxu0 %v1759
    %2303 = vmatpush.bf16.msra.mxu0 %v1751
    %2304 = vmatpush.bf16.msra.mxu0 %v1743
    %2305 = vmatpush.bf16.msra.mxu0 %v1735
    %2306 = vmatpush.bf16.msra.mxu0 %v1727
    %2307 = vmatmul.bf16.gmra.mxu0 %v106
    %v2308 = vpop.f32.mrf.mxu0
    %v2309 = vadd.f32 %v2296, %v2308
    %v2310 = vpop.f32.mrf.mxu0
    %2311 = vdwg.mxu0
    %2312 = vmatpush.bf16.msra.mxu0 %v1847
    %2313 = vmatpush.bf16.msra.mxu0 %v1839
    %2314 = vmatpush.bf16.msra.mxu0 %v1831
    %2315 = vmatpush.bf16.msra.mxu0 %v1823
    %2316 = vmatpush.bf16.msra.mxu0 %v1815
    %2317 = vmatpush.bf16.msra.mxu0 %v1807
    %2318 = vmatpush.bf16.msra.mxu0 %v1799
    %2319 = vmatpush.bf16.msra.mxu0 %v1791
    %2320 = vmatmul.bf16.gmra.mxu0 %v107
    %v2321 = vpop.f32.mrf.mxu0
    %v2322 = vadd.f32 %v2309, %v2321
    %v2323 = vpop.f32.mrf.mxu0
    %2324 = vdwg.mxu0
    %2325 = vmatpush.bf16.msra.mxu0 0
    %2326 = vmatpush.bf16.msra.mxu0 0
    %2327 = vmatpush.bf16.msra.mxu0 0
    %2328 = vmatpush.bf16.msra.mxu0 0
    %2329 = vmatpush.bf16.msra.mxu0 %v2237
    %2330 = vmatpush.bf16.msra.mxu0 %v1871
    %2331 = vmatpush.bf16.msra.mxu0 %v1863
    %2332 = vmatpush.bf16.msra.mxu0 %v1855
    %2333 = vmatmul.bf16.gmra.mxu0 %v2233
    %v2334 = vpop.f32.mrf.mxu0
    %v2335 = vadd.f32 %v2322, %v2334
    %v2336 = vpop.f32.mrf.mxu0
    %2337 = vdwg.mxu0
    %2338 = vmatpush.bf16.msra.mxu0 %v1592
    %2339 = vmatpush.bf16.msra.mxu0 %v1584
    %2340 = vmatpush.bf16.msra.mxu0 %v1576
    %2341 = vmatpush.bf16.msra.mxu0 %v1568
    %2342 = vmatpush.bf16.msra.mxu0 %v1560
    %2343 = vmatpush.bf16.msra.mxu0 %v1552
    %2344 = vmatpush.bf16.msra.mxu0 %v1544
    %2345 = vmatpush.bf16.msra.mxu0 %v1536
    %2346 = vmatmul.bf16.gmra.mxu0 %v103
    %v2347 = vpop.f32.mrf.mxu0
    %v2348 = vadd.f32 %v464, %v2347
    %v2349 = vpop.f32.mrf.mxu0
    %2350 = vdwg.mxu0
    %2351 = vmatpush.bf16.msra.mxu0 %v1656
    %2352 = vmatpush.bf16.msra.mxu0 %v1648
    %2353 = vmatpush.bf16.msra.mxu0 %v1640
    %2354 = vmatpush.bf16.msra.mxu0 %v1632
    %2355 = vmatpush.bf16.msra.mxu0 %v1624
    %2356 = vmatpush.bf16.msra.mxu0 %v1616
    %2357 = vmatpush.bf16.msra.mxu0 %v1608
    %2358 = vmatpush.bf16.msra.mxu0 %v1600
    %2359 = vmatmul.bf16.gmra.mxu0 %v104
    %v2360 = vpop.f32.mrf.mxu0
    %v2361 = vadd.f32 %v2348, %v2360
    %v2362 = vpop.f32.mrf.mxu0
    %2363 = vdwg.mxu0
    %2364 = vmatpush.bf16.msra.mxu0 %v1720
    %2365 = vmatpush.bf16.msra.mxu0 %v1712
    %2366 = vmatpush.bf16.msra.mxu0 %v1704
    %2367 = vmatpush.bf16.msra.mxu0 %v1696
    %2368 = vmatpush.bf16.msra.mxu0 %v1688
    %2369 = vmatpush.bf16.msra.mxu0 %v1680
    %2370 = vmatpush.bf16.msra.mxu0 %v1672
    %2371 = vmatpush.bf16.msra.mxu0 %v1664
    %2372 = vmatmul.bf16.gmra.mxu0 %v105
    %v2373 = vpop.f32.mrf.mxu0
    %v2374 = vadd.f32 %v2361, %v2373
    %v2375 = vpop.f32.mrf.mxu0
    %2376 = vdwg.mxu0
    %2377 = vmatpush.bf16.msra.mxu0 %v1784
    %2378 = vmatpush.bf16.msra.mxu0 %v1776
    %2379 = vmatpush.bf16.msra.mxu0 %v1768
    %2380 = vmatpush.bf16.msra.mxu0 %v1760
    %2381 = vmatpush.bf16.msra.mxu0 %v1752
    %2382 = vmatpush.bf16.msra.mxu0 %v1744
    %2383 = vmatpush.bf16.msra.mxu0 %v1736
    %2384 = vmatpush.bf16.msra.mxu0 %v1728
    %2385 = vmatmul.bf16.gmra.mxu0 %v106
    %v2386 = vpop.f32.mrf.mxu0
    %v2387 = vadd.f32 %v2374, %v2386
    %v2388 = vpop.f32.mrf.mxu0
    %2389 = vdwg.mxu0
    %2390 = vmatpush.bf16.msra.mxu0 %v1848
    %2391 = vmatpush.bf16.msra.mxu0 %v1840
    %2392 = vmatpush.bf16.msra.mxu0 %v1832
    %2393 = vmatpush.bf16.msra.mxu0 %v1824
    %2394 = vmatpush.bf16.msra.mxu0 %v1816
    %2395 = vmatpush.bf16.msra.mxu0 %v1808
    %2396 = vmatpush.bf16.msra.mxu0 %v1800
    %2397 = vmatpush.bf16.msra.mxu0 %v1792
    %2398 = vmatmul.bf16.gmra.mxu0 %v107
    %v2399 = vpop.f32.mrf.mxu0
    %v2400 = vadd.f32 %v2387, %v2399
    %v2401 = vpop.f32.mrf.mxu0
    %2402 = vdwg.mxu0
    %2403 = vmatpush.bf16.msra.mxu0 0
    %2404 = vmatpush.bf16.msra.mxu0 0
    %2405 = vmatpush.bf16.msra.mxu0 0
    %2406 = vmatpush.bf16.msra.mxu0 0
    %2407 = vmatpush.bf16.msra.mxu0 %v2240
    %2408 = vmatpush.bf16.msra.mxu0 %v1872
    %2409 = vmatpush.bf16.msra.mxu0 %v1864
    %2410 = vmatpush.bf16.msra.mxu0 %v1856
    %2411 = vmatmul.bf16.gmra.mxu0 %v2233
    %v2412 = vpop.f32.mrf.mxu0
    %v2413 = vadd.f32 %v2400, %v2412
    %v2414 = vpop.f32.mrf.mxu0
    %2415 = vdwg.mxu0
    %2416 = vmatpush.bf16.msra.mxu0 %v1593
    %2417 = vmatpush.bf16.msra.mxu0 %v1585
    %2418 = vmatpush.bf16.msra.mxu0 %v1577
    %2419 = vmatpush.bf16.msra.mxu0 %v1569
    %2420 = vmatpush.bf16.msra.mxu0 %v1561
    %2421 = vmatpush.bf16.msra.mxu0 %v1553
    %2422 = vmatpush.bf16.msra.mxu0 %v1545
    %2423 = vmatpush.bf16.msra.mxu0 %v1537
    %2424 = vmatmul.bf16.gmra.mxu0 %v103
    %v2425 = vpop.f32.mrf.mxu0
    %v2426 = vadd.f32 %v465, %v2425
    %v2427 = vpop.f32.mrf.mxu0
    %2428 = vdwg.mxu0
    %2429 = vmatpush.bf16.msra.mxu0 %v1657
    %2430 = vmatpush.bf16.msra.mxu0 %v1649
    %2431 = vmatpush.bf16.msra.mxu0 %v1641
    %2432 = vmatpush.bf16.msra.mxu0 %v1633
    %2433 = vmatpush.bf16.msra.mxu0 %v1625
    %2434 = vmatpush.bf16.msra.mxu0 %v1617
    %2435 = vmatpush.bf16.msra.mxu0 %v1609
    %2436 = vmatpush.bf16.msra.mxu0 %v1601
    %2437 = vmatmul.bf16.gmra.mxu0 %v104
    %v2438 = vpop.f32.mrf.mxu0
    %v2439 = vadd.f32 %v2426, %v2438
    %v2440 = vpop.f32.mrf.mxu0
    %2441 = vdwg.mxu0
    %2442 = vmatpush.bf16.msra.mxu0 %v1721
    %2443 = vmatpush.bf16.msra.mxu0 %v1713
    %2444 = vmatpush.bf16.msra.mxu0 %v1705
    %2445 = vmatpush.bf16.msra.mxu0 %v1697
    %2446 = vmatpush.bf16.msra.mxu0 %v1689
    %2447 = vmatpush.bf16.msra.mxu0 %v1681
    %2448 = vmatpush.bf16.msra.mxu0 %v1673
    %2449 = vmatpush.bf16.msra.mxu0 %v1665
    %2450 = vmatmul.bf16.gmra.mxu0 %v105
    %v2451 = vpop.f32.mrf.mxu0
    %v2452 = vadd.f32 %v2439, %v2451
    %v2453 = vpop.f32.mrf.mxu0
    %2454 = vdwg.mxu0
    %2455 = vmatpush.bf16.msra.mxu0 %v1785
    %2456 = vmatpush.bf16.msra.mxu0 %v1777
    %2457 = vmatpush.bf16.msra.mxu0 %v1769
    %2458 = vmatpush.bf16.msra.mxu0 %v1761
    %2459 = vmatpush.bf16.msra.mxu0 %v1753
    %2460 = vmatpush.bf16.msra.mxu0 %v1745
    %2461 = vmatpush.bf16.msra.mxu0 %v1737
    %2462 = vmatpush.bf16.msra.mxu0 %v1729
    %2463 = vmatmul.bf16.gmra.mxu0 %v106
    %v2464 = vpop.f32.mrf.mxu0
    %v2465 = vadd.f32 %v2452, %v2464
    %v2466 = vpop.f32.mrf.mxu0
    %2467 = vdwg.mxu0
    %2468 = vmatpush.bf16.msra.mxu0 %v1849
    %2469 = vmatpush.bf16.msra.mxu0 %v1841
    %2470 = vmatpush.bf16.msra.mxu0 %v1833
    %2471 = vmatpush.bf16.msra.mxu0 %v1825
    %2472 = vmatpush.bf16.msra.mxu0 %v1817
    %2473 = vmatpush.bf16.msra.mxu0 %v1809
    %2474 = vmatpush.bf16.msra.mxu0 %v1801
    %2475 = vmatpush.bf16.msra.mxu0 %v1793
    %2476 = vmatmul.bf16.gmra.mxu0 %v107
    %v2477 = vpop.f32.mrf.mxu0
    %v2478 = vadd.f32 %v2465, %v2477
    %v2479 = vpop.f32.mrf.mxu0
    %2480 = vdwg.mxu0
    %2481 = vmatpush.bf16.msra.mxu0 0
    %2482 = vmatpush.bf16.msra.mxu0 0
    %2483 = vmatpush.bf16.msra.mxu0 0
    %2484 = vmatpush.bf16.msra.mxu0 0
    %2485 = vmatpush.bf16.msra.mxu0 %v2243
    %2486 = vmatpush.bf16.msra.mxu0 %v1873
    %2487 = vmatpush.bf16.msra.mxu0 %v1865
    %2488 = vmatpush.bf16.msra.mxu0 %v1857
    %2489 = vmatmul.bf16.gmra.mxu0 %v2233
    %v2490 = vpop.f32.mrf.mxu0
    %v2491 = vadd.f32 %v2478, %v2490
    %v2492 = vpop.f32.mrf.mxu0
    %2493 = vdwg.mxu0
    %2494 = vmatpush.bf16.msra.mxu0 %v1594
    %2495 = vmatpush.bf16.msra.mxu0 %v1586
    %2496 = vmatpush.bf16.msra.mxu0 %v1578
    %2497 = vmatpush.bf16.msra.mxu0 %v1570
    %2498 = vmatpush.bf16.msra.mxu0 %v1562
    %2499 = vmatpush.bf16.msra.mxu0 %v1554
    %2500 = vmatpush.bf16.msra.mxu0 %v1546
    %2501 = vmatpush.bf16.msra.mxu0 %v1538
    %2502 = vmatmul.bf16.gmra.mxu0 %v103
    %v2503 = vpop.f32.mrf.mxu0
    %v2504 = vadd.f32 %v466, %v2503
    %v2505 = vpop.f32.mrf.mxu0
    %2506 = vdwg.mxu0
    %2507 = vmatpush.bf16.msra.mxu0 %v1658
    %2508 = vmatpush.bf16.msra.mxu0 %v1650
    %2509 = vmatpush.bf16.msra.mxu0 %v1642
    %2510 = vmatpush.bf16.msra.mxu0 %v1634
    %2511 = vmatpush.bf16.msra.mxu0 %v1626
    %2512 = vmatpush.bf16.msra.mxu0 %v1618
    %2513 = vmatpush.bf16.msra.mxu0 %v1610
    %2514 = vmatpush.bf16.msra.mxu0 %v1602
    %2515 = vmatmul.bf16.gmra.mxu0 %v104
    %v2516 = vpop.f32.mrf.mxu0
    %v2517 = vadd.f32 %v2504, %v2516
    %v2518 = vpop.f32.mrf.mxu0
    %2519 = vdwg.mxu0
    %2520 = vmatpush.bf16.msra.mxu0 %v1722
    %2521 = vmatpush.bf16.msra.mxu0 %v1714
    %2522 = vmatpush.bf16.msra.mxu0 %v1706
    %2523 = vmatpush.bf16.msra.mxu0 %v1698
    %2524 = vmatpush.bf16.msra.mxu0 %v1690
    %2525 = vmatpush.bf16.msra.mxu0 %v1682
    %2526 = vmatpush.bf16.msra.mxu0 %v1674
    %2527 = vmatpush.bf16.msra.mxu0 %v1666
    %2528 = vmatmul.bf16.gmra.mxu0 %v105
    %v2529 = vpop.f32.mrf.mxu0
    %v2530 = vadd.f32 %v2517, %v2529
    %v2531 = vpop.f32.mrf.mxu0
    %2532 = vdwg.mxu0
    %2533 = vmatpush.bf16.msra.mxu0 %v1786
    %2534 = vmatpush.bf16.msra.mxu0 %v1778
    %2535 = vmatpush.bf16.msra.mxu0 %v1770
    %2536 = vmatpush.bf16.msra.mxu0 %v1762
    %2537 = vmatpush.bf16.msra.mxu0 %v1754
    %2538 = vmatpush.bf16.msra.mxu0 %v1746
    %2539 = vmatpush.bf16.msra.mxu0 %v1738
    %2540 = vmatpush.bf16.msra.mxu0 %v1730
    %2541 = vmatmul.bf16.gmra.mxu0 %v106
    %v2542 = vpop.f32.mrf.mxu0
    %v2543 = vadd.f32 %v2530, %v2542
    %v2544 = vpop.f32.mrf.mxu0
    %2545 = vdwg.mxu0
    %2546 = vmatpush.bf16.msra.mxu0 %v1850
    %2547 = vmatpush.bf16.msra.mxu0 %v1842
    %2548 = vmatpush.bf16.msra.mxu0 %v1834
    %2549 = vmatpush.bf16.msra.mxu0 %v1826
    %2550 = vmatpush.bf16.msra.mxu0 %v1818
    %2551 = vmatpush.bf16.msra.mxu0 %v1810
    %2552 = vmatpush.bf16.msra.mxu0 %v1802
    %2553 = vmatpush.bf16.msra.mxu0 %v1794
    %2554 = vmatmul.bf16.gmra.mxu0 %v107
    %v2555 = vpop.f32.mrf.mxu0
    %v2556 = vadd.f32 %v2543, %v2555
    %v2557 = vpop.f32.mrf.mxu0
    %2558 = vdwg.mxu0
    %2559 = vmatpush.bf16.msra.mxu0 0
    %2560 = vmatpush.bf16.msra.mxu0 0
    %2561 = vmatpush.bf16.msra.mxu0 0
    %2562 = vmatpush.bf16.msra.mxu0 0
    %2563 = vmatpush.bf16.msra.mxu0 %v2246
    %2564 = vmatpush.bf16.msra.mxu0 %v1874
    %2565 = vmatpush.bf16.msra.mxu0 %v1866
    %2566 = vmatpush.bf16.msra.mxu0 %v1858
    %2567 = vmatmul.bf16.gmra.mxu0 %v2233
    %v2568 = vpop.f32.mrf.mxu0
    %v2569 = vadd.f32 %v2556, %v2568
    %v2570 = vpop.f32.mrf.mxu0
    %2571 = vdwg.mxu0
    %2572 = vmatpush.bf16.msra.mxu0 %v1595
    %2573 = vmatpush.bf16.msra.mxu0 %v1587
    %2574 = vmatpush.bf16.msra.mxu0 %v1579
    %2575 = vmatpush.bf16.msra.mxu0 %v1571
    %2576 = vmatpush.bf16.msra.mxu0 %v1563
    %2577 = vmatpush.bf16.msra.mxu0 %v1555
    %2578 = vmatpush.bf16.msra.mxu0 %v1547
    %2579 = vmatpush.bf16.msra.mxu0 %v1539
    %2580 = vmatmul.bf16.gmra.mxu0 %v103
    %v2581 = vpop.f32.mrf.mxu0
    %v2582 = vadd.f32 %v467, %v2581
    %v2583 = vpop.f32.mrf.mxu0
    %2584 = vdwg.mxu0
    %2585 = vmatpush.bf16.msra.mxu0 %v1659
    %2586 = vmatpush.bf16.msra.mxu0 %v1651
    %2587 = vmatpush.bf16.msra.mxu0 %v1643
    %2588 = vmatpush.bf16.msra.mxu0 %v1635
    %2589 = vmatpush.bf16.msra.mxu0 %v1627
    %2590 = vmatpush.bf16.msra.mxu0 %v1619
    %2591 = vmatpush.bf16.msra.mxu0 %v1611
    %2592 = vmatpush.bf16.msra.mxu0 %v1603
    %2593 = vmatmul.bf16.gmra.mxu0 %v104
    %v2594 = vpop.f32.mrf.mxu0
    %v2595 = vadd.f32 %v2582, %v2594
    %v2596 = vpop.f32.mrf.mxu0
    %2597 = vdwg.mxu0
    %2598 = vmatpush.bf16.msra.mxu0 %v1723
    %2599 = vmatpush.bf16.msra.mxu0 %v1715
    %2600 = vmatpush.bf16.msra.mxu0 %v1707
    %2601 = vmatpush.bf16.msra.mxu0 %v1699
    %2602 = vmatpush.bf16.msra.mxu0 %v1691
    %2603 = vmatpush.bf16.msra.mxu0 %v1683
    %2604 = vmatpush.bf16.msra.mxu0 %v1675
    %2605 = vmatpush.bf16.msra.mxu0 %v1667
    %2606 = vmatmul.bf16.gmra.mxu0 %v105
    %v2607 = vpop.f32.mrf.mxu0
    %v2608 = vadd.f32 %v2595, %v2607
    %v2609 = vpop.f32.mrf.mxu0
    %2610 = vdwg.mxu0
    %2611 = vmatpush.bf16.msra.mxu0 %v1787
    %2612 = vmatpush.bf16.msra.mxu0 %v1779
    %2613 = vmatpush.bf16.msra.mxu0 %v1771
    %2614 = vmatpush.bf16.msra.mxu0 %v1763
    %2615 = vmatpush.bf16.msra.mxu0 %v1755
    %2616 = vmatpush.bf16.msra.mxu0 %v1747
    %2617 = vmatpush.bf16.msra.mxu0 %v1739
    %2618 = vmatpush.bf16.msra.mxu0 %v1731
    %2619 = vmatmul.bf16.gmra.mxu0 %v106
    %v2620 = vpop.f32.mrf.mxu0
    %v2621 = vadd.f32 %v2608, %v2620
    %v2622 = vpop.f32.mrf.mxu0
    %2623 = vdwg.mxu0
    %2624 = vmatpush.bf16.msra.mxu0 %v1851
    %2625 = vmatpush.bf16.msra.mxu0 %v1843
    %2626 = vmatpush.bf16.msra.mxu0 %v1835
    %2627 = vmatpush.bf16.msra.mxu0 %v1827
    %2628 = vmatpush.bf16.msra.mxu0 %v1819
    %2629 = vmatpush.bf16.msra.mxu0 %v1811
    %2630 = vmatpush.bf16.msra.mxu0 %v1803
    %2631 = vmatpush.bf16.msra.mxu0 %v1795
    %2632 = vmatmul.bf16.gmra.mxu0 %v107
    %v2633 = vpop.f32.mrf.mxu0
    %v2634 = vadd.f32 %v2621, %v2633
    %v2635 = vpop.f32.mrf.mxu0
    %2636 = vdwg.mxu0
    %2637 = vmatpush.bf16.msra.mxu0 0
    %2638 = vmatpush.bf16.msra.mxu0 0
    %2639 = vmatpush.bf16.msra.mxu0 0
    %2640 = vmatpush.bf16.msra.mxu0 0
    %2641 = vmatpush.bf16.msra.mxu0 %v2249
    %2642 = vmatpush.bf16.msra.mxu0 %v1875
    %2643 = vmatpush.bf16.msra.mxu0 %v1867
    %2644 = vmatpush.bf16.msra.mxu0 %v1859
    %2645 = vmatmul.bf16.gmra.mxu0 %v2233
    %v2646 = vpop.f32.mrf.mxu0
    %v2647 = vadd.f32 %v2634, %v2646
    %v2648 = vpop.f32.mrf.mxu0
    %2649 = vdwg.mxu0
    %2650 = vmatpush.bf16.msra.mxu0 %v1596
    %2651 = vmatpush.bf16.msra.mxu0 %v1588
    %2652 = vmatpush.bf16.msra.mxu0 %v1580
    %2653 = vmatpush.bf16.msra.mxu0 %v1572
    %2654 = vmatpush.bf16.msra.mxu0 %v1564
    %2655 = vmatpush.bf16.msra.mxu0 %v1556
    %2656 = vmatpush.bf16.msra.mxu0 %v1548
    %2657 = vmatpush.bf16.msra.mxu0 %v1540
    %2658 = vmatmul.bf16.gmra.mxu0 %v103
    %v2659 = vpop.f32.mrf.mxu0
    %v2660 = vadd.f32 %v468, %v2659
    %v2661 = vpop.f32.mrf.mxu0
    %2662 = vdwg.mxu0
    %2663 = vmatpush.bf16.msra.mxu0 %v1660
    %2664 = vmatpush.bf16.msra.mxu0 %v1652
    %2665 = vmatpush.bf16.msra.mxu0 %v1644
    %2666 = vmatpush.bf16.msra.mxu0 %v1636
    %2667 = vmatpush.bf16.msra.mxu0 %v1628
    %2668 = vmatpush.bf16.msra.mxu0 %v1620
    %2669 = vmatpush.bf16.msra.mxu0 %v1612
    %2670 = vmatpush.bf16.msra.mxu0 %v1604
    %2671 = vmatmul.bf16.gmra.mxu0 %v104
    %v2672 = vpop.f32.mrf.mxu0
    %v2673 = vadd.f32 %v2660, %v2672
    %v2674 = vpop.f32.mrf.mxu0
    %2675 = vdwg.mxu0
    %2676 = vmatpush.bf16.msra.mxu0 %v1724
    %2677 = vmatpush.bf16.msra.mxu0 %v1716
    %2678 = vmatpush.bf16.msra.mxu0 %v1708
    %2679 = vmatpush.bf16.msra.mxu0 %v1700
    %2680 = vmatpush.bf16.msra.mxu0 %v1692
    %2681 = vmatpush.bf16.msra.mxu0 %v1684
    %2682 = vmatpush.bf16.msra.mxu0 %v1676
    %2683 = vmatpush.bf16.msra.mxu0 %v1668
    %2684 = vmatmul.bf16.gmra.mxu0 %v105
    %v2685 = vpop.f32.mrf.mxu0
    %v2686 = vadd.f32 %v2673, %v2685
    %v2687 = vpop.f32.mrf.mxu0
    %2688 = vdwg.mxu0
    %2689 = vmatpush.bf16.msra.mxu0 %v1788
    %2690 = vmatpush.bf16.msra.mxu0 %v1780
    %2691 = vmatpush.bf16.msra.mxu0 %v1772
    %2692 = vmatpush.bf16.msra.mxu0 %v1764
    %2693 = vmatpush.bf16.msra.mxu0 %v1756
    %2694 = vmatpush.bf16.msra.mxu0 %v1748
    %2695 = vmatpush.bf16.msra.mxu0 %v1740
    %2696 = vmatpush.bf16.msra.mxu0 %v1732
    %2697 = vmatmul.bf16.gmra.mxu0 %v106
    %v2698 = vpop.f32.mrf.mxu0
    %v2699 = vadd.f32 %v2686, %v2698
    %v2700 = vpop.f32.mrf.mxu0
    %2701 = vdwg.mxu0
    %2702 = vmatpush.bf16.msra.mxu0 %v1852
    %2703 = vmatpush.bf16.msra.mxu0 %v1844
    %2704 = vmatpush.bf16.msra.mxu0 %v1836
    %2705 = vmatpush.bf16.msra.mxu0 %v1828
    %2706 = vmatpush.bf16.msra.mxu0 %v1820
    %2707 = vmatpush.bf16.msra.mxu0 %v1812
    %2708 = vmatpush.bf16.msra.mxu0 %v1804
    %2709 = vmatpush.bf16.msra.mxu0 %v1796
    %2710 = vmatmul.bf16.gmra.mxu0 %v107
    %v2711 = vpop.f32.mrf.mxu0
    %v2712 = vadd.f32 %v2699, %v2711
    %v2713 = vpop.f32.mrf.mxu0
    %2714 = vdwg.mxu0
    %2715 = vmatpush.bf16.msra.mxu0 0
    %2716 = vmatpush.bf16.msra.mxu0 0
    %2717 = vmatpush.bf16.msra.mxu0 0
    %2718 = vmatpush.bf16.msra.mxu0 0
    %2719 = vmatpush.bf16.msra.mxu0 %v2252
    %2720 = vmatpush.bf16.msra.mxu0 %v1876
    %2721 = vmatpush.bf16.msra.mxu0 %v1868
    %2722 = vmatpush.bf16.msra.mxu0 %v1860
    %2723 = vmatmul.bf16.gmra.mxu0 %v2233
    %v2724 = vpop.f32.mrf.mxu0
    %v2725 = vadd.f32 %v2712, %v2724
    %v2726 = vpop.f32.mrf.mxu0
    %2727 = vdwg.mxu0
    %2728 = vmatpush.bf16.msra.mxu0 %v1597
    %2729 = vmatpush.bf16.msra.mxu0 %v1589
    %2730 = vmatpush.bf16.msra.mxu0 %v1581
    %2731 = vmatpush.bf16.msra.mxu0 %v1573
    %2732 = vmatpush.bf16.msra.mxu0 %v1565
    %2733 = vmatpush.bf16.msra.mxu0 %v1557
    %2734 = vmatpush.bf16.msra.mxu0 %v1549
    %2735 = vmatpush.bf16.msra.mxu0 %v1541
    %2736 = vmatmul.bf16.gmra.mxu0 %v103
    %v2737 = vpop.f32.mrf.mxu0
    %v2738 = vadd.f32 %v469, %v2737
    %v2739 = vpop.f32.mrf.mxu0
    %2740 = vdwg.mxu0
    %2741 = vmatpush.bf16.msra.mxu0 %v1661
    %2742 = vmatpush.bf16.msra.mxu0 %v1653
    %2743 = vmatpush.bf16.msra.mxu0 %v1645
    %2744 = vmatpush.bf16.msra.mxu0 %v1637
    %2745 = vmatpush.bf16.msra.mxu0 %v1629
    %2746 = vmatpush.bf16.msra.mxu0 %v1621
    %2747 = vmatpush.bf16.msra.mxu0 %v1613
    %2748 = vmatpush.bf16.msra.mxu0 %v1605
    %2749 = vmatmul.bf16.gmra.mxu0 %v104
    %v2750 = vpop.f32.mrf.mxu0
    %v2751 = vadd.f32 %v2738, %v2750
    %v2752 = vpop.f32.mrf.mxu0
    %2753 = vdwg.mxu0
    %2754 = vmatpush.bf16.msra.mxu0 %v1725
    %2755 = vmatpush.bf16.msra.mxu0 %v1717
    %2756 = vmatpush.bf16.msra.mxu0 %v1709
    %2757 = vmatpush.bf16.msra.mxu0 %v1701
    %2758 = vmatpush.bf16.msra.mxu0 %v1693
    %2759 = vmatpush.bf16.msra.mxu0 %v1685
    %2760 = vmatpush.bf16.msra.mxu0 %v1677
    %2761 = vmatpush.bf16.msra.mxu0 %v1669
    %2762 = vmatmul.bf16.gmra.mxu0 %v105
    %v2763 = vpop.f32.mrf.mxu0
    %v2764 = vadd.f32 %v2751, %v2763
    %v2765 = vpop.f32.mrf.mxu0
    %2766 = vdwg.mxu0
    %2767 = vmatpush.bf16.msra.mxu0 %v1789
    %2768 = vmatpush.bf16.msra.mxu0 %v1781
    %2769 = vmatpush.bf16.msra.mxu0 %v1773
    %2770 = vmatpush.bf16.msra.mxu0 %v1765
    %2771 = vmatpush.bf16.msra.mxu0 %v1757
    %2772 = vmatpush.bf16.msra.mxu0 %v1749
    %2773 = vmatpush.bf16.msra.mxu0 %v1741
    %2774 = vmatpush.bf16.msra.mxu0 %v1733
    %2775 = vmatmul.bf16.gmra.mxu0 %v106
    %v2776 = vpop.f32.mrf.mxu0
    %v2777 = vadd.f32 %v2764, %v2776
    %v2778 = vpop.f32.mrf.mxu0
    %2779 = vdwg.mxu0
    %2780 = vmatpush.bf16.msra.mxu0 %v1853
    %2781 = vmatpush.bf16.msra.mxu0 %v1845
    %2782 = vmatpush.bf16.msra.mxu0 %v1837
    %2783 = vmatpush.bf16.msra.mxu0 %v1829
    %2784 = vmatpush.bf16.msra.mxu0 %v1821
    %2785 = vmatpush.bf16.msra.mxu0 %v1813
    %2786 = vmatpush.bf16.msra.mxu0 %v1805
    %2787 = vmatpush.bf16.msra.mxu0 %v1797
    %2788 = vmatmul.bf16.gmra.mxu0 %v107
    %v2789 = vpop.f32.mrf.mxu0
    %v2790 = vadd.f32 %v2777, %v2789
    %v2791 = vpop.f32.mrf.mxu0
    %2792 = vdwg.mxu0
    %2793 = vmatpush.bf16.msra.mxu0 0
    %2794 = vmatpush.bf16.msra.mxu0 0
    %2795 = vmatpush.bf16.msra.mxu0 0
    %2796 = vmatpush.bf16.msra.mxu0 0
    %2797 = vmatpush.bf16.msra.mxu0 %v2255
    %2798 = vmatpush.bf16.msra.mxu0 %v1877
    %2799 = vmatpush.bf16.msra.mxu0 %v1869
    %2800 = vmatpush.bf16.msra.mxu0 %v1861
    %2801 = vmatmul.bf16.gmra.mxu0 %v2233
    %v2802 = vpop.f32.mrf.mxu0
    %v2803 = vadd.f32 %v2790, %v2802
    %v2804 = vpop.f32.mrf.mxu0
    %2805 = vdwg.mxu0
    %2806 = vmatpush.bf16.msra.mxu0 %v1598
    %2807 = vmatpush.bf16.msra.mxu0 %v1590
    %2808 = vmatpush.bf16.msra.mxu0 %v1582
    %2809 = vmatpush.bf16.msra.mxu0 %v1574
    %2810 = vmatpush.bf16.msra.mxu0 %v1566
    %2811 = vmatpush.bf16.msra.mxu0 %v1558
    %2812 = vmatpush.bf16.msra.mxu0 %v1550
    %2813 = vmatpush.bf16.msra.mxu0 %v1542
    %2814 = vmatmul.bf16.gmra.mxu0 %v103
    %v2815 = vpop.f32.mrf.mxu0
    %v2816 = vadd.f32 %v470, %v2815
    %v2817 = vpop.f32.mrf.mxu0
    %2818 = vdwg.mxu0
    %2819 = vmatpush.bf16.msra.mxu0 %v1662
    %2820 = vmatpush.bf16.msra.mxu0 %v1654
    %2821 = vmatpush.bf16.msra.mxu0 %v1646
    %2822 = vmatpush.bf16.msra.mxu0 %v1638
    %2823 = vmatpush.bf16.msra.mxu0 %v1630
    %2824 = vmatpush.bf16.msra.mxu0 %v1622
    %2825 = vmatpush.bf16.msra.mxu0 %v1614
    %2826 = vmatpush.bf16.msra.mxu0 %v1606
    %2827 = vmatmul.bf16.gmra.mxu0 %v104
    %v2828 = vpop.f32.mrf.mxu0
    %v2829 = vadd.f32 %v2816, %v2828
    %v2830 = vpop.f32.mrf.mxu0
    %2831 = vdwg.mxu0
    %2832 = vmatpush.bf16.msra.mxu0 %v1726
    %2833 = vmatpush.bf16.msra.mxu0 %v1718
    %2834 = vmatpush.bf16.msra.mxu0 %v1710
    %2835 = vmatpush.bf16.msra.mxu0 %v1702
    %2836 = vmatpush.bf16.msra.mxu0 %v1694
    %2837 = vmatpush.bf16.msra.mxu0 %v1686
    %2838 = vmatpush.bf16.msra.mxu0 %v1678
    %2839 = vmatpush.bf16.msra.mxu0 %v1670
    %2840 = vmatmul.bf16.gmra.mxu0 %v105
    %v2841 = vpop.f32.mrf.mxu0
    %v2842 = vadd.f32 %v2829, %v2841
    %v2843 = vpop.f32.mrf.mxu0
    %2844 = vdwg.mxu0
    %2845 = vmatpush.bf16.msra.mxu0 %v1790
    %2846 = vmatpush.bf16.msra.mxu0 %v1782
    %2847 = vmatpush.bf16.msra.mxu0 %v1774
    %2848 = vmatpush.bf16.msra.mxu0 %v1766
    %2849 = vmatpush.bf16.msra.mxu0 %v1758
    %2850 = vmatpush.bf16.msra.mxu0 %v1750
    %2851 = vmatpush.bf16.msra.mxu0 %v1742
    %2852 = vmatpush.bf16.msra.mxu0 %v1734
    %2853 = vmatmul.bf16.gmra.mxu0 %v106
    %v2854 = vpop.f32.mrf.mxu0
    %v2855 = vadd.f32 %v2842, %v2854
    %v2856 = vpop.f32.mrf.mxu0
    %2857 = vdwg.mxu0
    %2858 = vmatpush.bf16.msra.mxu0 %v1854
    %2859 = vmatpush.bf16.msra.mxu0 %v1846
    %2860 = vmatpush.bf16.msra.mxu0 %v1838
    %2861 = vmatpush.bf16.msra.mxu0 %v1830
    %2862 = vmatpush.bf16.msra.mxu0 %v1822
    %2863 = vmatpush.bf16.msra.mxu0 %v1814
    %2864 = vmatpush.bf16.msra.mxu0 %v1806
    %2865 = vmatpush.bf16.msra.mxu0 %v1798
    %2866 = vmatmul.bf16.gmra.mxu0 %v107
    %v2867 = vpop.f32.mrf.mxu0
    %v2868 = vadd.f32 %v2855, %v2867
    %v2869 = vpop.f32.mrf.mxu0
    %2870 = vdwg.mxu0
    %2871 = vmatpush.bf16.msra.mxu0 0
    %2872 = vmatpush.bf16.msra.mxu0 0
    %2873 = vmatpush.bf16.msra.mxu0 0
    %2874 = vmatpush.bf16.msra.mxu0 0
    %2875 = vmatpush.bf16.msra.mxu0 %v2258
    %2876 = vmatpush.bf16.msra.mxu0 %v1878
    %2877 = vmatpush.bf16.msra.mxu0 %v1870
    %2878 = vmatpush.bf16.msra.mxu0 %v1862
    %2879 = vmatmul.bf16.gmra.mxu0 %v2233
    %v2880 = vpop.f32.mrf.mxu0
    %v2881 = vadd.f32 %v2868, %v2880
    %v2882 = vpop.f32.mrf.mxu0
    %2883 = vdwg.mxu0
    %v2884 = vmax.f32 %v2335, 0.0
    %v2885 = vmax.f32 %v2413, 0.0
    %v2886 = vmax.f32 %v2491, 0.0
    %v2887 = vmax.f32 %v2569, 0.0
    %v2888 = vmax.f32 %v2647, 0.0
    %v2889 = vmax.f32 %v2725, 0.0
    %v2890 = vmax.f32 %v2803, 0.0
    %v2891 = vmax.f32 %v2881, 0.0
    %v2892 = vpack.c.bf16 %v2884, %v2884
    %v2893 = vpack.c.bf16 %v2885, %v2885
    %v2894 = vpack.c.bf16 %v2886, %v2886
    %v2895 = vpack.c.bf16 %v2887, %v2887
    %v2896 = vpack.c.bf16 %v2888, %v2888
    %v2897 = vpack.c.bf16 %v2889, %v2889
    %v2898 = vpack.c.bf16 %v2890, %v2890
    %v2899 = vpack.c.bf16 %v2891, %v2891
    %v2900 = vld [vmem:[#allocation8] sm:$0xff]
    %v2901 = vld [vmem:[#allocation8 + $0x8] sm:$0xff]
    %v2902 = vld [vmem:[#allocation8 + $0x10] sm:$0xff]
    %v2903 = vld [vmem:[#allocation8 + $0x18] sm:$0xff]
    %v2904 = vld [vmem:[#allocation8 + $0x20] sm:$0xff]
    %v2905 = vld [vmem:[#allocation8 + $0x28] sm:$0xff]
    %v2906 = vld [vmem:[#allocation8 + $0x30] sm:$0xff]
    %v2907 = vld [vmem:[#allocation8 + $0x38] sm:$0xff]
    %v2908 = vld [vmem:[#allocation8 + $0x40] sm:$0xff]
    %v2909 = vld [vmem:[#allocation8 + $0x48] sm:$0xff]
    %v2910 = vld [vmem:[#allocation8 + $0x50] sm:$0xff]
    %v2911 = vld [vmem:[#allocation8 + $0x58] sm:$0xff]
    %v2912 = vld [vmem:[#allocation8 + $0x60] sm:$0xff]
    %v2913 = vld [vmem:[#allocation8 + $0x68] sm:$0xff]
    %v2914 = vld [vmem:[#allocation8 + $0x70] sm:$0xff]
    %v2915 = vld [vmem:[#allocation8 + $0x78] sm:$0xff]
    %v2916 = vld [vmem:[#allocation8 + $0x80] sm:$0xff]
    %v2917 = vld [vmem:[#allocation8 + $0x88] sm:$0xff]
    %v2918 = vld [vmem:[#allocation8 + $0x90] sm:$0xff]
    %v2919 = vld [vmem:[#allocation8 + $0x98] sm:$0xff]
    %v2920 = vld [vmem:[#allocation8 + $0xa0] sm:$0xff]
    %v2921 = vld [vmem:[#allocation8 + $0xa8] sm:$0xff]
    %v2922 = vld [vmem:[#allocation8 + $0xb0] sm:$0xff]
    %v2923 = vld [vmem:[#allocation8 + $0xb8] sm:$0xff]
    %v2924 = vld [vmem:[#allocation8 + $0xc0] sm:$0xff]
    %v2925 = vld [vmem:[#allocation8 + $0xc8] sm:$0xff]
    %v2926 = vld [vmem:[#allocation8 + $0xd0] sm:$0xff]
    %v2927 = vld [vmem:[#allocation8 + $0xd8] sm:$0xff]
    %v2928 = vld [vmem:[#allocation8 + $0xe0] sm:$0xff]
    %v2929 = vld [vmem:[#allocation8 + $0xe8] sm:$0xff]
    %v2930 = vld [vmem:[#allocation8 + $0xf0] sm:$0xff]
    %v2931 = vld [vmem:[#allocation8 + $0xf8] sm:$0xff]
    %v2932 = vld [vmem:[#allocation8 + $0x100] sm:$0xff]
    %v2933 = vld [vmem:[#allocation8 + $0x108] sm:$0xff]
    %v2934 = vld [vmem:[#allocation8 + $0x110] sm:$0xff]
    %v2935 = vld [vmem:[#allocation8 + $0x118] sm:$0xff]
    %v2936 = vld [vmem:[#allocation8 + $0x120] sm:$0xff]
    %v2937 = vld [vmem:[#allocation8 + $0x128] sm:$0xff]
    %v2938 = vld [vmem:[#allocation8 + $0x130] sm:$0xff]
    %v2939 = vld [vmem:[#allocation8 + $0x138] sm:$0xff]
    %v2940 = vld [vmem:[#allocation8 + $0x140] sm:$0xff]
    %v2941 = vld [vmem:[#allocation8 + $0x148] sm:$0xff]
    %v2942 = vld [vmem:[#allocation8 + $0x150] sm:$0xff]
    %v2943 = vld [vmem:[#allocation8 + $0x158] sm:$0xff]
    %v2944 = vld [vmem:[#allocation8 + $0x160] sm:$0xff]
    %v2945 = vld [vmem:[#allocation8 + $0x168] sm:$0xff]
    %v2946 = vld [vmem:[#allocation8 + $0x170] sm:$0xff]
    %v2947 = vld [vmem:[#allocation8 + $0x178] sm:$0xff]
    %v2948 = vld [vmem:[#allocation8 + $0x180] sm:$0xff]
    %v2949 = vld [vmem:[#allocation8 + $0x188] sm:$0xff]
    %v2950 = vld [vmem:[#allocation8 + $0x190] sm:$0xff]
    %v2951 = vld [vmem:[#allocation8 + $0x198] sm:$0xff]
    %v2952 = vld [vmem:[#allocation8 + $0x1a0] sm:$0xff]
    %v2953 = vld [vmem:[#allocation8 + $0x1a8] sm:$0xff]
    %v2954 = vld [vmem:[#allocation8 + $0x1b0] sm:$0xff]
    %v2955 = vld [vmem:[#allocation8 + $0x1b8] sm:$0xff]
    %v2956 = vld [vmem:[#allocation8 + $0x1c0] sm:$0xff]
    %v2957 = vld [vmem:[#allocation8 + $0x1c8] sm:$0xff]
    %v2958 = vld [vmem:[#allocation8 + $0x1d0] sm:$0xff]
    %v2959 = vld [vmem:[#allocation8 + $0x1d8] sm:$0xff]
    %v2960 = vld [vmem:[#allocation8 + $0x1e0] sm:$0xff]
    %v2961 = vld [vmem:[#allocation8 + $0x1e8] sm:$0xff]
    %v2962 = vld [vmem:[#allocation8 + $0x1f0] sm:$0xff]
    %v2963 = vld [vmem:[#allocation8 + $0x1f8] sm:$0xff]
    %v2964 = vld [vmem:[#allocation8 + $0x200] sm:$0xff]
    %v2965 = vld [vmem:[#allocation8 + $0x208] sm:$0xff]
    %v2966 = vld [vmem:[#allocation8 + $0x210] sm:$0xff]
    %v2967 = vld [vmem:[#allocation8 + $0x218] sm:$0xff]
    %v2968 = vld [vmem:[#allocation8 + $0x220] sm:$0xff]
    %v2969 = vld [vmem:[#allocation8 + $0x228] sm:$0xff]
    %v2970 = vld [vmem:[#allocation8 + $0x230] sm:$0xff]
    %v2971 = vld [vmem:[#allocation8 + $0x238] sm:$0xff]
    %v2972 = vld [vmem:[#allocation8 + $0x240] sm:$0xff]
    %v2973 = vld [vmem:[#allocation8 + $0x248] sm:$0xff]
    %v2974 = vld [vmem:[#allocation8 + $0x250] sm:$0xff]
    %v2975 = vld [vmem:[#allocation8 + $0x258] sm:$0xff]
    %v2976 = vld [vmem:[#allocation8 + $0x260] sm:$0xff]
    %v2977 = vld [vmem:[#allocation8 + $0x268] sm:$0xff]
    %v2978 = vld [vmem:[#allocation8 + $0x270] sm:$0xff]
    %v2979 = vld [vmem:[#allocation8 + $0x278] sm:$0xff]
    %v2980 = vld [vmem:[#allocation8 + $0x280] sm:$0xff]
    %v2981 = vld [vmem:[#allocation8 + $0x288] sm:$0xff]
    %v2982 = vld [vmem:[#allocation8 + $0x290] sm:$0xff]
    %v2983 = vld [vmem:[#allocation8 + $0x298] sm:$0xff]
    %v2984 = vld [vmem:[#allocation8 + $0x2a0] sm:$0xff]
    %v2985 = vld [vmem:[#allocation8 + $0x2a8] sm:$0xff]
    %v2986 = vld [vmem:[#allocation8 + $0x2b0] sm:$0xff]
    %v2987 = vld [vmem:[#allocation8 + $0x2b8] sm:$0xff]
    %v2988 = vld [vmem:[#allocation8 + $0x2c0] sm:$0xff]
    %v2989 = vld [vmem:[#allocation8 + $0x2c8] sm:$0xff]
    %v2990 = vld [vmem:[#allocation8 + $0x2d0] sm:$0xff]
    %v2991 = vld [vmem:[#allocation8 + $0x2d8] sm:$0xff]
    %v2992 = vld [vmem:[#allocation8 + $0x2e0] sm:$0xff]
    %v2993 = vld [vmem:[#allocation8 + $0x2e8] sm:$0xff]
    %v2994 = vld [vmem:[#allocation8 + $0x2f0] sm:$0xff]
    %v2995 = vld [vmem:[#allocation8 + $0x2f8] sm:$0xff]
    %v2996 = vld [vmem:[#allocation8 + $0x300] sm:$0xff]
    %v2997 = vld [vmem:[#allocation8 + $0x308] sm:$0xff]
    %v2998 = vld [vmem:[#allocation8 + $0x310] sm:$0xff]
    %v2999 = vld [vmem:[#allocation8 + $0x318] sm:$0xff]
    %v3000 = vld [vmem:[#allocation8 + $0x320] sm:$0xff]
    %v3001 = vld [vmem:[#allocation8 + $0x328] sm:$0xff]
    %v3002 = vld [vmem:[#allocation8 + $0x330] sm:$0xff]
    %v3003 = vld [vmem:[#allocation8 + $0x338] sm:$0xff]
    %v3004 = vld [vmem:[#allocation8 + $0x340] sm:$0xff]
    %v3005 = vld [vmem:[#allocation8 + $0x348] sm:$0xff]
    %v3006 = vld [vmem:[#allocation8 + $0x350] sm:$0xff]
    %v3007 = vld [vmem:[#allocation8 + $0x358] sm:$0xff]
    %v3008 = vld [vmem:[#allocation8 + $0x360] sm:$0xff]
    %v3009 = vld [vmem:[#allocation8 + $0x368] sm:$0xff]
    %v3010 = vld [vmem:[#allocation8 + $0x370] sm:$0xff]
    %v3011 = vld [vmem:[#allocation8 + $0x378] sm:$0xff]
    %v3012 = vld [vmem:[#allocation8 + $0x380] sm:$0xff]
    %v3013 = vld [vmem:[#allocation8 + $0x388] sm:$0xff]
    %v3014 = vld [vmem:[#allocation8 + $0x390] sm:$0xff]
    %v3015 = vld [vmem:[#allocation8 + $0x398] sm:$0xff]
    %v3016 = vld [vmem:[#allocation8 + $0x3a0] sm:$0xff]
    %v3017 = vld [vmem:[#allocation8 + $0x3a8] sm:$0xff]
    %v3018 = vld [vmem:[#allocation8 + $0x3b0] sm:$0xff]
    %v3019 = vld [vmem:[#allocation8 + $0x3b8] sm:$0xff]
    %v3020 = vld [vmem:[#allocation8 + $0x3c0] sm:$0xff]
    %v3021 = vld [vmem:[#allocation8 + $0x3c8] sm:$0xff]
    %v3022 = vld [vmem:[#allocation8 + $0x3d0] sm:$0xff]
    %v3023 = vld [vmem:[#allocation8 + $0x3d8] sm:$0xff]
    %v3024 = vld [vmem:[#allocation8 + $0x3e0] sm:$0xff]
    %v3025 = vld [vmem:[#allocation8 + $0x3e8] sm:$0xff]
    %v3026 = vld [vmem:[#allocation8 + $0x3f0] sm:$0xff]
    %v3027 = vld [vmem:[#allocation8 + $0x3f8] sm:$0xff]
    %v3028 = vld [vmem:[#allocation10] sm:$0x3]
    %v3030 = vperm.slane %v3028, 0
    %v3031 = vperm.slane %v3028, 1
    %v3162 = vunpack.c.l.b16 %v2900
    %v3163 = vunpack.c.h.b16 %v2900
    %v3164 = vunpack.c.l.b16 %v2901
    %v3165 = vunpack.c.h.b16 %v2901
    %v3166 = vunpack.c.l.b16 %v2902
    %v3167 = vunpack.c.h.b16 %v2902
    %v3168 = vunpack.c.l.b16 %v2903
    %v3169 = vunpack.c.h.b16 %v2903
    %v3170 = vunpack.c.l.b16 %v2904
    %v3171 = vunpack.c.h.b16 %v2904
    %v3172 = vunpack.c.l.b16 %v2905
    %v3173 = vunpack.c.h.b16 %v2905
    %v3174 = vunpack.c.l.b16 %v2906
    %v3175 = vunpack.c.h.b16 %v2906
    %v3176 = vunpack.c.l.b16 %v2907
    %v3177 = vunpack.c.h.b16 %v2907
    %v3178 = vunpack.c.l.b16 %v2908
    %v3179 = vunpack.c.h.b16 %v2908
    %v3180 = vunpack.c.l.b16 %v2909
    %v3181 = vunpack.c.h.b16 %v2909
    %v3182 = vunpack.c.l.b16 %v2910
    %v3183 = vunpack.c.h.b16 %v2910
    %v3184 = vunpack.c.l.b16 %v2911
    %v3185 = vunpack.c.h.b16 %v2911
    %v3186 = vunpack.c.l.b16 %v2912
    %v3187 = vunpack.c.h.b16 %v2912
    %v3188 = vunpack.c.l.b16 %v2913
    %v3189 = vunpack.c.h.b16 %v2913
    %v3190 = vunpack.c.l.b16 %v2914
    %v3191 = vunpack.c.h.b16 %v2914
    %v3192 = vunpack.c.l.b16 %v2915
    %v3193 = vunpack.c.h.b16 %v2915
    %v3194 = vunpack.c.l.b16 %v2916
    %v3195 = vunpack.c.h.b16 %v2916
    %v3196 = vunpack.c.l.b16 %v2917
    %v3197 = vunpack.c.h.b16 %v2917
    %v3198 = vunpack.c.l.b16 %v2918
    %v3199 = vunpack.c.h.b16 %v2918
    %v3200 = vunpack.c.l.b16 %v2919
    %v3201 = vunpack.c.h.b16 %v2919
    %v3202 = vunpack.c.l.b16 %v2920
    %v3203 = vunpack.c.h.b16 %v2920
    %v3204 = vunpack.c.l.b16 %v2921
    %v3205 = vunpack.c.h.b16 %v2921
    %v3206 = vunpack.c.l.b16 %v2922
    %v3207 = vunpack.c.h.b16 %v2922
    %v3208 = vunpack.c.l.b16 %v2923
    %v3209 = vunpack.c.h.b16 %v2923
    %v3210 = vunpack.c.l.b16 %v2924
    %v3211 = vunpack.c.h.b16 %v2924
    %v3212 = vunpack.c.l.b16 %v2925
    %v3213 = vunpack.c.h.b16 %v2925
    %v3214 = vunpack.c.l.b16 %v2926
    %v3215 = vunpack.c.h.b16 %v2926
    %v3216 = vunpack.c.l.b16 %v2927
    %v3217 = vunpack.c.h.b16 %v2927
    %v3218 = vunpack.c.l.b16 %v2928
    %v3219 = vunpack.c.h.b16 %v2928
    %v3220 = vunpack.c.l.b16 %v2929
    %v3221 = vunpack.c.h.b16 %v2929
    %v3222 = vunpack.c.l.b16 %v2930
    %v3223 = vunpack.c.h.b16 %v2930
    %v3224 = vunpack.c.l.b16 %v2931
    %v3225 = vunpack.c.h.b16 %v2931
    %v3226 = vunpack.c.l.b16 %v2932
    %v3227 = vunpack.c.h.b16 %v2932
    %v3228 = vunpack.c.l.b16 %v2933
    %v3229 = vunpack.c.h.b16 %v2933
    %v3230 = vunpack.c.l.b16 %v2934
    %v3231 = vunpack.c.h.b16 %v2934
    %v3232 = vunpack.c.l.b16 %v2935
    %v3233 = vunpack.c.h.b16 %v2935
    %v3234 = vunpack.c.l.b16 %v2936
    %v3235 = vunpack.c.h.b16 %v2936
    %v3236 = vunpack.c.l.b16 %v2937
    %v3237 = vunpack.c.h.b16 %v2937
    %v3238 = vunpack.c.l.b16 %v2938
    %v3239 = vunpack.c.h.b16 %v2938
    %v3240 = vunpack.c.l.b16 %v2939
    %v3241 = vunpack.c.h.b16 %v2939
    %v3242 = vunpack.c.l.b16 %v2940
    %v3243 = vunpack.c.h.b16 %v2940
    %v3244 = vunpack.c.l.b16 %v2941
    %v3245 = vunpack.c.h.b16 %v2941
    %v3246 = vunpack.c.l.b16 %v2942
    %v3247 = vunpack.c.h.b16 %v2942
    %v3248 = vunpack.c.l.b16 %v2943
    %v3249 = vunpack.c.h.b16 %v2943
    %v3250 = vunpack.c.l.b16 %v2944
    %v3251 = vunpack.c.h.b16 %v2944
    %v3252 = vunpack.c.l.b16 %v2945
    %v3253 = vunpack.c.h.b16 %v2945
    %v3254 = vunpack.c.l.b16 %v2946
    %v3255 = vunpack.c.h.b16 %v2946
    %v3256 = vunpack.c.l.b16 %v2947
    %v3257 = vunpack.c.h.b16 %v2947
    %v3258 = vunpack.c.l.b16 %v2948
    %v3259 = vunpack.c.h.b16 %v2948
    %v3260 = vunpack.c.l.b16 %v2949
    %v3261 = vunpack.c.h.b16 %v2949
    %v3262 = vunpack.c.l.b16 %v2950
    %v3263 = vunpack.c.h.b16 %v2950
    %v3264 = vunpack.c.l.b16 %v2951
    %v3265 = vunpack.c.h.b16 %v2951
    %v3266 = vunpack.c.l.b16 %v2952
    %v3267 = vunpack.c.h.b16 %v2952
    %v3268 = vunpack.c.l.b16 %v2953
    %v3269 = vunpack.c.h.b16 %v2953
    %v3270 = vunpack.c.l.b16 %v2954
    %v3271 = vunpack.c.h.b16 %v2954
    %v3272 = vunpack.c.l.b16 %v2955
    %v3273 = vunpack.c.h.b16 %v2955
    %v3274 = vunpack.c.l.b16 %v2956
    %v3275 = vunpack.c.h.b16 %v2956
    %v3276 = vunpack.c.l.b16 %v2957
    %v3277 = vunpack.c.h.b16 %v2957
    %v3278 = vunpack.c.l.b16 %v2958
    %v3279 = vunpack.c.h.b16 %v2958
    %v3280 = vunpack.c.l.b16 %v2959
    %v3281 = vunpack.c.h.b16 %v2959
    %v3282 = vunpack.c.l.b16 %v2960
    %v3283 = vunpack.c.h.b16 %v2960
    %v3284 = vunpack.c.l.b16 %v2961
    %v3285 = vunpack.c.h.b16 %v2961
    %v3286 = vunpack.c.l.b16 %v2962
    %v3287 = vunpack.c.h.b16 %v2962
    %v3288 = vunpack.c.l.b16 %v2963
    %v3289 = vunpack.c.h.b16 %v2963
    %v3290 = vunpack.c.l.b16 %v2964
    %v3291 = vunpack.c.h.b16 %v2964
    %v3292 = vunpack.c.l.b16 %v2965
    %v3293 = vunpack.c.h.b16 %v2965
    %v3294 = vunpack.c.l.b16 %v2966
    %v3295 = vunpack.c.h.b16 %v2966
    %v3296 = vunpack.c.l.b16 %v2967
    %v3297 = vunpack.c.h.b16 %v2967
    %v3298 = vunpack.c.l.b16 %v2968
    %v3299 = vunpack.c.h.b16 %v2968
    %v3300 = vunpack.c.l.b16 %v2969
    %v3301 = vunpack.c.h.b16 %v2969
    %v3302 = vunpack.c.l.b16 %v2970
    %v3303 = vunpack.c.h.b16 %v2970
    %v3304 = vunpack.c.l.b16 %v2971
    %v3305 = vunpack.c.h.b16 %v2971
    %v3306 = vunpack.c.l.b16 %v2972
    %v3307 = vunpack.c.h.b16 %v2972
    %v3308 = vunpack.c.l.b16 %v2973
    %v3309 = vunpack.c.h.b16 %v2973
    %v3310 = vunpack.c.l.b16 %v2974
    %v3311 = vunpack.c.h.b16 %v2974
    %v3312 = vunpack.c.l.b16 %v2975
    %v3313 = vunpack.c.h.b16 %v2975
    %v3314 = vunpack.c.l.b16 %v2976
    %v3315 = vunpack.c.h.b16 %v2976
    %v3316 = vunpack.c.l.b16 %v2977
    %v3317 = vunpack.c.h.b16 %v2977
    %v3318 = vunpack.c.l.b16 %v2978
    %v3319 = vunpack.c.h.b16 %v2978
    %v3320 = vunpack.c.l.b16 %v2979
    %v3321 = vunpack.c.h.b16 %v2979
    %v3322 = vunpack.c.l.b16 %v2980
    %v3323 = vunpack.c.h.b16 %v2980
    %v3324 = vunpack.c.l.b16 %v2981
    %v3325 = vunpack.c.h.b16 %v2981
    %v3326 = vunpack.c.l.b16 %v2982
    %v3327 = vunpack.c.h.b16 %v2982
    %v3328 = vunpack.c.l.b16 %v2983
    %v3329 = vunpack.c.h.b16 %v2983
    %v3330 = vunpack.c.l.b16 %v2984
    %v3331 = vunpack.c.h.b16 %v2984
    %v3332 = vunpack.c.l.b16 %v2985
    %v3333 = vunpack.c.h.b16 %v2985
    %v3334 = vunpack.c.l.b16 %v2986
    %v3335 = vunpack.c.h.b16 %v2986
    %v3336 = vunpack.c.l.b16 %v2987
    %v3337 = vunpack.c.h.b16 %v2987
    %v3338 = vunpack.c.l.b16 %v2988
    %v3339 = vunpack.c.h.b16 %v2988
    %v3340 = vunpack.c.l.b16 %v2989
    %v3341 = vunpack.c.h.b16 %v2989
    %v3342 = vunpack.c.l.b16 %v2990
    %v3343 = vunpack.c.h.b16 %v2990
    %v3344 = vunpack.c.l.b16 %v2991
    %v3345 = vunpack.c.h.b16 %v2991
    %v3346 = vunpack.c.l.b16 %v2992
    %v3347 = vunpack.c.h.b16 %v2992
    %v3348 = vunpack.c.l.b16 %v2993
    %v3349 = vunpack.c.h.b16 %v2993
    %v3350 = vunpack.c.l.b16 %v2994
    %v3351 = vunpack.c.h.b16 %v2994
    %v3352 = vunpack.c.l.b16 %v2995
    %v3353 = vunpack.c.h.b16 %v2995
    %v3354 = vunpack.c.l.b16 %v2996
    %v3355 = vunpack.c.h.b16 %v2996
    %v3356 = vunpack.c.l.b16 %v2997
    %v3357 = vunpack.c.h.b16 %v2997
    %v3358 = vunpack.c.l.b16 %v2998
    %v3359 = vunpack.c.h.b16 %v2998
    %v3360 = vunpack.c.l.b16 %v2999
    %v3361 = vunpack.c.h.b16 %v2999
    %v3362 = vunpack.c.l.b16 %v3000
    %v3363 = vunpack.c.h.b16 %v3000
    %v3364 = vunpack.c.l.b16 %v3001
    %v3365 = vunpack.c.h.b16 %v3001
    %v3366 = vunpack.c.l.b16 %v3002
    %v3367 = vunpack.c.h.b16 %v3002
    %v3368 = vunpack.c.l.b16 %v3003
    %v3369 = vunpack.c.h.b16 %v3003
    %v3370 = vunpack.c.l.b16 %v3004
    %v3371 = vunpack.c.h.b16 %v3004
    %v3372 = vunpack.c.l.b16 %v3005
    %v3373 = vunpack.c.h.b16 %v3005
    %v3374 = vunpack.c.l.b16 %v3006
    %v3375 = vunpack.c.h.b16 %v3006
    %v3376 = vunpack.c.l.b16 %v3007
    %v3377 = vunpack.c.h.b16 %v3007
    %v3378 = vunpack.c.l.b16 %v3008
    %v3379 = vunpack.c.h.b16 %v3008
    %v3380 = vunpack.c.l.b16 %v3009
    %v3381 = vunpack.c.h.b16 %v3009
    %v3382 = vunpack.c.l.b16 %v3010
    %v3383 = vunpack.c.h.b16 %v3010
    %v3384 = vunpack.c.l.b16 %v3011
    %v3385 = vunpack.c.h.b16 %v3011
    %v3386 = vunpack.c.l.b16 %v3012
    %v3387 = vunpack.c.h.b16 %v3012
    %v3388 = vunpack.c.l.b16 %v3013
    %v3389 = vunpack.c.h.b16 %v3013
    %v3390 = vunpack.c.l.b16 %v3014
    %v3391 = vunpack.c.h.b16 %v3014
    %v3392 = vunpack.c.l.b16 %v3015
    %v3393 = vunpack.c.h.b16 %v3015
    %v3394 = vunpack.c.l.b16 %v3016
    %v3395 = vunpack.c.h.b16 %v3016
    %v3396 = vunpack.c.l.b16 %v3017
    %v3397 = vunpack.c.h.b16 %v3017
    %v3398 = vunpack.c.l.b16 %v3018
    %v3399 = vunpack.c.h.b16 %v3018
    %v3400 = vunpack.c.l.b16 %v3019
    %v3401 = vunpack.c.h.b16 %v3019
    %v3402 = vunpack.c.l.b16 %v3020
    %v3403 = vunpack.c.h.b16 %v3020
    %v3404 = vunpack.c.l.b16 %v3021
    %v3405 = vunpack.c.h.b16 %v3021
    %v3406 = vunpack.c.l.b16 %v3022
    %v3407 = vunpack.c.h.b16 %v3022
    %v3408 = vunpack.c.l.b16 %v3023
    %v3409 = vunpack.c.h.b16 %v3023
    %v3410 = vunpack.c.l.b16 %v3024
    %v3411 = vunpack.c.h.b16 %v3024
    %v3412 = vunpack.c.l.b16 %v3025
    %v3413 = vunpack.c.h.b16 %v3025
    %v3414 = vunpack.c.l.b16 %v3026
    %v3415 = vunpack.c.h.b16 %v3026
    %v3416 = vunpack.c.l.b16 %v3027
    %v3417 = vunpack.c.h.b16 %v3027
    %v3418 = vpack.c.b16 %v3164, %v3162
    %v3419 = vpack.c.b16 %v3165, %v3163
    %v3420 = vpack.c.b16 %v3168, %v3166
    %v3421 = vpack.c.b16 %v3169, %v3167
    %v3422 = vpack.c.b16 %v3172, %v3170
    %v3423 = vpack.c.b16 %v3173, %v3171
    %v3424 = vpack.c.b16 %v3176, %v3174
    %v3425 = vpack.c.b16 %v3177, %v3175
    %v3426 = vpack.c.b16 %v3180, %v3178
    %v3427 = vpack.c.b16 %v3181, %v3179
    %v3428 = vpack.c.b16 %v3184, %v3182
    %v3429 = vpack.c.b16 %v3185, %v3183
    %v3430 = vpack.c.b16 %v3188, %v3186
    %v3431 = vpack.c.b16 %v3189, %v3187
    %v3432 = vpack.c.b16 %v3192, %v3190
    %v3433 = vpack.c.b16 %v3193, %v3191
    %v3434 = vpack.c.b16 %v3196, %v3194
    %v3435 = vpack.c.b16 %v3197, %v3195
    %v3436 = vpack.c.b16 %v3200, %v3198
    %v3437 = vpack.c.b16 %v3201, %v3199
    %v3438 = vpack.c.b16 %v3204, %v3202
    %v3439 = vpack.c.b16 %v3205, %v3203
    %v3440 = vpack.c.b16 %v3208, %v3206
    %v3441 = vpack.c.b16 %v3209, %v3207
    %v3442 = vpack.c.b16 %v3212, %v3210
    %v3443 = vpack.c.b16 %v3213, %v3211
    %v3444 = vpack.c.b16 %v3216, %v3214
    %v3445 = vpack.c.b16 %v3217, %v3215
    %v3446 = vpack.c.b16 %v3220, %v3218
    %v3447 = vpack.c.b16 %v3221, %v3219
    %v3448 = vpack.c.b16 %v3224, %v3222
    %v3449 = vpack.c.b16 %v3225, %v3223
    %v3450 = vpack.c.b16 %v3228, %v3226
    %v3451 = vpack.c.b16 %v3229, %v3227
    %v3452 = vpack.c.b16 %v3232, %v3230
    %v3453 = vpack.c.b16 %v3233, %v3231
    %v3454 = vpack.c.b16 %v3236, %v3234
    %v3455 = vpack.c.b16 %v3237, %v3235
    %v3456 = vpack.c.b16 %v3240, %v3238
    %v3457 = vpack.c.b16 %v3241, %v3239
    %v3458 = vpack.c.b16 %v3244, %v3242
    %v3459 = vpack.c.b16 %v3245, %v3243
    %v3460 = vpack.c.b16 %v3248, %v3246
    %v3461 = vpack.c.b16 %v3249, %v3247
    %v3462 = vpack.c.b16 %v3252, %v3250
    %v3463 = vpack.c.b16 %v3253, %v3251
    %v3464 = vpack.c.b16 %v3256, %v3254
    %v3465 = vpack.c.b16 %v3257, %v3255
    %v3466 = vpack.c.b16 %v3260, %v3258
    %v3467 = vpack.c.b16 %v3261, %v3259
    %v3468 = vpack.c.b16 %v3264, %v3262
    %v3469 = vpack.c.b16 %v3265, %v3263
    %v3470 = vpack.c.b16 %v3268, %v3266
    %v3471 = vpack.c.b16 %v3269, %v3267
    %v3472 = vpack.c.b16 %v3272, %v3270
    %v3473 = vpack.c.b16 %v3273, %v3271
    %v3474 = vpack.c.b16 %v3276, %v3274
    %v3475 = vpack.c.b16 %v3277, %v3275
    %v3476 = vpack.c.b16 %v3280, %v3278
    %v3477 = vpack.c.b16 %v3281, %v3279
    %v3478 = vpack.c.b16 %v3284, %v3282
    %v3479 = vpack.c.b16 %v3285, %v3283
    %v3480 = vpack.c.b16 %v3288, %v3286
    %v3481 = vpack.c.b16 %v3289, %v3287
    %v3482 = vpack.c.b16 %v3292, %v3290
    %v3483 = vpack.c.b16 %v3293, %v3291
    %v3484 = vpack.c.b16 %v3296, %v3294
    %v3485 = vpack.c.b16 %v3297, %v3295
    %v3486 = vpack.c.b16 %v3300, %v3298
    %v3487 = vpack.c.b16 %v3301, %v3299
    %v3488 = vpack.c.b16 %v3304, %v3302
    %v3489 = vpack.c.b16 %v3305, %v3303
    %v3490 = vpack.c.b16 %v3308, %v3306
    %v3491 = vpack.c.b16 %v3309, %v3307
    %v3492 = vpack.c.b16 %v3312, %v3310
    %v3493 = vpack.c.b16 %v3313, %v3311
    %v3494 = vpack.c.b16 %v3316, %v3314
    %v3495 = vpack.c.b16 %v3317, %v3315
    %v3496 = vpack.c.b16 %v3320, %v3318
    %v3497 = vpack.c.b16 %v3321, %v3319
    %v3498 = vpack.c.b16 %v3324, %v3322
    %v3499 = vpack.c.b16 %v3325, %v3323
    %v3500 = vpack.c.b16 %v3328, %v3326
    %v3501 = vpack.c.b16 %v3329, %v3327
    %v3502 = vpack.c.b16 %v3332, %v3330
    %v3503 = vpack.c.b16 %v3333, %v3331
    %v3504 = vpack.c.b16 %v3336, %v3334
    %v3505 = vpack.c.b16 %v3337, %v3335
    %v3506 = vpack.c.b16 %v3340, %v3338
    %v3507 = vpack.c.b16 %v3341, %v3339
    %v3508 = vpack.c.b16 %v3344, %v3342
    %v3509 = vpack.c.b16 %v3345, %v3343
    %v3510 = vpack.c.b16 %v3348, %v3346
    %v3511 = vpack.c.b16 %v3349, %v3347
    %v3512 = vpack.c.b16 %v3352, %v3350
    %v3513 = vpack.c.b16 %v3353, %v3351
    %v3514 = vpack.c.b16 %v3356, %v3354
    %v3515 = vpack.c.b16 %v3357, %v3355
    %v3516 = vpack.c.b16 %v3360, %v3358
    %v3517 = vpack.c.b16 %v3361, %v3359
    %v3518 = vpack.c.b16 %v3364, %v3362
    %v3519 = vpack.c.b16 %v3365, %v3363
    %v3520 = vpack.c.b16 %v3368, %v3366
    %v3521 = vpack.c.b16 %v3369, %v3367
    %v3522 = vpack.c.b16 %v3372, %v3370
    %v3523 = vpack.c.b16 %v3373, %v3371
    %v3524 = vpack.c.b16 %v3376, %v3374
    %v3525 = vpack.c.b16 %v3377, %v3375
    %v3526 = vpack.c.b16 %v3380, %v3378
    %v3527 = vpack.c.b16 %v3381, %v3379
    %v3528 = vpack.c.b16 %v3384, %v3382
    %v3529 = vpack.c.b16 %v3385, %v3383
    %v3530 = vpack.c.b16 %v3388, %v3386
    %v3531 = vpack.c.b16 %v3389, %v3387
    %v3532 = vpack.c.b16 %v3392, %v3390
    %v3533 = vpack.c.b16 %v3393, %v3391
    %v3534 = vpack.c.b16 %v3396, %v3394
    %v3535 = vpack.c.b16 %v3397, %v3395
    %v3536 = vpack.c.b16 %v3400, %v3398
    %v3537 = vpack.c.b16 %v3401, %v3399
    %v3538 = vpack.c.b16 %v3404, %v3402
    %v3539 = vpack.c.b16 %v3405, %v3403
    %v3540 = vpack.c.b16 %v3408, %v3406
    %v3541 = vpack.c.b16 %v3409, %v3407
    %v3542 = vpack.c.b16 %v3412, %v3410
    %v3543 = vpack.c.b16 %v3413, %v3411
    %v3544 = vpack.c.b16 %v3416, %v3414
    %v3545 = vpack.c.b16 %v3417, %v3415
    %3674 = vmatpush.bf16.msra.mxu0 %v3432
    %3675 = vmatpush.bf16.msra.mxu0 %v3430
    %3676 = vmatpush.bf16.msra.mxu0 %v3428
    %3677 = vmatpush.bf16.msra.mxu0 %v3426
    %3678 = vmatpush.bf16.msra.mxu0 %v3424
    %3679 = vmatpush.bf16.msra.mxu0 %v3422
    %3680 = vmatpush.bf16.msra.mxu0 %v3420
    %3681 = vmatpush.bf16.msra.mxu0 %v3418
    %3682 = vmatmul.bf16.gmra.mxu0 %v2892
    %v3683 = vpop.f32.mrf.mxu0
    %v3684 = vadd.f32 %v3030, %v3683
    %v3685 = vpop.f32.mrf.mxu0
    %3686 = vdwg.mxu0
    %3687 = vmatpush.bf16.msra.mxu0 %v3448
    %3688 = vmatpush.bf16.msra.mxu0 %v3446
    %3689 = vmatpush.bf16.msra.mxu0 %v3444
    %3690 = vmatpush.bf16.msra.mxu0 %v3442
    %3691 = vmatpush.bf16.msra.mxu0 %v3440
    %3692 = vmatpush.bf16.msra.mxu0 %v3438
    %3693 = vmatpush.bf16.msra.mxu0 %v3436
    %3694 = vmatpush.bf16.msra.mxu0 %v3434
    %3695 = vmatmul.bf16.gmra.mxu0 %v2893
    %v3696 = vpop.f32.mrf.mxu0
    %v3697 = vadd.f32 %v3684, %v3696
    %v3698 = vpop.f32.mrf.mxu0
    %3699 = vdwg.mxu0
    %3700 = vmatpush.bf16.msra.mxu0 %v3464
    %3701 = vmatpush.bf16.msra.mxu0 %v3462
    %3702 = vmatpush.bf16.msra.mxu0 %v3460
    %3703 = vmatpush.bf16.msra.mxu0 %v3458
    %3704 = vmatpush.bf16.msra.mxu0 %v3456
    %3705 = vmatpush.bf16.msra.mxu0 %v3454
    %3706 = vmatpush.bf16.msra.mxu0 %v3452
    %3707 = vmatpush.bf16.msra.mxu0 %v3450
    %3708 = vmatmul.bf16.gmra.mxu0 %v2894
    %v3709 = vpop.f32.mrf.mxu0
    %v3710 = vadd.f32 %v3697, %v3709
    %v3711 = vpop.f32.mrf.mxu0
    %3712 = vdwg.mxu0
    %3713 = vmatpush.bf16.msra.mxu0 %v3480
    %3714 = vmatpush.bf16.msra.mxu0 %v3478
    %3715 = vmatpush.bf16.msra.mxu0 %v3476
    %3716 = vmatpush.bf16.msra.mxu0 %v3474
    %3717 = vmatpush.bf16.msra.mxu0 %v3472
    %3718 = vmatpush.bf16.msra.mxu0 %v3470
    %3719 = vmatpush.bf16.msra.mxu0 %v3468
    %3720 = vmatpush.bf16.msra.mxu0 %v3466
    %3721 = vmatmul.bf16.gmra.mxu0 %v2895
    %v3722 = vpop.f32.mrf.mxu0
    %v3723 = vadd.f32 %v3710, %v3722
    %v3724 = vpop.f32.mrf.mxu0
    %3725 = vdwg.mxu0
    %3726 = vmatpush.bf16.msra.mxu0 %v3496
    %3727 = vmatpush.bf16.msra.mxu0 %v3494
    %3728 = vmatpush.bf16.msra.mxu0 %v3492
    %3729 = vmatpush.bf16.msra.mxu0 %v3490
    %3730 = vmatpush.bf16.msra.mxu0 %v3488
    %3731 = vmatpush.bf16.msra.mxu0 %v3486
    %3732 = vmatpush.bf16.msra.mxu0 %v3484
    %3733 = vmatpush.bf16.msra.mxu0 %v3482
    %3734 = vmatmul.bf16.gmra.mxu0 %v2896
    %v3735 = vpop.f32.mrf.mxu0
    %v3736 = vadd.f32 %v3723, %v3735
    %v3737 = vpop.f32.mrf.mxu0
    %3738 = vdwg.mxu0
    %3739 = vmatpush.bf16.msra.mxu0 %v3512
    %3740 = vmatpush.bf16.msra.mxu0 %v3510
    %3741 = vmatpush.bf16.msra.mxu0 %v3508
    %3742 = vmatpush.bf16.msra.mxu0 %v3506
    %3743 = vmatpush.bf16.msra.mxu0 %v3504
    %3744 = vmatpush.bf16.msra.mxu0 %v3502
    %3745 = vmatpush.bf16.msra.mxu0 %v3500
    %3746 = vmatpush.bf16.msra.mxu0 %v3498
    %3747 = vmatmul.bf16.gmra.mxu0 %v2897
    %v3748 = vpop.f32.mrf.mxu0
    %v3749 = vadd.f32 %v3736, %v3748
    %v3750 = vpop.f32.mrf.mxu0
    %3751 = vdwg.mxu0
    %3752 = vmatpush.bf16.msra.mxu0 %v3528
    %3753 = vmatpush.bf16.msra.mxu0 %v3526
    %3754 = vmatpush.bf16.msra.mxu0 %v3524
    %3755 = vmatpush.bf16.msra.mxu0 %v3522
    %3756 = vmatpush.bf16.msra.mxu0 %v3520
    %3757 = vmatpush.bf16.msra.mxu0 %v3518
    %3758 = vmatpush.bf16.msra.mxu0 %v3516
    %3759 = vmatpush.bf16.msra.mxu0 %v3514
    %3760 = vmatmul.bf16.gmra.mxu0 %v2898
    %v3761 = vpop.f32.mrf.mxu0
    %v3762 = vadd.f32 %v3749, %v3761
    %v3763 = vpop.f32.mrf.mxu0
    %3764 = vdwg.mxu0
    %3765 = vmatpush.bf16.msra.mxu0 %v3544
    %3766 = vmatpush.bf16.msra.mxu0 %v3542
    %3767 = vmatpush.bf16.msra.mxu0 %v3540
    %3768 = vmatpush.bf16.msra.mxu0 %v3538
    %3769 = vmatpush.bf16.msra.mxu0 %v3536
    %3770 = vmatpush.bf16.msra.mxu0 %v3534
    %3771 = vmatpush.bf16.msra.mxu0 %v3532
    %3772 = vmatpush.bf16.msra.mxu0 %v3530
    %3773 = vmatmul.bf16.gmra.mxu0 %v2899
    %v3774 = vpop.f32.mrf.mxu0
    %v3775 = vadd.f32 %v3762, %v3774
    %v3776 = vpop.f32.mrf.mxu0
    %3777 = vdwg.mxu0
    %3778 = vmatpush.bf16.msra.mxu0 %v3433
    %3779 = vmatpush.bf16.msra.mxu0 %v3431
    %3780 = vmatpush.bf16.msra.mxu0 %v3429
    %3781 = vmatpush.bf16.msra.mxu0 %v3427
    %3782 = vmatpush.bf16.msra.mxu0 %v3425
    %3783 = vmatpush.bf16.msra.mxu0 %v3423
    %3784 = vmatpush.bf16.msra.mxu0 %v3421
    %3785 = vmatpush.bf16.msra.mxu0 %v3419
    %3786 = vmatmul.bf16.gmra.mxu0 %v2892
    %v3787 = vpop.f32.mrf.mxu0
    %v3788 = vadd.f32 %v3031, %v3787
    %v3789 = vpop.f32.mrf.mxu0
    %3790 = vdwg.mxu0
    %3791 = vmatpush.bf16.msra.mxu0 %v3449
    %3792 = vmatpush.bf16.msra.mxu0 %v3447
    %3793 = vmatpush.bf16.msra.mxu0 %v3445
    %3794 = vmatpush.bf16.msra.mxu0 %v3443
    %3795 = vmatpush.bf16.msra.mxu0 %v3441
    %3796 = vmatpush.bf16.msra.mxu0 %v3439
    %3797 = vmatpush.bf16.msra.mxu0 %v3437
    %3798 = vmatpush.bf16.msra.mxu0 %v3435
    %3799 = vmatmul.bf16.gmra.mxu0 %v2893
    %v3800 = vpop.f32.mrf.mxu0
    %v3801 = vadd.f32 %v3788, %v3800
    %v3802 = vpop.f32.mrf.mxu0
    %3803 = vdwg.mxu0
    %3804 = vmatpush.bf16.msra.mxu0 %v3465
    %3805 = vmatpush.bf16.msra.mxu0 %v3463
    %3806 = vmatpush.bf16.msra.mxu0 %v3461
    %3807 = vmatpush.bf16.msra.mxu0 %v3459
    %3808 = vmatpush.bf16.msra.mxu0 %v3457
    %3809 = vmatpush.bf16.msra.mxu0 %v3455
    %3810 = vmatpush.bf16.msra.mxu0 %v3453
    %3811 = vmatpush.bf16.msra.mxu0 %v3451
    %3812 = vmatmul.bf16.gmra.mxu0 %v2894
    %v3813 = vpop.f32.mrf.mxu0
    %v3814 = vadd.f32 %v3801, %v3813
    %v3815 = vpop.f32.mrf.mxu0
    %3816 = vdwg.mxu0
    %3817 = vmatpush.bf16.msra.mxu0 %v3481
    %3818 = vmatpush.bf16.msra.mxu0 %v3479
    %3819 = vmatpush.bf16.msra.mxu0 %v3477
    %3820 = vmatpush.bf16.msra.mxu0 %v3475
    %3821 = vmatpush.bf16.msra.mxu0 %v3473
    %3822 = vmatpush.bf16.msra.mxu0 %v3471
    %3823 = vmatpush.bf16.msra.mxu0 %v3469
    %3824 = vmatpush.bf16.msra.mxu0 %v3467
    %3825 = vmatmul.bf16.gmra.mxu0 %v2895
    %v3826 = vpop.f32.mrf.mxu0
    %v3827 = vadd.f32 %v3814, %v3826
    %v3828 = vpop.f32.mrf.mxu0
    %3829 = vdwg.mxu0
    %3830 = vmatpush.bf16.msra.mxu0 %v3497
    %3831 = vmatpush.bf16.msra.mxu0 %v3495
    %3832 = vmatpush.bf16.msra.mxu0 %v3493
    %3833 = vmatpush.bf16.msra.mxu0 %v3491
    %3834 = vmatpush.bf16.msra.mxu0 %v3489
    %3835 = vmatpush.bf16.msra.mxu0 %v3487
    %3836 = vmatpush.bf16.msra.mxu0 %v3485
    %3837 = vmatpush.bf16.msra.mxu0 %v3483
    %3838 = vmatmul.bf16.gmra.mxu0 %v2896
    %v3839 = vpop.f32.mrf.mxu0
    %v3840 = vadd.f32 %v3827, %v3839
    %v3841 = vpop.f32.mrf.mxu0
    %3842 = vdwg.mxu0
    %3843 = vmatpush.bf16.msra.mxu0 %v3513
    %3844 = vmatpush.bf16.msra.mxu0 %v3511
    %3845 = vmatpush.bf16.msra.mxu0 %v3509
    %3846 = vmatpush.bf16.msra.mxu0 %v3507
    %3847 = vmatpush.bf16.msra.mxu0 %v3505
    %3848 = vmatpush.bf16.msra.mxu0 %v3503
    %3849 = vmatpush.bf16.msra.mxu0 %v3501
    %3850 = vmatpush.bf16.msra.mxu0 %v3499
    %3851 = vmatmul.bf16.gmra.mxu0 %v2897
    %v3852 = vpop.f32.mrf.mxu0
    %v3853 = vadd.f32 %v3840, %v3852
    %v3854 = vpop.f32.mrf.mxu0
    %3855 = vdwg.mxu0
    %3856 = vmatpush.bf16.msra.mxu0 %v3529
    %3857 = vmatpush.bf16.msra.mxu0 %v3527
    %3858 = vmatpush.bf16.msra.mxu0 %v3525
    %3859 = vmatpush.bf16.msra.mxu0 %v3523
    %3860 = vmatpush.bf16.msra.mxu0 %v3521
    %3861 = vmatpush.bf16.msra.mxu0 %v3519
    %3862 = vmatpush.bf16.msra.mxu0 %v3517
    %3863 = vmatpush.bf16.msra.mxu0 %v3515
    %3864 = vmatmul.bf16.gmra.mxu0 %v2898
    %v3865 = vpop.f32.mrf.mxu0
    %v3866 = vadd.f32 %v3853, %v3865
    %v3867 = vpop.f32.mrf.mxu0
    %3868 = vdwg.mxu0
    %3869 = vmatpush.bf16.msra.mxu0 %v3545
    %3870 = vmatpush.bf16.msra.mxu0 %v3543
    %3871 = vmatpush.bf16.msra.mxu0 %v3541
    %3872 = vmatpush.bf16.msra.mxu0 %v3539
    %3873 = vmatpush.bf16.msra.mxu0 %v3537
    %3874 = vmatpush.bf16.msra.mxu0 %v3535
    %3875 = vmatpush.bf16.msra.mxu0 %v3533
    %3876 = vmatpush.bf16.msra.mxu0 %v3531
    %3877 = vmatmul.bf16.gmra.mxu0 %v2899
    %v3878 = vpop.f32.mrf.mxu0
    %v3879 = vadd.f32 %v3866, %v3878
    %v3880 = vpop.f32.mrf.mxu0
    %3881 = vdwg.mxu0
    %3882 = vst [vmem:[#allocation11] sm:$0xff] %v3775
    %3883 = vst [vmem:[#allocation12] sm:$0xff] %v3879
    // Predicated region
    $region42: #{tpu_custom_call.1} parent=1 // pred_check
      _
    $region43: #{tpu_custom_call.1} parent=1 // pred_check_branch
      %3885 = sbr.rel (0) target = $region45
    $region44: #{tpu_custom_call.1} parent=1 // pred_region
      %3887 = vsyncadd [#allocation4], 0
      %s3889 = sshll.u32 [#allocation11], 4
      %s3890 = int_to_ptr.vmem [resolvable:$true] %s3889
      %s3891 = sshll.u32 %s5, 4
      %s3892 = int_to_ptr.hbm [resolvable:$true] %s3891
      %3894 = dma.vmem_to_hbm [thread:$0]  %s3890, 128, %s3892, [#allocation4]
    $region45: #{tpu_custom_call.1} parent=1 // pred_fallthru
      _
    // Predicated region
    $region46: #{tpu_custom_call.1} parent=1 // pred_check
      _
    $region47: #{tpu_custom_call.1} parent=1 // pred_check_branch
      %3896 = sbr.rel (0) target = $region49
    $region48: #{tpu_custom_call.1} parent=1 // pred_region
      %3898 = vsyncadd [#allocation13], 0
      %s3900 = sshll.u32 [#allocation12], 4
      %s3901 = int_to_ptr.vmem [resolvable:$true] %s3900
      %s3902 = sshll.u32 %s6, 4
      %s3903 = int_to_ptr.hbm [resolvable:$true] %s3902
      %3905 = dma.vmem_to_hbm [thread:$0]  %s3901, 128, %s3903, [#allocation13]
    $region49: #{tpu_custom_call.1} parent=1 // pred_fallthru
      _
    // Predicated region
    $region50: #{tpu_custom_call.1} parent=1 // pred_check
      _
    $region51: #{tpu_custom_call.1} parent=1 // pred_check_branch
      %3907 = sbr.rel (0) target = $region53
    $region52: #{tpu_custom_call.1} parent=1 // pred_region
      %3909 = dma.done [#allocation4], 128
    $region53: #{tpu_custom_call.1} parent=1 // pred_fallthru
      _
    // Predicated region
    $region54: #{tpu_custom_call.1} parent=1 // pred_check
      _
    $region55: #{tpu_custom_call.1} parent=1 // pred_check_branch
      %3911 = sbr.rel (0) target = $region57
    $region56: #{tpu_custom_call.1} parent=1 // pred_region
      %3913 = dma.done [#allocation13], 128
    $region57: #{tpu_custom_call.1} parent=1 // pred_fallthru
      _
    %3914 = vsyncpa [#allocation3], 1
    %3915 = vsyncpa [#allocation6], 1
    %3916 = vsyncpa [#allocation9], 1
    %3917 = vsyncpa [#allocation4], 1
    %3918 = vsyncpa [#allocation13], 1

</llo_original>
